<compile_context>
chip_gen: v7x
topology: tpu7x:2x2x1
jax: 0.10.0
libtpu: 0.0.40
codegen_flags: <defaults>
</compile_context>

<pallas_src>
import functools

import jax
import jax.numpy as jnp
from jax.experimental import pallas as pl
from jax.experimental.pallas import tpu as pltpu


def _head_groups(H, Dh):
    """Group heads so each context store is (a multiple of) 128 lanes wide."""
    if Dh >= 128 or (128 % Dh) != 0:
        g = 1
    else:
        g = min(H, 128 // Dh)
    groups = []
    h0 = 0
    while h0 < H:
        groups.append((h0, min(H, h0 + g)))
        h0 += g
    return tuple(groups)


def _vmem_budget():
    """(scoped vmem_limit_bytes, pipeline-buffer budget) per TPU generation."""
    cap = None
    try:
        info = pltpu.get_tpu_info()
        cap = getattr(info, "vmem_capacity_bytes", None) or getattr(info, "vmem_bytes", None)
    except Exception:
        cap = None
    if not cap:
        cap = 128 * 1024 * 1024
    if cap <= 64 * 1024 * 1024:
        limit = 48 * 1024 * 1024          # v7x: 64 MiB physical per TensorCore
    else:
        limit = 64 * 1024 * 1024          # v5e / v6e: 128 MiB physical
    budget = (limit * 3) // 4             # headroom for compiler scratch
    return limit, budget


def _choose_tq(Sq, Sk, H, Dh, probs_isz, value_isz, out_isz,
               emit_probs, budget_bytes, min_multiple):
    """Largest q-tile dividing Sq whose full pipeline footprint fits the budget."""

    def footprint(tq):
        fp = 2 * H * tq * Sk * probs_isz          # probs in, double-buffered
        fp += 2 * H * Sk * Dh * value_isz         # value (conservative: 2 bufs)
        fp += 2 * tq * H * Dh * out_isz           # ctx out, double-buffered
        if emit_probs:
            fp += 2 * H * tq * Sk * out_isz       # masked-probs out
        return fp

    if Sq % min_multiple != 0:
        # TODO(synk): ragged Sq falls back to a single full-extent block.
        return Sq
    cands = [Sq] + [c for c in (4096, 2048, 1024, 512, 256, 128, 64, 32, 16, 8)
                    if c < Sq and Sq % c == 0 and c % min_multiple == 0]
    for c in cands:
        if footprint(c) <= budget_bytes:
            return c
    return cands[-1]


def _attn_ctx_kernel(*refs, Dh, head_groups, compute_dtype, has_mask, emit_probs):
    """One (batch, q-tile) step: fused-head context[b, q0:q0+tq, :]."""
    if has_mask:
        hm_ref, probs_ref, value_ref, out_ref = refs[:4]
        mprobs_ref = refs[4] if emit_probs else None
    else:
        probs_ref, value_ref, out_ref = refs
        hm_ref = None
        mprobs_ref = None

    exact_f32 = jnp.dtype(compute_dtype) == jnp.dtype(jnp.float32)
    precision = jax.lax.Precision.HIGHEST if exact_f32 else None

    for (g0, g1) in head_groups:                 # small static groups: unrolled
        parts = []
        for h in range(g0, g1):
            p = probs_ref[0, h]                  # (tq, Sk), producer dtype
            if emit_probs:
                mp = p * hm_ref[h]               # masked probs computed once
                mprobs_ref[0, h] = mp.astype(mprobs_ref.dtype)
                p_c = mp.astype(compute_dtype)
            else:
                p_c = p.astype(compute_dtype)
            v = value_ref[0, h].astype(compute_dtype)   # (Sk, Dh)
            c = jnp.dot(p_c, v, preferred_element_type=jnp.float32,
                        precision=precision)            # (tq, Dh), f32 acc on MXU
            if has_mask and not emit_probs:
                c = c * hm_ref[h]                # scale output: Sq*Dh, not Sq*Sk
            parts.append(c.astype(out_ref.dtype))       # early narrow cast
        blk = parts[0] if len(parts) == 1 else jnp.concatenate(parts, axis=-1)
        out_ref[0, :, g0 * Dh:g1 * Dh] = blk     # lane-aligned group store


def attention_forward(attention_probs, value_layer, head_mask=None,
                      output_attentions=False, compute_dtype=jnp.bfloat16):
    """JAX/Pallas equivalent of Attention.forward.

    attention_probs: [B, H, Sq, Sk]
    value_layer:     [B, H, Sk, Dh]
    head_mask:       optional, broadcastable to per-head scalars [H]
    Returns (context [B, Sq, H*Dh],) or (context, attention_probs-after-mask).
    """
    B, H, Sq, Sk = attention_probs.shape
    Dh = value_layer.shape[-1]
    out_dtype = attention_probs.dtype

    has_mask = head_mask is not None
    emit_probs = output_attentions and has_mask

    hm = None
    if has_mask:
        hm = jnp.asarray(head_mask, jnp.float32)
        if hm.size == 1:
            hm = jnp.broadcast_to(hm.reshape(()), (H,))
        elif hm.size == H:
            hm = hm.reshape((H,))
        else:
            # TODO(synk): general [B, H, Sq, Sk]-broadcast head_mask unsupported here.
            raise ValueError("head_mask must be broadcastable to per-head scalars [H]")

    # No wrapper-side casts: kernel reads producer dtypes from HBM directly.
    p_in, v_in = attention_probs, value_layer
    probs_isz = jnp.dtype(p_in.dtype).itemsize
    value_isz = jnp.dtype(v_in.dtype).itemsize
    out_isz = jnp.dtype(out_dtype).itemsize

    vmem_limit, vmem_budget = _vmem_budget()
    # tq sits on the sublane axis of probs-in, ctx-out and masked-probs-out blocks.
    min_multiple = 16 if min(probs_isz, out_isz) < 4 else 8
    tq = _choose_tq(Sq, Sk, H, Dh, probs_isz, value_isz, out_isz,
                    emit_probs, vmem_budget, min_multiple)
    grid = (B, Sq // tq)

    if has_mask:
        probs_map = lambda b, q, hm_ref: (b, 0, q, 0)
        value_map = lambda b, q, hm_ref: (b, 0, 0, 0)
        ctx_map = lambda b, q, hm_ref: (b, q, 0)
    else:
        probs_map = lambda b, q: (b, 0, q, 0)
        value_map = lambda b, q: (b, 0, 0, 0)
        ctx_map = lambda b, q: (b, q, 0)

    ctx_spec = pl.BlockSpec((1, tq, H * Dh), ctx_map)
    if emit_probs:
        out_specs = [ctx_spec, pl.BlockSpec((1, H, tq, Sk), probs_map)]
        out_shape = (jax.ShapeDtypeStruct((B, Sq, H * Dh), out_dtype),
                     jax.ShapeDtypeStruct((B, H, Sq, Sk), out_dtype))
    else:
        out_specs = ctx_spec
        out_shape = jax.ShapeDtypeStruct((B, Sq, H * Dh), out_dtype)

    kernel = functools.partial(
        _attn_ctx_kernel, Dh=Dh, head_groups=_head_groups(H, Dh),
        compute_dtype=compute_dtype, has_mask=has_mask, emit_probs=emit_probs)

    def build(value_pipeline_mode):
        vspec_kwargs = {}
        if value_pipeline_mode is not None:
            vspec_kwargs["pipeline_mode"] = value_pipeline_mode
        in_specs = [
            pl.BlockSpec((1, H, tq, Sk), probs_map),
            # Value block index is constant along the q axis; single-buffering
            # it frees VMEM for a larger probs tile.
            pl.BlockSpec((1, H, Sk, Dh), value_map, **vspec_kwargs),
        ]
        grid_spec = pltpu.PrefetchScalarGridSpec(
            num_scalar_prefetch=1 if has_mask else 0,
            grid=grid,
            in_specs=in_specs,
            out_specs=out_specs,
        )
        return pl.pallas_call(
            kernel,
            out_shape=out_shape,
            grid_spec=grid_spec,
            compiler_params=pltpu.CompilerParams(
                dimension_semantics=("parallel", "parallel"),
                vmem_limit_bytes=vmem_limit,
            ),
        )

    args = (hm, p_in, v_in) if has_mask else (p_in, v_in)

    result = None
    if hasattr(pl, "Buffered"):
        try:
            result = build(pl.Buffered(1))(*args)
        except Exception:
            result = None
    if result is None:
        result = build(None)(*args)

    if emit_probs:
        context, masked_probs = result
        return (context, masked_probs)
    context = result
    if output_attentions:
        return (context, attention_probs)
    return (context,)


if __name__ == "__main__":
    # Small shapes consistent with the module: hidden=32, heads=4 -> head_dim=8, seq=8.
    B, H, S, Dh = 2, 4, 8, 8

    key = jax.random.PRNGKey(0)
    k1, k2, k3 = jax.random.split(key, 3)

    scores = jax.random.normal(k1, (B, H, S, S), jnp.float32)
    attention_probs = jax.nn.softmax(scores, axis=-1)
    value_layer = jax.random.normal(k2, (B, H, S, Dh), jnp.float32)
    head_mask = jax.random.uniform(k3, (H,), jnp.float32)

    # Pure-JAX reference (exact f32).
    def ref(probs, value, hm):
        if hm is not None:
            probs = probs * hm[None, :, None, None]
        ctx = jnp.einsum("bhqk,bhkd->bhqd", probs, value,
                         precision=jax.lax.Precision.HIGHEST)
        return jnp.transpose(ctx, (0, 2, 1, 3)).reshape(B, S, H * Dh), probs

    ref_ctx, _ = ref(attention_probs, value_layer, None)
    ref_ctx_m, ref_probs_m = ref(attention_probs, value_layer, head_mask)

    # Exact f32 compute paths (tight check).
    (ctx32,) = attention_forward(attention_probs, value_layer,
                                 compute_dtype=jnp.float32)
    ctx32_m, probs32_m = attention_forward(attention_probs, value_layer,
                                           head_mask=head_mask,
                                           output_attentions=True,
                                           compute_dtype=jnp.float32)
    # Default bf16 MXU-input paths (no-mask; mask without output_attentions).
    (ctx_bf,) = attention_forward(attention_probs, value_layer)
    (ctx_bf_m,) = attention_forward(attention_probs, value_layer,
                                    head_mask=head_mask)
    jax.block_until_ready((ctx32, ctx32_m, probs32_m, ctx_bf, ctx_bf_m))

    assert jnp.allclose(ctx32, ref_ctx, atol=1e-5, rtol=1e-5)
    assert jnp.allclose(ctx32_m, ref_ctx_m, atol=1e-5, rtol=1e-5)
    assert jnp.allclose(probs32_m, ref_probs_m, atol=1e-6, rtol=1e-6)
    assert jnp.allclose(ctx_bf, ref_ctx, atol=3e-2, rtol=3e-2)
    assert jnp.allclose(ctx_bf_m, ref_ctx_m, atol=3e-2, rtol=3e-2)

    print("KERNEL_OK")
</pallas_src>

<mosaic_0001>
module attributes {stable_mosaic.version = 11 : i64} {
  func.func @_attn_ctx_kernel(%arg0: i32, %arg1: i32, %arg2: memref<1x4x8x8xf32, #tpu.memory_space<vmem>>, %arg3: memref<1x4x8x8xf32, #tpu.memory_space<vmem>>, %arg4: memref<1x8x32xf32, #tpu.memory_space<vmem>>) attributes {dimension_semantics = [#tpu.dimension_semantics<parallel>, #tpu.dimension_semantics<parallel>], iteration_bounds = array<i64: 2, 1>, scalar_prefetch = 0 : i64, scratch_operands = 0 : i64, tpu.core_type = #tpu.core_type<tc>, window_params = [{transform_indices = @transform_0, window_bounds = array<i64: 1, 4, 8, 8>}, {pipeline_mode = #tpu.pipeline_mode<synchronous>, transform_indices = @transform_1, window_bounds = array<i64: 1, 4, 8, 8>}, {transform_indices = @transform_2, window_bounds = array<i64: 1, 8, 32>}]} {
    %c0 = arith.constant 0 : index
    %c0_0 = arith.constant 0 : index
    %c0_1 = arith.constant 0 : index
    %c0_2 = arith.constant 0 : index
    %0 = vector.load %arg2[%c0, %c0_0, %c0_1, %c0_2] : memref<1x4x8x8xf32, #tpu.memory_space<vmem>>, vector<1x1x8x8xf32>
    %1 = vector.shape_cast %0 : vector<1x1x8x8xf32> to vector<8x8xf32>
    %c0_3 = arith.constant 0 : index
    %c0_4 = arith.constant 0 : index
    %c0_5 = arith.constant 0 : index
    %c0_6 = arith.constant 0 : index
    %2 = vector.load %arg3[%c0_3, %c0_4, %c0_5, %c0_6] : memref<1x4x8x8xf32, #tpu.memory_space<vmem>>, vector<1x1x8x8xf32>
    %3 = vector.shape_cast %2 : vector<1x1x8x8xf32> to vector<8x8xf32>
    %cst = arith.constant dense<0.000000e+00> : vector<8x8xf32>
    %4 = tpu.matmul %1, %3, %cst {dimension_numbers = #tpu.dot_dimension_numbers<[1], [0], [0], [1], [0, 0, 1, 1], [], []>, precision = #tpu.contract_precision<fp32>} : vector<8x8xf32>, vector<8x8xf32>, vector<8x8xf32> -> vector<8x8xf32>
    %c0_7 = arith.constant 0 : index
    %c1 = arith.constant 1 : index
    %c0_8 = arith.constant 0 : index
    %c0_9 = arith.constant 0 : index
    %5 = vector.load %arg2[%c0_7, %c1, %c0_8, %c0_9] : memref<1x4x8x8xf32, #tpu.memory_space<vmem>>, vector<1x1x8x8xf32>
    %6 = vector.shape_cast %5 : vector<1x1x8x8xf32> to vector<8x8xf32>
    %c0_10 = arith.constant 0 : index
    %c1_11 = arith.constant 1 : index
    %c0_12 = arith.constant 0 : index
    %c0_13 = arith.constant 0 : index
    %7 = vector.load %arg3[%c0_10, %c1_11, %c0_12, %c0_13] : memref<1x4x8x8xf32, #tpu.memory_space<vmem>>, vector<1x1x8x8xf32>
    %8 = vector.shape_cast %7 : vector<1x1x8x8xf32> to vector<8x8xf32>
    %cst_14 = arith.constant dense<0.000000e+00> : vector<8x8xf32>
    %9 = tpu.matmul %6, %8, %cst_14 {dimension_numbers = #tpu.dot_dimension_numbers<[1], [0], [0], [1], [0, 0, 1, 1], [], []>, precision = #tpu.contract_precision<fp32>} : vector<8x8xf32>, vector<8x8xf32>, vector<8x8xf32> -> vector<8x8xf32>
    %c0_15 = arith.constant 0 : index
    %c2 = arith.constant 2 : index
    %c0_16 = arith.constant 0 : index
    %c0_17 = arith.constant 0 : index
    %10 = vector.load %arg2[%c0_15, %c2, %c0_16, %c0_17] : memref<1x4x8x8xf32, #tpu.memory_space<vmem>>, vector<1x1x8x8xf32>
    %11 = vector.shape_cast %10 : vector<1x1x8x8xf32> to vector<8x8xf32>
    %c0_18 = arith.constant 0 : index
    %c2_19 = arith.constant 2 : index
    %c0_20 = arith.constant 0 : index
    %c0_21 = arith.constant 0 : index
    %12 = vector.load %arg3[%c0_18, %c2_19, %c0_20, %c0_21] : memref<1x4x8x8xf32, #tpu.memory_space<vmem>>, vector<1x1x8x8xf32>
    %13 = vector.shape_cast %12 : vector<1x1x8x8xf32> to vector<8x8xf32>
    %cst_22 = arith.constant dense<0.000000e+00> : vector<8x8xf32>
    %14 = tpu.matmul %11, %13, %cst_22 {dimension_numbers = #tpu.dot_dimension_numbers<[1], [0], [0], [1], [0, 0, 1, 1], [], []>, precision = #tpu.contract_precision<fp32>} : vector<8x8xf32>, vector<8x8xf32>, vector<8x8xf32> -> vector<8x8xf32>
    %c0_23 = arith.constant 0 : index
    %c3 = arith.constant 3 : index
    %c0_24 = arith.constant 0 : index
    %c0_25 = arith.constant 0 : index
    %15 = vector.load %arg2[%c0_23, %c3, %c0_24, %c0_25] : memref<1x4x8x8xf32, #tpu.memory_space<vmem>>, vector<1x1x8x8xf32>
    %16 = vector.shape_cast %15 : vector<1x1x8x8xf32> to vector<8x8xf32>
    %c0_26 = arith.constant 0 : index
    %c3_27 = arith.constant 3 : index
    %c0_28 = arith.constant 0 : index
    %c0_29 = arith.constant 0 : index
    %17 = vector.load %arg3[%c0_26, %c3_27, %c0_28, %c0_29] : memref<1x4x8x8xf32, #tpu.memory_space<vmem>>, vector<1x1x8x8xf32>
    %18 = vector.shape_cast %17 : vector<1x1x8x8xf32> to vector<8x8xf32>
    %cst_30 = arith.constant dense<0.000000e+00> : vector<8x8xf32>
    %19 = tpu.matmul %16, %18, %cst_30 {dimension_numbers = #tpu.dot_dimension_numbers<[1], [0], [0], [1], [0, 0, 1, 1], [], []>, precision = #tpu.contract_precision<fp32>} : vector<8x8xf32>, vector<8x8xf32>, vector<8x8xf32> -> vector<8x8xf32>
    %20 = tpu.concatenate %4, %9, %14, %19 in 1 : vector<8x8xf32>, vector<8x8xf32>, vector<8x8xf32>, vector<8x8xf32> -> vector<8x32xf32>
    %c0_31 = arith.constant 0 : index
    %c0_32 = arith.constant 0 : index
    %c0_33 = arith.constant 0 : index
    %21 = vector.load %arg4[%c0_31, %c0_32, %c0_33] : memref<1x8x32xf32, #tpu.memory_space<vmem>>, vector<1x8x32xf32>
    %22 = vector.shape_cast %21 : vector<1x8x32xf32> to vector<8x32xf32>
    %23 = vector.shape_cast %20 : vector<8x32xf32> to vector<1x8x32xf32>
    tpu.vector_store %arg4[%c0_31, %c0_32, %c0_33], %23 {strides = array<i32>} : memref<1x8x32xf32, #tpu.memory_space<vmem>>, vector<1x8x32xf32>,
    return
  }
  func.func @transform_0(%arg0: i32, %arg1: i32) -> (i32, i32, i32, i32) {
    %c0_i32 = arith.constant 0 : i32
    %c0_i32_0 = arith.constant 0 : i32
    %c0_i32_1 = arith.constant 0 : i32
    return %arg0, %c0_i32, %arg1, %c0_i32_0 : i32, i32, i32, i32
  }
  func.func @transform_1(%arg0: i32, %arg1: i32) -> (i32, i32, i32, i32) {
    %c0_i32 = arith.constant 0 : i32
    %c0_i32_0 = arith.constant 0 : i32
    %c0_i32_1 = arith.constant 0 : i32
    %c0_i32_2 = arith.constant 0 : i32
    return %arg0, %c0_i32, %c0_i32_0, %c0_i32_1 : i32, i32, i32, i32
  }
  func.func @transform_2(%arg0: i32, %arg1: i32) -> (i32, i32, i32) {
    %c0_i32 = arith.constant 0 : i32
    %c0_i32_0 = arith.constant 0 : i32
    return %arg0, %arg1, %c0_i32 : i32, i32, i32
  }
}

module attributes {stable_mosaic.version = 11 : i64} {
  func.func @_attn_ctx_kernel(%arg0: i32, %arg1: i32, %arg2: memref<1x4x8x8xf32, #tpu.memory_space<vmem>>, %arg3: memref<1x4x8x8xf32, #tpu.memory_space<vmem>>, %arg4: memref<1x8x32xf32, #tpu.memory_space<vmem>>) attributes {dimension_semantics = [#tpu.dimension_semantics<parallel>, #tpu.dimension_semantics<parallel>], iteration_bounds = array<i64: 2, 1>, scalar_prefetch = 0 : i64, scratch_operands = 0 : i64, tpu.core_type = #tpu.core_type<tc>, window_params = [{transform_indices = @transform_0, window_bounds = array<i64: 1, 4, 8, 8>}, {transform_indices = @transform_1, window_bounds = array<i64: 1, 4, 8, 8>}, {transform_indices = @transform_2, window_bounds = array<i64: 1, 8, 32>}]} {
    %c0 = arith.constant 0 : index
    %c0_0 = arith.constant 0 : index
    %c0_1 = arith.constant 0 : index
    %c0_2 = arith.constant 0 : index
    %0 = vector.load %arg2[%c0, %c0_0, %c0_1, %c0_2] : memref<1x4x8x8xf32, #tpu.memory_space<vmem>>, vector<1x1x8x8xf32>
    %1 = vector.shape_cast %0 : vector<1x1x8x8xf32> to vector<8x8xf32>
    %c0_3 = arith.constant 0 : index
    %c0_4 = arith.constant 0 : index
    %c0_5 = arith.constant 0 : index
    %c0_6 = arith.constant 0 : index
    %2 = vector.load %arg3[%c0_3, %c0_4, %c0_5, %c0_6] : memref<1x4x8x8xf32, #tpu.memory_space<vmem>>, vector<1x1x8x8xf32>
    %3 = vector.shape_cast %2 : vector<1x1x8x8xf32> to vector<8x8xf32>
    %cst = arith.constant dense<0.000000e+00> : vector<8x8xf32>
    %4 = tpu.matmul %1, %3, %cst {dimension_numbers = #tpu.dot_dimension_numbers<[1], [0], [0], [1], [0, 0, 1, 1], [], []>, precision = #tpu.contract_precision<fp32>} : vector<8x8xf32>, vector<8x8xf32>, vector<8x8xf32> -> vector<8x8xf32>
    %c0_7 = arith.constant 0 : index
    %c1 = arith.constant 1 : index
    %c0_8 = arith.constant 0 : index
    %c0_9 = arith.constant 0 : index
    %5 = vector.load %arg2[%c0_7, %c1, %c0_8, %c0_9] : memref<1x4x8x8xf32, #tpu.memory_space<vmem>>, vector<1x1x8x8xf32>
    %6 = vector.shape_cast %5 : vector<1x1x8x8xf32> to vector<8x8xf32>
    %c0_10 = arith.constant 0 : index
    %c1_11 = arith.constant 1 : index
    %c0_12 = arith.constant 0 : index
    %c0_13 = arith.constant 0 : index
    %7 = vector.load %arg3[%c0_10, %c1_11, %c0_12, %c0_13] : memref<1x4x8x8xf32, #tpu.memory_space<vmem>>, vector<1x1x8x8xf32>
    %8 = vector.shape_cast %7 : vector<1x1x8x8xf32> to vector<8x8xf32>
    %cst_14 = arith.constant dense<0.000000e+00> : vector<8x8xf32>
    %9 = tpu.matmul %6, %8, %cst_14 {dimension_numbers = #tpu.dot_dimension_numbers<[1], [0], [0], [1], [0, 0, 1, 1], [], []>, precision = #tpu.contract_precision<fp32>} : vector<8x8xf32>, vector<8x8xf32>, vector<8x8xf32> -> vector<8x8xf32>
    %c0_15 = arith.constant 0 : index
    %c2 = arith.constant 2 : index
    %c0_16 = arith.constant 0 : index
    %c0_17 = arith.constant 0 : index
    %10 = vector.load %arg2[%c0_15, %c2, %c0_16, %c0_17] : memref<1x4x8x8xf32, #tpu.memory_space<vmem>>, vector<1x1x8x8xf32>
    %11 = vector.shape_cast %10 : vector<1x1x8x8xf32> to vector<8x8xf32>
    %c0_18 = arith.constant 0 : index
    %c2_19 = arith.constant 2 : index
    %c0_20 = arith.constant 0 : index
    %c0_21 = arith.constant 0 : index
    %12 = vector.load %arg3[%c0_18, %c2_19, %c0_20, %c0_21] : memref<1x4x8x8xf32, #tpu.memory_space<vmem>>, vector<1x1x8x8xf32>
    %13 = vector.shape_cast %12 : vector<1x1x8x8xf32> to vector<8x8xf32>
    %cst_22 = arith.constant dense<0.000000e+00> : vector<8x8xf32>
    %14 = tpu.matmul %11, %13, %cst_22 {dimension_numbers = #tpu.dot_dimension_numbers<[1], [0], [0], [1], [0, 0, 1, 1], [], []>, precision = #tpu.contract_precision<fp32>} : vector<8x8xf32>, vector<8x8xf32>, vector<8x8xf32> -> vector<8x8xf32>
    %c0_23 = arith.constant 0 : index
    %c3 = arith.constant 3 : index
    %c0_24 = arith.constant 0 : index
    %c0_25 = arith.constant 0 : index
    %15 = vector.load %arg2[%c0_23, %c3, %c0_24, %c0_25] : memref<1x4x8x8xf32, #tpu.memory_space<vmem>>, vector<1x1x8x8xf32>
    %16 = vector.shape_cast %15 : vector<1x1x8x8xf32> to vector<8x8xf32>
    %c0_26 = arith.constant 0 : index
    %c3_27 = arith.constant 3 : index
    %c0_28 = arith.constant 0 : index
    %c0_29 = arith.constant 0 : index
    %17 = vector.load %arg3[%c0_26, %c3_27, %c0_28, %c0_29] : memref<1x4x8x8xf32, #tpu.memory_space<vmem>>, vector<1x1x8x8xf32>
    %18 = vector.shape_cast %17 : vector<1x1x8x8xf32> to vector<8x8xf32>
    %cst_30 = arith.constant dense<0.000000e+00> : vector<8x8xf32>
    %19 = tpu.matmul %16, %18, %cst_30 {dimension_numbers = #tpu.dot_dimension_numbers<[1], [0], [0], [1], [0, 0, 1, 1], [], []>, precision = #tpu.contract_precision<fp32>} : vector<8x8xf32>, vector<8x8xf32>, vector<8x8xf32> -> vector<8x8xf32>
    %20 = tpu.concatenate %4, %9, %14, %19 in 1 : vector<8x8xf32>, vector<8x8xf32>, vector<8x8xf32>, vector<8x8xf32> -> vector<8x32xf32>
    %c0_31 = arith.constant 0 : index
    %c0_32 = arith.constant 0 : index
    %c0_33 = arith.constant 0 : index
    %21 = vector.load %arg4[%c0_31, %c0_32, %c0_33] : memref<1x8x32xf32, #tpu.memory_space<vmem>>, vector<1x8x32xf32>
    %22 = vector.shape_cast %21 : vector<1x8x32xf32> to vector<8x32xf32>
    %23 = vector.shape_cast %20 : vector<8x32xf32> to vector<1x8x32xf32>
    tpu.vector_store %arg4[%c0_31, %c0_32, %c0_33], %23 {strides = array<i32>} : memref<1x8x32xf32, #tpu.memory_space<vmem>>, vector<1x8x32xf32>,
    return
  }
  func.func @transform_0(%arg0: i32, %arg1: i32) -> (i32, i32, i32, i32) {
    %c0_i32 = arith.constant 0 : i32
    %c0_i32_0 = arith.constant 0 : i32
    %c0_i32_1 = arith.constant 0 : i32
    return %arg0, %c0_i32, %arg1, %c0_i32_0 : i32, i32, i32, i32
  }
  func.func @transform_1(%arg0: i32, %arg1: i32) -> (i32, i32, i32, i32) {
    %c0_i32 = arith.constant 0 : i32
    %c0_i32_0 = arith.constant 0 : i32
    %c0_i32_1 = arith.constant 0 : i32
    %c0_i32_2 = arith.constant 0 : i32
    return %arg0, %c0_i32, %c0_i32_0, %c0_i32_1 : i32, i32, i32, i32
  }
  func.func @transform_2(%arg0: i32, %arg1: i32) -> (i32, i32, i32) {
    %c0_i32 = arith.constant 0 : i32
    %c0_i32_0 = arith.constant 0 : i32
    return %arg0, %arg1, %c0_i32 : i32, i32, i32
  }
}

</mosaic_0001>

<llo_original>
// kernel: tpu_custom_call.1
$region0: #{tpu_custom_call.1}
  #allocation0 [shape = 'u32[]', space=smem, size = 0x4, offset = 0x4, fixed_abs, tag = 'smem constant byte address 0x4 - core index']
  #allocation1 [shape = 'u32[144,128]{1,0:T(1,128)}', space=vmem, size = 0x12000, scoped, tag = 'internal scratch']
  %s0 = inlined_call_operand.hbm [shape: f32[2,4,8,8], index: 0, kind: input, shape index: {}]
  %s1 = inlined_call_operand.hbm [shape: f32[2,4,8,8], index: 1, kind: input, shape index: {}]
  %s2 = inlined_call_operand.hbm [shape: f32[2,8,32], index: 2, kind: output, shape index: {}]
  %s3 = sld [smem:[#allocation0]]
  $region49: #{tpu_custom_call.1} parent=0
    _
  %s5 = ssub.s32 1, %s3
  %s6 = scalar_select 0, %s5, %s3
  $region1: #{tpu_custom_call.1} parent=0
    #allocation2 [shape = 'u8[32768]{0}', space=vmem, size = 0x8000, scoped, tag = 'input window, operand 0']
    #allocation3 [shape = 's32[2]{0}', space=sflag, size = 0x8, scoped, tag = 'scoped memory for tpu_custom_call.1']
    #allocation4 [shape = 's32[2]{0}', space=sflag, size = 0x8, scoped, tag = 'scoped memory for tpu_custom_call.1']
    #allocation5 [shape = 'u8[16384]{0}', space=vmem, size = 0x4000, scoped, tag = 'input window, operand 1, single buffered']
    #allocation6 [shape = 's32[1]{0}', space=sflag, size = 0x4, scoped, tag = 'scoped memory for tpu_custom_call.1']
    #allocation7 [shape = 'u8[8192]{0}', space=vmem, size = 0x2000, scoped, tag = 'output window, operand 0']
    %7 = vsyncpa [#allocation3], 0
    %s8 = scalar_lea.sflag [#allocation3], 1
    %9 = vsyncpa %s8, 0
    %10 = vsyncpa [#allocation6], 0
    %11 = vsyncpa [#allocation4], 0
    %s12 = scalar_lea.sflag [#allocation4], 1
    %13 = vsyncpa %s12, 0
    loop: start=0, step=1, limit=4
    $region2: #{tpu_custom_call.1} parent=1 // loop_pre_header
      _
    $region3: #{tpu_custom_call.1} parent=1 // loop_header
      %s15 = sphi 0, %s19
      %p16 = scmp.ge.s32.totalorder %s15, 4
      %s22 = sphi 0, %s34
      %s23 = sphi 0, %s30
      %s24 = sphi 0, %s22
      %s25 = sphi 0, %s23
      %s26 = sphi 0, %s24
      %s27 = sphi 0, %s25
      %s39 = sphi 0, %s41
      %s42 = sphi 0, %s39
      %s43 = sphi 0, %s42
      %s59 = sphi 0, %s43
      %s65 = sphi 0, %s67
      %s68 = sphi 0, %s65
      %s69 = sphi 0, %s68
      %s85 = sphi 0, %s69
      %s93 = sphi 0, %s95
      %s96 = sphi 0, %s93
      %s97 = sphi 0, %s96
      %s113 = sphi 0, %s97
    $region4: #{tpu_custom_call.1} parent=1 // loop_header_branch
      %18 = sbr.rel (%p16) target = $region8
    $region5: #{tpu_custom_call.1} parent=1 // loop_body
      %s20 = ssub.s32 %s15, 1
      %s21 = ssub.s32 %s15, 2
      %s28 = sadd.s32 1, %s23
      %p29 = scmp.ge.s32.totalorder %s28, 1
      %s30 = scalar_select %p29, 0, %s28
      %s31 = sadd.s32 1, %s22
      %s32 = scalar_select %p29, %s31, %s22
      %p33 = scmp.ge.s32.totalorder %s32, 2
      %s34 = scalar_select %p33, 0, %s32
      %s35 = ssub.s32 %s22, %s34
      %s36 = ssub.s32 %s23, %s30
      %s37 = sor.u32 %s35, %s36
      %p38 = scmp.eq.s32.totalorder %s37, 0
      %s40 = sadd.s32 %s39, 1
      %s41 = scalar_select %p38, %s39, %s40
      %p44 = pneg %p38
      %p45 = scmp.eq.s32.totalorder %s15, 1
      %p46 = por %p44, %p45
      %p47 = scmp.ne.s32.totalorder %s39, %s42
      %p48 = scmp.eq.s32.totalorder %s15, 0
      %p49 = por %p47, %p48
      %p50 = scmp.ne.s32.totalorder %s39, %s42
      %p51 = scmp.eq.s32.totalorder %s20, 1
      %p52 = por %p50, %p51
      %p53 = scmp.ne.s32.totalorder %s42, %s43
      %p54 = scmp.eq.s32.totalorder %s20, 0
      %p55 = por %p53, %p54
      %p56 = scmp.ne.s32.totalorder %s42, %s43
      %p57 = scmp.eq.s32.totalorder %s21, 1
      %p58 = por %p56, %p57
      %p60 = scmp.ne.s32.totalorder %s43, %s59
      %p61 = scmp.eq.s32.totalorder %s21, 0
      %p62 = por %p60, %p61
      %s63 = ssub.s32 %s22, %s34
      %p64 = scmp.eq.s32.totalorder %s63, 0
      %s66 = sadd.s32 %s65, 1
      %s67 = scalar_select %p64, %s65, %s66
      %p70 = pneg %p64
      %p71 = scmp.eq.s32.totalorder %s15, 1
      %p72 = por %p70, %p71
      %p73 = scmp.ne.s32.totalorder %s65, %s68
      %p74 = scmp.eq.s32.totalorder %s15, 0
      %p75 = por %p73, %p74
      %p76 = scmp.ne.s32.totalorder %s65, %s68
      %p77 = scmp.eq.s32.totalorder %s20, 1
      %p78 = por %p76, %p77
      %p79 = scmp.ne.s32.totalorder %s68, %s69
      %p80 = scmp.eq.s32.totalorder %s20, 0
      %p81 = por %p79, %p80
      %p82 = scmp.ne.s32.totalorder %s68, %s69
      %p83 = scmp.eq.s32.totalorder %s21, 1
      %p84 = por %p82, %p83
      %p86 = scmp.ne.s32.totalorder %s69, %s85
      %p87 = scmp.eq.s32.totalorder %s21, 0
      %p88 = por %p86, %p87
      %s89 = ssub.s32 %s22, %s34
      %s90 = ssub.s32 %s23, %s30
      %s91 = sor.u32 %s89, %s90
      %p92 = scmp.eq.s32.totalorder %s91, 0
      %s94 = sadd.s32 %s93, 1
      %s95 = scalar_select %p92, %s93, %s94
      %p98 = pneg %p92
      %p99 = scmp.eq.s32.totalorder %s15, 1
      %p100 = por %p98, %p99
      %p101 = scmp.ne.s32.totalorder %s93, %s96
      %p102 = scmp.eq.s32.totalorder %s15, 0
      %p103 = por %p101, %p102
      %p104 = scmp.ne.s32.totalorder %s93, %s96
      %p105 = scmp.eq.s32.totalorder %s20, 1
      %p106 = por %p104, %p105
      %p107 = scmp.ne.s32.totalorder %s96, %s97
      %p108 = scmp.eq.s32.totalorder %s20, 0
      %p109 = por %p107, %p108
      %p110 = scmp.ne.s32.totalorder %s96, %s97
      %p111 = scmp.eq.s32.totalorder %s21, 1
      %p112 = por %p110, %p111
      %p114 = scmp.ne.s32.totalorder %s97, %s113
      %p115 = scmp.eq.s32.totalorder %s21, 0
      %p116 = por %p114, %p115
      %p117 = scmp.le.s32.totalorder 1, %s15
      %p118 = scmp.lt.s32.totalorder %s15, 3
      %p119 = pnand %p117, %p118
      %p120 = pneg %p119
      // Predicated region
      $region9: #{tpu_custom_call.1} parent=5 // pred_check
        _
      $region10: #{tpu_custom_call.1} parent=5 // pred_check_branch
        %122 = sbr.rel (%p119) target = $region12
      $region11: #{tpu_custom_call.1} parent=5 // pred_region
        %s123 = ssub.s32 %s15, 1
        // Predicated region
        $region13: #{tpu_custom_call.1} parent=11 // pred_check
          %p124 = pneg %p81
        $region14: #{tpu_custom_call.1} parent=11 // pred_check_branch
          %126 = sbr.rel (%p124) target = $region16
        $region15: #{tpu_custom_call.1} parent=11 // pred_region
          %s128 = ssub.s32 512, 512
          %129 = vsyncadd [#allocation6], %s128
          %s130 = smul.addr %s24, 4
          %s131 = smul.addr %s130, 128
          %s132 = scalar_lea.hbm %s1, %s131
          %s133 = sshll.u32 [#allocation5], 4
          %s134 = int_to_ptr.vmem [resolvable:$true] %s133
          %139 = dma.hbm_to_vmem [thread:$0]  %s132, 512, %s134, [#allocation6], 128, 128, 8
        $region16: #{tpu_custom_call.1} parent=11 // pred_fallthru
          _
      $region12: #{tpu_custom_call.1} parent=5 // pred_fallthru
        _
      %p140 = scmp.lt.s32.totalorder %s15, 2
      // Predicated region
      $region17: #{tpu_custom_call.1} parent=5 // pred_check
        %p141 = pneg %p140
      $region18: #{tpu_custom_call.1} parent=5 // pred_check_branch
        %143 = sbr.rel (%p141) target = $region20
      $region19: #{tpu_custom_call.1} parent=5 // pred_region
        // Predicated region
        $region21: #{tpu_custom_call.1} parent=19 // pred_check
          %p144 = pneg %p49
        $region22: #{tpu_custom_call.1} parent=19 // pred_check_branch
          %146 = sbr.rel (%p144) target = $region24
        $region23: #{tpu_custom_call.1} parent=19 // pred_region
          %s147 = sand.u32 %s39, 1
          %s148 = scalar_lea.sflag [#allocation3], %s147
          %s149 = sand.u32 %s39, 1
          %s150 = smul.addr %s149, 32
          %s151 = scalar_lea.vmem [#allocation2], %s150
          %s153 = ssub.s32 512, 512
          %154 = vsyncadd %s148, %s153
          %s155 = smul.addr %s22, 4
          %s156 = sadd.s32 %s23, %s155
          %s157 = smul.addr %s156, 128
          %s158 = scalar_lea.hbm %s0, %s157
          %s159 = sshll.u32 %s151, 4
          %s160 = int_to_ptr.vmem [resolvable:$true] %s159
          %165 = dma.hbm_to_vmem [thread:$0]  %s158, 512, %s160, %s148, 128, 128, 8
        $region24: #{tpu_custom_call.1} parent=19 // pred_fallthru
          _
      $region20: #{tpu_custom_call.1} parent=5 // pred_fallthru
        _
      %p166 = scmp.le.s32.totalorder 1, %s15
      %p167 = scmp.lt.s32.totalorder %s15, 3
      %p168 = pnand %p166, %p167
      %p169 = pneg %p168
      // Predicated region
      $region25: #{tpu_custom_call.1} parent=5 // pred_check
        _
      $region26: #{tpu_custom_call.1} parent=5 // pred_check_branch
        %171 = sbr.rel (%p168) target = $region28
      $region27: #{tpu_custom_call.1} parent=5 // pred_region
        %s172 = ssub.s32 %s15, 1
        %s173 = sand.u32 %s42, 1
        %s174 = scalar_lea.sflag [#allocation3], %s173
        %s175 = sand.u32 %s42, 1
        %s176 = smul.addr %s175, 32
        %s177 = scalar_lea.vmem [#allocation2], %s176
        // Predicated region
        $region29: #{tpu_custom_call.1} parent=27 // pred_check
          %p178 = pneg %p55
        $region30: #{tpu_custom_call.1} parent=27 // pred_check_branch
          %180 = sbr.rel (%p178) target = $region32
        $region31: #{tpu_custom_call.1} parent=27 // pred_region
          %181 = dma.done %s174, 512
        $region32: #{tpu_custom_call.1} parent=27 // pred_fallthru
          _
        // Predicated region
        $region33: #{tpu_custom_call.1} parent=27 // pred_check
          %p182 = pneg %p81
        $region34: #{tpu_custom_call.1} parent=27 // pred_check_branch
          %184 = sbr.rel (%p182) target = $region36
        $region35: #{tpu_custom_call.1} parent=27 // pred_region
          %185 = dma.done [#allocation6], 512
        $region36: #{tpu_custom_call.1} parent=27 // pred_fallthru
          _
        %s186 = sand.u32 %s42, 1
        %s187 = scalar_lea.sflag [#allocation3], %s186
        %s188 = sand.u32 %s42, 1
        %s189 = smul.addr %s188, 32
        %s190 = scalar_lea.vmem [#allocation2], %s189
        %p191 = pneg %p55
        %p192 = pneg %p52
        %p193 = pneg %p81
        %p194 = pneg %p78
        %p195 = pneg %p109
        %p196 = pneg %p106
        %s197 = sand.u32 %s96, 1
        %s198 = scalar_lea.sflag [#allocation4], %s197
        %s199 = sand.u32 %s96, 1
        %s200 = smul.addr %s199, 8
        %s201 = scalar_lea.vmem [#allocation7], %s200
        %v202 = vld [vmem:[%s177] sm:$0xff]
        %v203 = vld [vmem:[#allocation5] sm:$0xff]
        %vm204 = vcmask 64512
        %v206 = vsel %vm204, %v202, 0
        %208 = vmatprep.subr.mxu0 0.0
        %v209 = vand.u32 %v203, 4294901760
        %210 = vmatpush1.msra.mxu0 %v209
        %211 = vmatprep.subr.mxu0 0.0
        %212 = vmatpush1.msra.mxu0 0.0
        %213 = vmatprep.subr.mxu0 0.0
        %214 = vmatpush1.msra.mxu0 0.0
        %215 = vmatprep.subr.mxu0 0.0
        %216 = vmatpush1.msra.mxu0 0.0
        %217 = vmatprep.subr.mxu0 0.0
        %218 = vmatpush1.msra.mxu0 0.0
        %219 = vmatprep.subr.mxu0 0.0
        %220 = vmatpush1.msra.mxu0 0.0
        %221 = vmatprep.subr.mxu0 0.0
        %222 = vmatpush1.msra.mxu0 0.0
        %223 = vmatprep.subr.mxu0 0.0
        %224 = vmatpush1.msra.mxu0 0.0
        %225 = vmatprep.subr.mxu0 0.0
        %226 = vmatpush1.msra.mxu0 0.0
        %227 = vmatprep.subr.mxu0 0.0
        %228 = vmatpush1.msra.mxu0 0.0
        %229 = vmatprep.subr.mxu0 0.0
        %230 = vmatpush1.msra.mxu0 0.0
        %231 = vmatprep.subr.mxu0 0.0
        %232 = vmatpush1.msra.mxu0 0.0
        %233 = vmatprep.subr.mxu0 0.0
        %234 = vmatpush1.msra.mxu0 0.0
        %235 = vmatprep.subr.mxu0 0.0
        %236 = vmatpush1.msra.mxu0 0.0
        %237 = vmatprep.subr.mxu0 0.0
        %238 = vmatpush1.msra.mxu0 0.0
        %239 = vmatprep.subr.mxu0 0.0
        %240 = vmatpush1.msra.mxu0 0.0
        %241 = vmatprep.subr.mxu0 0.0
        %242 = vmatpush1.msra.mxu0 0.0
        %243 = vmatprep.subr.mxu0 0.0
        %244 = vmatpush1.msra.mxu0 0.0
        %245 = vmatprep.subr.mxu0 0.0
        %246 = vmatpush1.msra.mxu0 0.0
        %247 = vmatprep.subr.mxu0 0.0
        %248 = vmatpush1.msra.mxu0 0.0
        %249 = vmatprep.subr.mxu0 0.0
        %250 = vmatpush1.msra.mxu0 0.0
        %251 = vmatprep.subr.mxu0 0.0
        %252 = vmatpush1.msra.mxu0 0.0
        %253 = vmatprep.subr.mxu0 0.0
        %254 = vmatpush1.msra.mxu0 0.0
        %255 = vmatprep.subr.mxu0 0.0
        %256 = vmatpush1.msra.mxu0 0.0
        %257 = vmatprep.subr.mxu0 0.0
        %258 = vmatpush1.msra.mxu0 0.0
        %259 = vmatprep.subr.mxu0 0.0
        %260 = vmatpush1.msra.mxu0 0.0
        %261 = vmatprep.subr.mxu0 0.0
        %262 = vmatpush1.msra.mxu0 0.0
        %263 = vmatprep.subr.mxu0 0.0
        %264 = vmatpush1.msra.mxu0 0.0
        %265 = vmatprep.subr.mxu0 0.0
        %266 = vmatpush1.msra.mxu0 0.0
        %267 = vmatprep.subr.mxu0 0.0
        %268 = vmatpush1.msra.mxu0 0.0
        %269 = vmatprep.subr.mxu0 0.0
        %270 = vmatpush1.msra.mxu0 0.0
        %271 = vmatprep.subr.mxu0 0.0
        %272 = vmatpush1.msra.mxu0 0.0
        %273 = vmatprep.mubr.f32.mxu0 0.0
        %v274 = vand.u32 %v206, 4294901760
        %v275 = vsub.f32 %v206, %v274
        %v276 = vand.u32 %v275, 4294901760
        %v277 = vsub.f32 %v275, %v276
        %v278 = vand.u32 %v277, 4294901760
        %279 = vmatmul.mubr.f32.gmra.mrb[0].mxu0 %v278
        %v280 = vpop.f32.mrb[0].mxu0
        %v281 = vadd.f32 0.0, %v280
        %v282 = vpop.f32.mrb[0].mxu0
        %283 = vdwg.mxu0
        %284 = vmatprep.subr.mxu0 0.0
        %v285 = vand.u32 %v203, 4294901760
        %v286 = vsub.f32 %v203, %v285
        %v287 = vand.u32 %v286, 4294901760
        %v288 = vsub.f32 %v286, %v287
        %v289 = vand.u32 %v288, 4294901760
        %290 = vmatpush1.msra.mxu0 %v289
        %291 = vmatprep.subr.mxu0 0.0
        %292 = vmatpush1.msra.mxu0 0.0
        %293 = vmatprep.subr.mxu0 0.0
        %294 = vmatpush1.msra.mxu0 0.0
        %295 = vmatprep.subr.mxu0 0.0
        %296 = vmatpush1.msra.mxu0 0.0
        %297 = vmatprep.subr.mxu0 0.0
        %298 = vmatpush1.msra.mxu0 0.0
        %299 = vmatprep.subr.mxu0 0.0
        %300 = vmatpush1.msra.mxu0 0.0
        %301 = vmatprep.subr.mxu0 0.0
        %302 = vmatpush1.msra.mxu0 0.0
        %303 = vmatprep.subr.mxu0 0.0
        %304 = vmatpush1.msra.mxu0 0.0
        %305 = vmatprep.subr.mxu0 0.0
        %306 = vmatpush1.msra.mxu0 0.0
        %307 = vmatprep.subr.mxu0 0.0
        %308 = vmatpush1.msra.mxu0 0.0
        %309 = vmatprep.subr.mxu0 0.0
        %310 = vmatpush1.msra.mxu0 0.0
        %311 = vmatprep.subr.mxu0 0.0
        %312 = vmatpush1.msra.mxu0 0.0
        %313 = vmatprep.subr.mxu0 0.0
        %314 = vmatpush1.msra.mxu0 0.0
        %315 = vmatprep.subr.mxu0 0.0
        %316 = vmatpush1.msra.mxu0 0.0
        %317 = vmatprep.subr.mxu0 0.0
        %318 = vmatpush1.msra.mxu0 0.0
        %319 = vmatprep.subr.mxu0 0.0
        %320 = vmatpush1.msra.mxu0 0.0
        %321 = vmatprep.subr.mxu0 0.0
        %322 = vmatpush1.msra.mxu0 0.0
        %323 = vmatprep.subr.mxu0 0.0
        %324 = vmatpush1.msra.mxu0 0.0
        %325 = vmatprep.subr.mxu0 0.0
        %326 = vmatpush1.msra.mxu0 0.0
        %327 = vmatprep.subr.mxu0 0.0
        %328 = vmatpush1.msra.mxu0 0.0
        %329 = vmatprep.subr.mxu0 0.0
        %330 = vmatpush1.msra.mxu0 0.0
        %331 = vmatprep.subr.mxu0 0.0
        %332 = vmatpush1.msra.mxu0 0.0
        %333 = vmatprep.subr.mxu0 0.0
        %334 = vmatpush1.msra.mxu0 0.0
        %335 = vmatprep.subr.mxu0 0.0
        %336 = vmatpush1.msra.mxu0 0.0
        %337 = vmatprep.subr.mxu0 0.0
        %338 = vmatpush1.msra.mxu0 0.0
        %339 = vmatprep.subr.mxu0 0.0
        %340 = vmatpush1.msra.mxu0 0.0
        %341 = vmatprep.subr.mxu0 0.0
        %342 = vmatpush1.msra.mxu0 0.0
        %343 = vmatprep.subr.mxu0 0.0
        %344 = vmatpush1.msra.mxu0 0.0
        %345 = vmatprep.subr.mxu0 0.0
        %346 = vmatpush1.msra.mxu0 0.0
        %347 = vmatprep.subr.mxu0 0.0
        %348 = vmatpush1.msra.mxu0 0.0
        %349 = vmatprep.subr.mxu0 0.0
        %350 = vmatpush1.msra.mxu0 0.0
        %351 = vmatprep.subr.mxu0 0.0
        %352 = vmatpush1.msra.mxu0 0.0
        %353 = vmatprep.mubr.f32.mxu0 0.0
        %v354 = vand.u32 %v206, 4294901760
        %355 = vmatmul.mubr.f32.gmra.mrb[0].mxu0 %v354
        %v356 = vpop.f32.mrb[0].mxu0
        %v357 = vadd.f32 %v281, %v356
        %v358 = vpop.f32.mrb[0].mxu0
        %359 = vdwg.mxu0
        %360 = vmatprep.subr.mxu0 0.0
        %v361 = vand.u32 %v203, 4294901760
        %v362 = vsub.f32 %v203, %v361
        %363 = vmatpush1.msra.mxu0 %v362
        %364 = vmatprep.subr.mxu0 0.0
        %365 = vmatpush1.msra.mxu0 0.0
        %366 = vmatprep.subr.mxu0 0.0
        %367 = vmatpush1.msra.mxu0 0.0
        %368 = vmatprep.subr.mxu0 0.0
        %369 = vmatpush1.msra.mxu0 0.0
        %370 = vmatprep.subr.mxu0 0.0
        %371 = vmatpush1.msra.mxu0 0.0
        %372 = vmatprep.subr.mxu0 0.0
        %373 = vmatpush1.msra.mxu0 0.0
        %374 = vmatprep.subr.mxu0 0.0
        %375 = vmatpush1.msra.mxu0 0.0
        %376 = vmatprep.subr.mxu0 0.0
        %377 = vmatpush1.msra.mxu0 0.0
        %378 = vmatprep.subr.mxu0 0.0
        %379 = vmatpush1.msra.mxu0 0.0
        %380 = vmatprep.subr.mxu0 0.0
        %381 = vmatpush1.msra.mxu0 0.0
        %382 = vmatprep.subr.mxu0 0.0
        %383 = vmatpush1.msra.mxu0 0.0
        %384 = vmatprep.subr.mxu0 0.0
        %385 = vmatpush1.msra.mxu0 0.0
        %386 = vmatprep.subr.mxu0 0.0
        %387 = vmatpush1.msra.mxu0 0.0
        %388 = vmatprep.subr.mxu0 0.0
        %389 = vmatpush1.msra.mxu0 0.0
        %390 = vmatprep.subr.mxu0 0.0
        %391 = vmatpush1.msra.mxu0 0.0
        %392 = vmatprep.subr.mxu0 0.0
        %393 = vmatpush1.msra.mxu0 0.0
        %394 = vmatprep.subr.mxu0 0.0
        %395 = vmatpush1.msra.mxu0 0.0
        %396 = vmatprep.subr.mxu0 0.0
        %397 = vmatpush1.msra.mxu0 0.0
        %398 = vmatprep.subr.mxu0 0.0
        %399 = vmatpush1.msra.mxu0 0.0
        %400 = vmatprep.subr.mxu0 0.0
        %401 = vmatpush1.msra.mxu0 0.0
        %402 = vmatprep.subr.mxu0 0.0
        %403 = vmatpush1.msra.mxu0 0.0
        %404 = vmatprep.subr.mxu0 0.0
        %405 = vmatpush1.msra.mxu0 0.0
        %406 = vmatprep.subr.mxu0 0.0
        %407 = vmatpush1.msra.mxu0 0.0
        %408 = vmatprep.subr.mxu0 0.0
        %409 = vmatpush1.msra.mxu0 0.0
        %410 = vmatprep.subr.mxu0 0.0
        %411 = vmatpush1.msra.mxu0 0.0
        %412 = vmatprep.subr.mxu0 0.0
        %413 = vmatpush1.msra.mxu0 0.0
        %414 = vmatprep.subr.mxu0 0.0
        %415 = vmatpush1.msra.mxu0 0.0
        %416 = vmatprep.subr.mxu0 0.0
        %417 = vmatpush1.msra.mxu0 0.0
        %418 = vmatprep.subr.mxu0 0.0
        %419 = vmatpush1.msra.mxu0 0.0
        %420 = vmatprep.subr.mxu0 0.0
        %421 = vmatpush1.msra.mxu0 0.0
        %422 = vmatprep.subr.mxu0 0.0
        %423 = vmatpush1.msra.mxu0 0.0
        %424 = vmatprep.subr.mxu0 0.0
        %425 = vmatpush1.msra.mxu0 0.0
        %426 = vmatprep.mubr.f32.mxu0 0.0
        %v427 = vand.u32 %v206, 4294901760
        %v428 = vsub.f32 %v206, %v427
        %429 = vmatmul.mubr.f32.gmra.mrb[0].mxu0 %v428
        %v430 = vpop.f32.mrb[0].mxu0
        %v431 = vadd.f32 %v357, %v430
        %v432 = vpop.f32.mrb[0].mxu0
        %433 = vdwg.mxu0
        %434 = vmatprep.subr.mxu0 0.0
        %v435 = vand.u32 %v203, 4294901760
        %436 = vmatpush1.msra.mxu0 %v435
        %437 = vmatprep.subr.mxu0 0.0
        %438 = vmatpush1.msra.mxu0 0.0
        %439 = vmatprep.subr.mxu0 0.0
        %440 = vmatpush1.msra.mxu0 0.0
        %441 = vmatprep.subr.mxu0 0.0
        %442 = vmatpush1.msra.mxu0 0.0
        %443 = vmatprep.subr.mxu0 0.0
        %444 = vmatpush1.msra.mxu0 0.0
        %445 = vmatprep.subr.mxu0 0.0
        %446 = vmatpush1.msra.mxu0 0.0
        %447 = vmatprep.subr.mxu0 0.0
        %448 = vmatpush1.msra.mxu0 0.0
        %449 = vmatprep.subr.mxu0 0.0
        %450 = vmatpush1.msra.mxu0 0.0
        %451 = vmatprep.subr.mxu0 0.0
        %452 = vmatpush1.msra.mxu0 0.0
        %453 = vmatprep.subr.mxu0 0.0
        %454 = vmatpush1.msra.mxu0 0.0
        %455 = vmatprep.subr.mxu0 0.0
        %456 = vmatpush1.msra.mxu0 0.0
        %457 = vmatprep.subr.mxu0 0.0
        %458 = vmatpush1.msra.mxu0 0.0
        %459 = vmatprep.subr.mxu0 0.0
        %460 = vmatpush1.msra.mxu0 0.0
        %461 = vmatprep.subr.mxu0 0.0
        %462 = vmatpush1.msra.mxu0 0.0
        %463 = vmatprep.subr.mxu0 0.0
        %464 = vmatpush1.msra.mxu0 0.0
        %465 = vmatprep.subr.mxu0 0.0
        %466 = vmatpush1.msra.mxu0 0.0
        %467 = vmatprep.subr.mxu0 0.0
        %468 = vmatpush1.msra.mxu0 0.0
        %469 = vmatprep.subr.mxu0 0.0
        %470 = vmatpush1.msra.mxu0 0.0
        %471 = vmatprep.subr.mxu0 0.0
        %472 = vmatpush1.msra.mxu0 0.0
        %473 = vmatprep.subr.mxu0 0.0
        %474 = vmatpush1.msra.mxu0 0.0
        %475 = vmatprep.subr.mxu0 0.0
        %476 = vmatpush1.msra.mxu0 0.0
        %477 = vmatprep.subr.mxu0 0.0
        %478 = vmatpush1.msra.mxu0 0.0
        %479 = vmatprep.subr.mxu0 0.0
        %480 = vmatpush1.msra.mxu0 0.0
        %481 = vmatprep.subr.mxu0 0.0
        %482 = vmatpush1.msra.mxu0 0.0
        %483 = vmatprep.subr.mxu0 0.0
        %484 = vmatpush1.msra.mxu0 0.0
        %485 = vmatprep.subr.mxu0 0.0
        %486 = vmatpush1.msra.mxu0 0.0
        %487 = vmatprep.subr.mxu0 0.0
        %488 = vmatpush1.msra.mxu0 0.0
        %489 = vmatprep.subr.mxu0 0.0
        %490 = vmatpush1.msra.mxu0 0.0
        %491 = vmatprep.subr.mxu0 0.0
        %492 = vmatpush1.msra.mxu0 0.0
        %493 = vmatprep.subr.mxu0 0.0
        %494 = vmatpush1.msra.mxu0 0.0
        %495 = vmatprep.subr.mxu0 0.0
        %496 = vmatpush1.msra.mxu0 0.0
        %497 = vmatprep.subr.mxu0 0.0
        %498 = vmatpush1.msra.mxu0 0.0
        %499 = vmatprep.mubr.f32.mxu0 0.0
        %v500 = vand.u32 %v206, 4294901760
        %v501 = vsub.f32 %v206, %v500
        %v502 = vand.u32 %v501, 4294901760
        %503 = vmatmul.mubr.f32.gmra.mrb[0].mxu0 %v502
        %v504 = vpop.f32.mrb[0].mxu0
        %v505 = vadd.f32 %v431, %v504
        %v506 = vpop.f32.mrb[0].mxu0
        %507 = vdwg.mxu0
        %508 = vmatprep.subr.mxu0 0.0
        %v509 = vand.u32 %v203, 4294901760
        %v510 = vsub.f32 %v203, %v509
        %v511 = vand.u32 %v510, 4294901760
        %512 = vmatpush1.msra.mxu0 %v511
        %513 = vmatprep.subr.mxu0 0.0
        %514 = vmatpush1.msra.mxu0 0.0
        %515 = vmatprep.subr.mxu0 0.0
        %516 = vmatpush1.msra.mxu0 0.0
        %517 = vmatprep.subr.mxu0 0.0
        %518 = vmatpush1.msra.mxu0 0.0
        %519 = vmatprep.subr.mxu0 0.0
        %520 = vmatpush1.msra.mxu0 0.0
        %521 = vmatprep.subr.mxu0 0.0
        %522 = vmatpush1.msra.mxu0 0.0
        %523 = vmatprep.subr.mxu0 0.0
        %524 = vmatpush1.msra.mxu0 0.0
        %525 = vmatprep.subr.mxu0 0.0
        %526 = vmatpush1.msra.mxu0 0.0
        %527 = vmatprep.subr.mxu0 0.0
        %528 = vmatpush1.msra.mxu0 0.0
        %529 = vmatprep.subr.mxu0 0.0
        %530 = vmatpush1.msra.mxu0 0.0
        %531 = vmatprep.subr.mxu0 0.0
        %532 = vmatpush1.msra.mxu0 0.0
        %533 = vmatprep.subr.mxu0 0.0
        %534 = vmatpush1.msra.mxu0 0.0
        %535 = vmatprep.subr.mxu0 0.0
        %536 = vmatpush1.msra.mxu0 0.0
        %537 = vmatprep.subr.mxu0 0.0
        %538 = vmatpush1.msra.mxu0 0.0
        %539 = vmatprep.subr.mxu0 0.0
        %540 = vmatpush1.msra.mxu0 0.0
        %541 = vmatprep.subr.mxu0 0.0
        %542 = vmatpush1.msra.mxu0 0.0
        %543 = vmatprep.subr.mxu0 0.0
        %544 = vmatpush1.msra.mxu0 0.0
        %545 = vmatprep.subr.mxu0 0.0
        %546 = vmatpush1.msra.mxu0 0.0
        %547 = vmatprep.subr.mxu0 0.0
        %548 = vmatpush1.msra.mxu0 0.0
        %549 = vmatprep.subr.mxu0 0.0
        %550 = vmatpush1.msra.mxu0 0.0
        %551 = vmatprep.subr.mxu0 0.0
        %552 = vmatpush1.msra.mxu0 0.0
        %553 = vmatprep.subr.mxu0 0.0
        %554 = vmatpush1.msra.mxu0 0.0
        %555 = vmatprep.subr.mxu0 0.0
        %556 = vmatpush1.msra.mxu0 0.0
        %557 = vmatprep.subr.mxu0 0.0
        %558 = vmatpush1.msra.mxu0 0.0
        %559 = vmatprep.subr.mxu0 0.0
        %560 = vmatpush1.msra.mxu0 0.0
        %561 = vmatprep.subr.mxu0 0.0
        %562 = vmatpush1.msra.mxu0 0.0
        %563 = vmatprep.subr.mxu0 0.0
        %564 = vmatpush1.msra.mxu0 0.0
        %565 = vmatprep.subr.mxu0 0.0
        %566 = vmatpush1.msra.mxu0 0.0
        %567 = vmatprep.subr.mxu0 0.0
        %568 = vmatpush1.msra.mxu0 0.0
        %569 = vmatprep.subr.mxu0 0.0
        %570 = vmatpush1.msra.mxu0 0.0
        %571 = vmatprep.subr.mxu0 0.0
        %572 = vmatpush1.msra.mxu0 0.0
        %573 = vmatprep.subr.mxu0 0.0
        %574 = vmatpush1.msra.mxu0 0.0
        %575 = vmatprep.mubr.f32.mxu0 0.0
        %v576 = vand.u32 %v206, 4294901760
        %577 = vmatmul.mubr.f32.gmra.mrb[0].mxu0 %v576
        %v578 = vpop.f32.mrb[0].mxu0
        %v579 = vadd.f32 %v505, %v578
        %v580 = vpop.f32.mrb[0].mxu0
        %581 = vdwg.mxu0
        %582 = vmatprep.subr.mxu0 0.0
        %v583 = vand.u32 %v203, 4294901760
        %584 = vmatpush1.msra.mxu0 %v583
        %585 = vmatprep.subr.mxu0 0.0
        %586 = vmatpush1.msra.mxu0 0.0
        %587 = vmatprep.subr.mxu0 0.0
        %588 = vmatpush1.msra.mxu0 0.0
        %589 = vmatprep.subr.mxu0 0.0
        %590 = vmatpush1.msra.mxu0 0.0
        %591 = vmatprep.subr.mxu0 0.0
        %592 = vmatpush1.msra.mxu0 0.0
        %593 = vmatprep.subr.mxu0 0.0
        %594 = vmatpush1.msra.mxu0 0.0
        %595 = vmatprep.subr.mxu0 0.0
        %596 = vmatpush1.msra.mxu0 0.0
        %597 = vmatprep.subr.mxu0 0.0
        %598 = vmatpush1.msra.mxu0 0.0
        %599 = vmatprep.subr.mxu0 0.0
        %600 = vmatpush1.msra.mxu0 0.0
        %601 = vmatprep.subr.mxu0 0.0
        %602 = vmatpush1.msra.mxu0 0.0
        %603 = vmatprep.subr.mxu0 0.0
        %604 = vmatpush1.msra.mxu0 0.0
        %605 = vmatprep.subr.mxu0 0.0
        %606 = vmatpush1.msra.mxu0 0.0
        %607 = vmatprep.subr.mxu0 0.0
        %608 = vmatpush1.msra.mxu0 0.0
        %609 = vmatprep.subr.mxu0 0.0
        %610 = vmatpush1.msra.mxu0 0.0
        %611 = vmatprep.subr.mxu0 0.0
        %612 = vmatpush1.msra.mxu0 0.0
        %613 = vmatprep.subr.mxu0 0.0
        %614 = vmatpush1.msra.mxu0 0.0
        %615 = vmatprep.subr.mxu0 0.0
        %616 = vmatpush1.msra.mxu0 0.0
        %617 = vmatprep.subr.mxu0 0.0
        %618 = vmatpush1.msra.mxu0 0.0
        %619 = vmatprep.subr.mxu0 0.0
        %620 = vmatpush1.msra.mxu0 0.0
        %621 = vmatprep.subr.mxu0 0.0
        %622 = vmatpush1.msra.mxu0 0.0
        %623 = vmatprep.subr.mxu0 0.0
        %624 = vmatpush1.msra.mxu0 0.0
        %625 = vmatprep.subr.mxu0 0.0
        %626 = vmatpush1.msra.mxu0 0.0
        %627 = vmatprep.subr.mxu0 0.0
        %628 = vmatpush1.msra.mxu0 0.0
        %629 = vmatprep.subr.mxu0 0.0
        %630 = vmatpush1.msra.mxu0 0.0
        %631 = vmatprep.subr.mxu0 0.0
        %632 = vmatpush1.msra.mxu0 0.0
        %633 = vmatprep.subr.mxu0 0.0
        %634 = vmatpush1.msra.mxu0 0.0
        %635 = vmatprep.subr.mxu0 0.0
        %636 = vmatpush1.msra.mxu0 0.0
        %637 = vmatprep.subr.mxu0 0.0
        %638 = vmatpush1.msra.mxu0 0.0
        %639 = vmatprep.subr.mxu0 0.0
        %640 = vmatpush1.msra.mxu0 0.0
        %641 = vmatprep.subr.mxu0 0.0
        %642 = vmatpush1.msra.mxu0 0.0
        %643 = vmatprep.subr.mxu0 0.0
        %644 = vmatpush1.msra.mxu0 0.0
        %645 = vmatprep.subr.mxu0 0.0
        %646 = vmatpush1.msra.mxu0 0.0
        %647 = vmatprep.mubr.f32.mxu0 0.0
        %v648 = vand.u32 %v206, 4294901760
        %649 = vmatmul.mubr.f32.gmra.mrb[0].mxu0 %v648
        %v650 = vpop.f32.mrb[0].mxu0
        %v651 = vadd.f32 %v579, %v650
        %v652 = vpop.f32.mrb[0].mxu0
        %653 = vdwg.mxu0
        %s654 = scalar_lea.vmem %s177, 8 [#allocation2]
        %v655 = vld [vmem:[%s654] sm:$0xff]
        %s656 = scalar_lea.vmem [#allocation5], 8
        %v657 = vld [vmem:[%s656] sm:$0xff]
        %v659 = vsel %vm204, %v655, 0
        %661 = vmatprep.subr.mxu0 0.0
        %v662 = vand.u32 %v657, 4294901760
        %663 = vmatpush1.msra.mxu0 %v662
        %664 = vmatprep.subr.mxu0 0.0
        %665 = vmatpush1.msra.mxu0 0.0
        %666 = vmatprep.subr.mxu0 0.0
        %667 = vmatpush1.msra.mxu0 0.0
        %668 = vmatprep.subr.mxu0 0.0
        %669 = vmatpush1.msra.mxu0 0.0
        %670 = vmatprep.subr.mxu0 0.0
        %671 = vmatpush1.msra.mxu0 0.0
        %672 = vmatprep.subr.mxu0 0.0
        %673 = vmatpush1.msra.mxu0 0.0
        %674 = vmatprep.subr.mxu0 0.0
        %675 = vmatpush1.msra.mxu0 0.0
        %676 = vmatprep.subr.mxu0 0.0
        %677 = vmatpush1.msra.mxu0 0.0
        %678 = vmatprep.subr.mxu0 0.0
        %679 = vmatpush1.msra.mxu0 0.0
        %680 = vmatprep.subr.mxu0 0.0
        %681 = vmatpush1.msra.mxu0 0.0
        %682 = vmatprep.subr.mxu0 0.0
        %683 = vmatpush1.msra.mxu0 0.0
        %684 = vmatprep.subr.mxu0 0.0
        %685 = vmatpush1.msra.mxu0 0.0
        %686 = vmatprep.subr.mxu0 0.0
        %687 = vmatpush1.msra.mxu0 0.0
        %688 = vmatprep.subr.mxu0 0.0
        %689 = vmatpush1.msra.mxu0 0.0
        %690 = vmatprep.subr.mxu0 0.0
        %691 = vmatpush1.msra.mxu0 0.0
        %692 = vmatprep.subr.mxu0 0.0
        %693 = vmatpush1.msra.mxu0 0.0
        %694 = vmatprep.subr.mxu0 0.0
        %695 = vmatpush1.msra.mxu0 0.0
        %696 = vmatprep.subr.mxu0 0.0
        %697 = vmatpush1.msra.mxu0 0.0
        %698 = vmatprep.subr.mxu0 0.0
        %699 = vmatpush1.msra.mxu0 0.0
        %700 = vmatprep.subr.mxu0 0.0
        %701 = vmatpush1.msra.mxu0 0.0
        %702 = vmatprep.subr.mxu0 0.0
        %703 = vmatpush1.msra.mxu0 0.0
        %704 = vmatprep.subr.mxu0 0.0
        %705 = vmatpush1.msra.mxu0 0.0
        %706 = vmatprep.subr.mxu0 0.0
        %707 = vmatpush1.msra.mxu0 0.0
        %708 = vmatprep.subr.mxu0 0.0
        %709 = vmatpush1.msra.mxu0 0.0
        %710 = vmatprep.subr.mxu0 0.0
        %711 = vmatpush1.msra.mxu0 0.0
        %712 = vmatprep.subr.mxu0 0.0
        %713 = vmatpush1.msra.mxu0 0.0
        %714 = vmatprep.subr.mxu0 0.0
        %715 = vmatpush1.msra.mxu0 0.0
        %716 = vmatprep.subr.mxu0 0.0
        %717 = vmatpush1.msra.mxu0 0.0
        %718 = vmatprep.subr.mxu0 0.0
        %719 = vmatpush1.msra.mxu0 0.0
        %720 = vmatprep.subr.mxu0 0.0
        %721 = vmatpush1.msra.mxu0 0.0
        %722 = vmatprep.subr.mxu0 0.0
        %723 = vmatpush1.msra.mxu0 0.0
        %724 = vmatprep.subr.mxu0 0.0
        %725 = vmatpush1.msra.mxu0 0.0
        %726 = vmatprep.mubr.f32.mxu0 0.0
        %v727 = vand.u32 %v659, 4294901760
        %v728 = vsub.f32 %v659, %v727
        %v729 = vand.u32 %v728, 4294901760
        %v730 = vsub.f32 %v728, %v729
        %v731 = vand.u32 %v730, 4294901760
        %732 = vmatmul.mubr.f32.gmra.mrb[0].mxu0 %v731
        %v733 = vpop.f32.mrb[0].mxu0
        %v734 = vadd.f32 0.0, %v733
        %v735 = vpop.f32.mrb[0].mxu0
        %736 = vdwg.mxu0
        %737 = vmatprep.subr.mxu0 0.0
        %v738 = vand.u32 %v657, 4294901760
        %v739 = vsub.f32 %v657, %v738
        %v740 = vand.u32 %v739, 4294901760
        %v741 = vsub.f32 %v739, %v740
        %v742 = vand.u32 %v741, 4294901760
        %743 = vmatpush1.msra.mxu0 %v742
        %744 = vmatprep.subr.mxu0 0.0
        %745 = vmatpush1.msra.mxu0 0.0
        %746 = vmatprep.subr.mxu0 0.0
        %747 = vmatpush1.msra.mxu0 0.0
        %748 = vmatprep.subr.mxu0 0.0
        %749 = vmatpush1.msra.mxu0 0.0
        %750 = vmatprep.subr.mxu0 0.0
        %751 = vmatpush1.msra.mxu0 0.0
        %752 = vmatprep.subr.mxu0 0.0
        %753 = vmatpush1.msra.mxu0 0.0
        %754 = vmatprep.subr.mxu0 0.0
        %755 = vmatpush1.msra.mxu0 0.0
        %756 = vmatprep.subr.mxu0 0.0
        %757 = vmatpush1.msra.mxu0 0.0
        %758 = vmatprep.subr.mxu0 0.0
        %759 = vmatpush1.msra.mxu0 0.0
        %760 = vmatprep.subr.mxu0 0.0
        %761 = vmatpush1.msra.mxu0 0.0
        %762 = vmatprep.subr.mxu0 0.0
        %763 = vmatpush1.msra.mxu0 0.0
        %764 = vmatprep.subr.mxu0 0.0
        %765 = vmatpush1.msra.mxu0 0.0
        %766 = vmatprep.subr.mxu0 0.0
        %767 = vmatpush1.msra.mxu0 0.0
        %768 = vmatprep.subr.mxu0 0.0
        %769 = vmatpush1.msra.mxu0 0.0
        %770 = vmatprep.subr.mxu0 0.0
        %771 = vmatpush1.msra.mxu0 0.0
        %772 = vmatprep.subr.mxu0 0.0
        %773 = vmatpush1.msra.mxu0 0.0
        %774 = vmatprep.subr.mxu0 0.0
        %775 = vmatpush1.msra.mxu0 0.0
        %776 = vmatprep.subr.mxu0 0.0
        %777 = vmatpush1.msra.mxu0 0.0
        %778 = vmatprep.subr.mxu0 0.0
        %779 = vmatpush1.msra.mxu0 0.0
        %780 = vmatprep.subr.mxu0 0.0
        %781 = vmatpush1.msra.mxu0 0.0
        %782 = vmatprep.subr.mxu0 0.0
        %783 = vmatpush1.msra.mxu0 0.0
        %784 = vmatprep.subr.mxu0 0.0
        %785 = vmatpush1.msra.mxu0 0.0
        %786 = vmatprep.subr.mxu0 0.0
        %787 = vmatpush1.msra.mxu0 0.0
        %788 = vmatprep.subr.mxu0 0.0
        %789 = vmatpush1.msra.mxu0 0.0
        %790 = vmatprep.subr.mxu0 0.0
        %791 = vmatpush1.msra.mxu0 0.0
        %792 = vmatprep.subr.mxu0 0.0
        %793 = vmatpush1.msra.mxu0 0.0
        %794 = vmatprep.subr.mxu0 0.0
        %795 = vmatpush1.msra.mxu0 0.0
        %796 = vmatprep.subr.mxu0 0.0
        %797 = vmatpush1.msra.mxu0 0.0
        %798 = vmatprep.subr.mxu0 0.0
        %799 = vmatpush1.msra.mxu0 0.0
        %800 = vmatprep.subr.mxu0 0.0
        %801 = vmatpush1.msra.mxu0 0.0
        %802 = vmatprep.subr.mxu0 0.0
        %803 = vmatpush1.msra.mxu0 0.0
        %804 = vmatprep.subr.mxu0 0.0
        %805 = vmatpush1.msra.mxu0 0.0
        %806 = vmatprep.mubr.f32.mxu0 0.0
        %v807 = vand.u32 %v659, 4294901760
        %808 = vmatmul.mubr.f32.gmra.mrb[0].mxu0 %v807
        %v809 = vpop.f32.mrb[0].mxu0
        %v810 = vadd.f32 %v734, %v809
        %v811 = vpop.f32.mrb[0].mxu0
        %812 = vdwg.mxu0
        %813 = vmatprep.subr.mxu0 0.0
        %v814 = vand.u32 %v657, 4294901760
        %v815 = vsub.f32 %v657, %v814
        %816 = vmatpush1.msra.mxu0 %v815
        %817 = vmatprep.subr.mxu0 0.0
        %818 = vmatpush1.msra.mxu0 0.0
        %819 = vmatprep.subr.mxu0 0.0
        %820 = vmatpush1.msra.mxu0 0.0
        %821 = vmatprep.subr.mxu0 0.0
        %822 = vmatpush1.msra.mxu0 0.0
        %823 = vmatprep.subr.mxu0 0.0
        %824 = vmatpush1.msra.mxu0 0.0
        %825 = vmatprep.subr.mxu0 0.0
        %826 = vmatpush1.msra.mxu0 0.0
        %827 = vmatprep.subr.mxu0 0.0
        %828 = vmatpush1.msra.mxu0 0.0
        %829 = vmatprep.subr.mxu0 0.0
        %830 = vmatpush1.msra.mxu0 0.0
        %831 = vmatprep.subr.mxu0 0.0
        %832 = vmatpush1.msra.mxu0 0.0
        %833 = vmatprep.subr.mxu0 0.0
        %834 = vmatpush1.msra.mxu0 0.0
        %835 = vmatprep.subr.mxu0 0.0
        %836 = vmatpush1.msra.mxu0 0.0
        %837 = vmatprep.subr.mxu0 0.0
        %838 = vmatpush1.msra.mxu0 0.0
        %839 = vmatprep.subr.mxu0 0.0
        %840 = vmatpush1.msra.mxu0 0.0
        %841 = vmatprep.subr.mxu0 0.0
        %842 = vmatpush1.msra.mxu0 0.0
        %843 = vmatprep.subr.mxu0 0.0
        %844 = vmatpush1.msra.mxu0 0.0
        %845 = vmatprep.subr.mxu0 0.0
        %846 = vmatpush1.msra.mxu0 0.0
        %847 = vmatprep.subr.mxu0 0.0
        %848 = vmatpush1.msra.mxu0 0.0
        %849 = vmatprep.subr.mxu0 0.0
        %850 = vmatpush1.msra.mxu0 0.0
        %851 = vmatprep.subr.mxu0 0.0
        %852 = vmatpush1.msra.mxu0 0.0
        %853 = vmatprep.subr.mxu0 0.0
        %854 = vmatpush1.msra.mxu0 0.0
        %855 = vmatprep.subr.mxu0 0.0
        %856 = vmatpush1.msra.mxu0 0.0
        %857 = vmatprep.subr.mxu0 0.0
        %858 = vmatpush1.msra.mxu0 0.0
        %859 = vmatprep.subr.mxu0 0.0
        %860 = vmatpush1.msra.mxu0 0.0
        %861 = vmatprep.subr.mxu0 0.0
        %862 = vmatpush1.msra.mxu0 0.0
        %863 = vmatprep.subr.mxu0 0.0
        %864 = vmatpush1.msra.mxu0 0.0
        %865 = vmatprep.subr.mxu0 0.0
        %866 = vmatpush1.msra.mxu0 0.0
        %867 = vmatprep.subr.mxu0 0.0
        %868 = vmatpush1.msra.mxu0 0.0
        %869 = vmatprep.subr.mxu0 0.0
        %870 = vmatpush1.msra.mxu0 0.0
        %871 = vmatprep.subr.mxu0 0.0
        %872 = vmatpush1.msra.mxu0 0.0
        %873 = vmatprep.subr.mxu0 0.0
        %874 = vmatpush1.msra.mxu0 0.0
        %875 = vmatprep.subr.mxu0 0.0
        %876 = vmatpush1.msra.mxu0 0.0
        %877 = vmatprep.subr.mxu0 0.0
        %878 = vmatpush1.msra.mxu0 0.0
        %879 = vmatprep.mubr.f32.mxu0 0.0
        %v880 = vand.u32 %v659, 4294901760
        %v881 = vsub.f32 %v659, %v880
        %882 = vmatmul.mubr.f32.gmra.mrb[0].mxu0 %v881
        %v883 = vpop.f32.mrb[0].mxu0
        %v884 = vadd.f32 %v810, %v883
        %v885 = vpop.f32.mrb[0].mxu0
        %886 = vdwg.mxu0
        %887 = vmatprep.subr.mxu0 0.0
        %v888 = vand.u32 %v657, 4294901760
        %889 = vmatpush1.msra.mxu0 %v888
        %890 = vmatprep.subr.mxu0 0.0
        %891 = vmatpush1.msra.mxu0 0.0
        %892 = vmatprep.subr.mxu0 0.0
        %893 = vmatpush1.msra.mxu0 0.0
        %894 = vmatprep.subr.mxu0 0.0
        %895 = vmatpush1.msra.mxu0 0.0
        %896 = vmatprep.subr.mxu0 0.0
        %897 = vmatpush1.msra.mxu0 0.0
        %898 = vmatprep.subr.mxu0 0.0
        %899 = vmatpush1.msra.mxu0 0.0
        %900 = vmatprep.subr.mxu0 0.0
        %901 = vmatpush1.msra.mxu0 0.0
        %902 = vmatprep.subr.mxu0 0.0
        %903 = vmatpush1.msra.mxu0 0.0
        %904 = vmatprep.subr.mxu0 0.0
        %905 = vmatpush1.msra.mxu0 0.0
        %906 = vmatprep.subr.mxu0 0.0
        %907 = vmatpush1.msra.mxu0 0.0
        %908 = vmatprep.subr.mxu0 0.0
        %909 = vmatpush1.msra.mxu0 0.0
        %910 = vmatprep.subr.mxu0 0.0
        %911 = vmatpush1.msra.mxu0 0.0
        %912 = vmatprep.subr.mxu0 0.0
        %913 = vmatpush1.msra.mxu0 0.0
        %914 = vmatprep.subr.mxu0 0.0
        %915 = vmatpush1.msra.mxu0 0.0
        %916 = vmatprep.subr.mxu0 0.0
        %917 = vmatpush1.msra.mxu0 0.0
        %918 = vmatprep.subr.mxu0 0.0
        %919 = vmatpush1.msra.mxu0 0.0
        %920 = vmatprep.subr.mxu0 0.0
        %921 = vmatpush1.msra.mxu0 0.0
        %922 = vmatprep.subr.mxu0 0.0
        %923 = vmatpush1.msra.mxu0 0.0
        %924 = vmatprep.subr.mxu0 0.0
        %925 = vmatpush1.msra.mxu0 0.0
        %926 = vmatprep.subr.mxu0 0.0
        %927 = vmatpush1.msra.mxu0 0.0
        %928 = vmatprep.subr.mxu0 0.0
        %929 = vmatpush1.msra.mxu0 0.0
        %930 = vmatprep.subr.mxu0 0.0
        %931 = vmatpush1.msra.mxu0 0.0
        %932 = vmatprep.subr.mxu0 0.0
        %933 = vmatpush1.msra.mxu0 0.0
        %934 = vmatprep.subr.mxu0 0.0
        %935 = vmatpush1.msra.mxu0 0.0
        %936 = vmatprep.subr.mxu0 0.0
        %937 = vmatpush1.msra.mxu0 0.0
        %938 = vmatprep.subr.mxu0 0.0
        %939 = vmatpush1.msra.mxu0 0.0
        %940 = vmatprep.subr.mxu0 0.0
        %941 = vmatpush1.msra.mxu0 0.0
        %942 = vmatprep.subr.mxu0 0.0
        %943 = vmatpush1.msra.mxu0 0.0
        %944 = vmatprep.subr.mxu0 0.0
        %945 = vmatpush1.msra.mxu0 0.0
        %946 = vmatprep.subr.mxu0 0.0
        %947 = vmatpush1.msra.mxu0 0.0
        %948 = vmatprep.subr.mxu0 0.0
        %949 = vmatpush1.msra.mxu0 0.0
        %950 = vmatprep.subr.mxu0 0.0
        %951 = vmatpush1.msra.mxu0 0.0
        %952 = vmatprep.mubr.f32.mxu0 0.0
        %v953 = vand.u32 %v659, 4294901760
        %v954 = vsub.f32 %v659, %v953
        %v955 = vand.u32 %v954, 4294901760
        %956 = vmatmul.mubr.f32.gmra.mrb[0].mxu0 %v955
        %v957 = vpop.f32.mrb[0].mxu0
        %v958 = vadd.f32 %v884, %v957
        %v959 = vpop.f32.mrb[0].mxu0
        %960 = vdwg.mxu0
        %961 = vmatprep.subr.mxu0 0.0
        %v962 = vand.u32 %v657, 4294901760
        %v963 = vsub.f32 %v657, %v962
        %v964 = vand.u32 %v963, 4294901760
        %965 = vmatpush1.msra.mxu0 %v964
        %966 = vmatprep.subr.mxu0 0.0
        %967 = vmatpush1.msra.mxu0 0.0
        %968 = vmatprep.subr.mxu0 0.0
        %969 = vmatpush1.msra.mxu0 0.0
        %970 = vmatprep.subr.mxu0 0.0
        %971 = vmatpush1.msra.mxu0 0.0
        %972 = vmatprep.subr.mxu0 0.0
        %973 = vmatpush1.msra.mxu0 0.0
        %974 = vmatprep.subr.mxu0 0.0
        %975 = vmatpush1.msra.mxu0 0.0
        %976 = vmatprep.subr.mxu0 0.0
        %977 = vmatpush1.msra.mxu0 0.0
        %978 = vmatprep.subr.mxu0 0.0
        %979 = vmatpush1.msra.mxu0 0.0
        %980 = vmatprep.subr.mxu0 0.0
        %981 = vmatpush1.msra.mxu0 0.0
        %982 = vmatprep.subr.mxu0 0.0
        %983 = vmatpush1.msra.mxu0 0.0
        %984 = vmatprep.subr.mxu0 0.0
        %985 = vmatpush1.msra.mxu0 0.0
        %986 = vmatprep.subr.mxu0 0.0
        %987 = vmatpush1.msra.mxu0 0.0
        %988 = vmatprep.subr.mxu0 0.0
        %989 = vmatpush1.msra.mxu0 0.0
        %990 = vmatprep.subr.mxu0 0.0
        %991 = vmatpush1.msra.mxu0 0.0
        %992 = vmatprep.subr.mxu0 0.0
        %993 = vmatpush1.msra.mxu0 0.0
        %994 = vmatprep.subr.mxu0 0.0
        %995 = vmatpush1.msra.mxu0 0.0
        %996 = vmatprep.subr.mxu0 0.0
        %997 = vmatpush1.msra.mxu0 0.0
        %998 = vmatprep.subr.mxu0 0.0
        %999 = vmatpush1.msra.mxu0 0.0
        %1000 = vmatprep.subr.mxu0 0.0
        %1001 = vmatpush1.msra.mxu0 0.0
        %1002 = vmatprep.subr.mxu0 0.0
        %1003 = vmatpush1.msra.mxu0 0.0
        %1004 = vmatprep.subr.mxu0 0.0
        %1005 = vmatpush1.msra.mxu0 0.0
        %1006 = vmatprep.subr.mxu0 0.0
        %1007 = vmatpush1.msra.mxu0 0.0
        %1008 = vmatprep.subr.mxu0 0.0
        %1009 = vmatpush1.msra.mxu0 0.0
        %1010 = vmatprep.subr.mxu0 0.0
        %1011 = vmatpush1.msra.mxu0 0.0
        %1012 = vmatprep.subr.mxu0 0.0
        %1013 = vmatpush1.msra.mxu0 0.0
        %1014 = vmatprep.subr.mxu0 0.0
        %1015 = vmatpush1.msra.mxu0 0.0
        %1016 = vmatprep.subr.mxu0 0.0
        %1017 = vmatpush1.msra.mxu0 0.0
        %1018 = vmatprep.subr.mxu0 0.0
        %1019 = vmatpush1.msra.mxu0 0.0
        %1020 = vmatprep.subr.mxu0 0.0
        %1021 = vmatpush1.msra.mxu0 0.0
        %1022 = vmatprep.subr.mxu0 0.0
        %1023 = vmatpush1.msra.mxu0 0.0
        %1024 = vmatprep.subr.mxu0 0.0
        %1025 = vmatpush1.msra.mxu0 0.0
        %1026 = vmatprep.subr.mxu0 0.0
        %1027 = vmatpush1.msra.mxu0 0.0
        %1028 = vmatprep.mubr.f32.mxu0 0.0
        %v1029 = vand.u32 %v659, 4294901760
        %1030 = vmatmul.mubr.f32.gmra.mrb[0].mxu0 %v1029
        %v1031 = vpop.f32.mrb[0].mxu0
        %v1032 = vadd.f32 %v958, %v1031
        %v1033 = vpop.f32.mrb[0].mxu0
        %1034 = vdwg.mxu0
        %1035 = vmatprep.subr.mxu0 0.0
        %v1036 = vand.u32 %v657, 4294901760
        %1037 = vmatpush1.msra.mxu0 %v1036
        %1038 = vmatprep.subr.mxu0 0.0
        %1039 = vmatpush1.msra.mxu0 0.0
        %1040 = vmatprep.subr.mxu0 0.0
        %1041 = vmatpush1.msra.mxu0 0.0
        %1042 = vmatprep.subr.mxu0 0.0
        %1043 = vmatpush1.msra.mxu0 0.0
        %1044 = vmatprep.subr.mxu0 0.0
        %1045 = vmatpush1.msra.mxu0 0.0
        %1046 = vmatprep.subr.mxu0 0.0
        %1047 = vmatpush1.msra.mxu0 0.0
        %1048 = vmatprep.subr.mxu0 0.0
        %1049 = vmatpush1.msra.mxu0 0.0
        %1050 = vmatprep.subr.mxu0 0.0
        %1051 = vmatpush1.msra.mxu0 0.0
        %1052 = vmatprep.subr.mxu0 0.0
        %1053 = vmatpush1.msra.mxu0 0.0
        %1054 = vmatprep.subr.mxu0 0.0
        %1055 = vmatpush1.msra.mxu0 0.0
        %1056 = vmatprep.subr.mxu0 0.0
        %1057 = vmatpush1.msra.mxu0 0.0
        %1058 = vmatprep.subr.mxu0 0.0
        %1059 = vmatpush1.msra.mxu0 0.0
        %1060 = vmatprep.subr.mxu0 0.0
        %1061 = vmatpush1.msra.mxu0 0.0
        %1062 = vmatprep.subr.mxu0 0.0
        %1063 = vmatpush1.msra.mxu0 0.0
        %1064 = vmatprep.subr.mxu0 0.0
        %1065 = vmatpush1.msra.mxu0 0.0
        %1066 = vmatprep.subr.mxu0 0.0
        %1067 = vmatpush1.msra.mxu0 0.0
        %1068 = vmatprep.subr.mxu0 0.0
        %1069 = vmatpush1.msra.mxu0 0.0
        %1070 = vmatprep.subr.mxu0 0.0
        %1071 = vmatpush1.msra.mxu0 0.0
        %1072 = vmatprep.subr.mxu0 0.0
        %1073 = vmatpush1.msra.mxu0 0.0
        %1074 = vmatprep.subr.mxu0 0.0
        %1075 = vmatpush1.msra.mxu0 0.0
        %1076 = vmatprep.subr.mxu0 0.0
        %1077 = vmatpush1.msra.mxu0 0.0
        %1078 = vmatprep.subr.mxu0 0.0
        %1079 = vmatpush1.msra.mxu0 0.0
        %1080 = vmatprep.subr.mxu0 0.0
        %1081 = vmatpush1.msra.mxu0 0.0
        %1082 = vmatprep.subr.mxu0 0.0
        %1083 = vmatpush1.msra.mxu0 0.0
        %1084 = vmatprep.subr.mxu0 0.0
        %1085 = vmatpush1.msra.mxu0 0.0
        %1086 = vmatprep.subr.mxu0 0.0
        %1087 = vmatpush1.msra.mxu0 0.0
        %1088 = vmatprep.subr.mxu0 0.0
        %1089 = vmatpush1.msra.mxu0 0.0
        %1090 = vmatprep.subr.mxu0 0.0
        %1091 = vmatpush1.msra.mxu0 0.0
        %1092 = vmatprep.subr.mxu0 0.0
        %1093 = vmatpush1.msra.mxu0 0.0
        %1094 = vmatprep.subr.mxu0 0.0
        %1095 = vmatpush1.msra.mxu0 0.0
        %1096 = vmatprep.subr.mxu0 0.0
        %1097 = vmatpush1.msra.mxu0 0.0
        %1098 = vmatprep.subr.mxu0 0.0
        %1099 = vmatpush1.msra.mxu0 0.0
        %1100 = vmatprep.mubr.f32.mxu0 0.0
        %v1101 = vand.u32 %v659, 4294901760
        %1102 = vmatmul.mubr.f32.gmra.mrb[0].mxu0 %v1101
        %v1103 = vpop.f32.mrb[0].mxu0
        %v1104 = vadd.f32 %v1032, %v1103
        %v1105 = vpop.f32.mrb[0].mxu0
        %1106 = vdwg.mxu0
        %s1107 = scalar_lea.vmem %s177, 16 [#allocation2]
        %v1108 = vld [vmem:[%s1107] sm:$0xff]
        %s1109 = scalar_lea.vmem [#allocation5], 16
        %v1110 = vld [vmem:[%s1109] sm:$0xff]
        %v1112 = vsel %vm204, %v1108, 0
        %1114 = vmatprep.subr.mxu0 0.0
        %v1115 = vand.u32 %v1110, 4294901760
        %1116 = vmatpush1.msra.mxu0 %v1115
        %1117 = vmatprep.subr.mxu0 0.0
        %1118 = vmatpush1.msra.mxu0 0.0
        %1119 = vmatprep.subr.mxu0 0.0
        %1120 = vmatpush1.msra.mxu0 0.0
        %1121 = vmatprep.subr.mxu0 0.0
        %1122 = vmatpush1.msra.mxu0 0.0
        %1123 = vmatprep.subr.mxu0 0.0
        %1124 = vmatpush1.msra.mxu0 0.0
        %1125 = vmatprep.subr.mxu0 0.0
        %1126 = vmatpush1.msra.mxu0 0.0
        %1127 = vmatprep.subr.mxu0 0.0
        %1128 = vmatpush1.msra.mxu0 0.0
        %1129 = vmatprep.subr.mxu0 0.0
        %1130 = vmatpush1.msra.mxu0 0.0
        %1131 = vmatprep.subr.mxu0 0.0
        %1132 = vmatpush1.msra.mxu0 0.0
        %1133 = vmatprep.subr.mxu0 0.0
        %1134 = vmatpush1.msra.mxu0 0.0
        %1135 = vmatprep.subr.mxu0 0.0
        %1136 = vmatpush1.msra.mxu0 0.0
        %1137 = vmatprep.subr.mxu0 0.0
        %1138 = vmatpush1.msra.mxu0 0.0
        %1139 = vmatprep.subr.mxu0 0.0
        %1140 = vmatpush1.msra.mxu0 0.0
        %1141 = vmatprep.subr.mxu0 0.0
        %1142 = vmatpush1.msra.mxu0 0.0
        %1143 = vmatprep.subr.mxu0 0.0
        %1144 = vmatpush1.msra.mxu0 0.0
        %1145 = vmatprep.subr.mxu0 0.0
        %1146 = vmatpush1.msra.mxu0 0.0
        %1147 = vmatprep.subr.mxu0 0.0
        %1148 = vmatpush1.msra.mxu0 0.0
        %1149 = vmatprep.subr.mxu0 0.0
        %1150 = vmatpush1.msra.mxu0 0.0
        %1151 = vmatprep.subr.mxu0 0.0
        %1152 = vmatpush1.msra.mxu0 0.0
        %1153 = vmatprep.subr.mxu0 0.0
        %1154 = vmatpush1.msra.mxu0 0.0
        %1155 = vmatprep.subr.mxu0 0.0
        %1156 = vmatpush1.msra.mxu0 0.0
        %1157 = vmatprep.subr.mxu0 0.0
        %1158 = vmatpush1.msra.mxu0 0.0
        %1159 = vmatprep.subr.mxu0 0.0
        %1160 = vmatpush1.msra.mxu0 0.0
        %1161 = vmatprep.subr.mxu0 0.0
        %1162 = vmatpush1.msra.mxu0 0.0
        %1163 = vmatprep.subr.mxu0 0.0
        %1164 = vmatpush1.msra.mxu0 0.0
        %1165 = vmatprep.subr.mxu0 0.0
        %1166 = vmatpush1.msra.mxu0 0.0
        %1167 = vmatprep.subr.mxu0 0.0
        %1168 = vmatpush1.msra.mxu0 0.0
        %1169 = vmatprep.subr.mxu0 0.0
        %1170 = vmatpush1.msra.mxu0 0.0
        %1171 = vmatprep.subr.mxu0 0.0
        %1172 = vmatpush1.msra.mxu0 0.0
        %1173 = vmatprep.subr.mxu0 0.0
        %1174 = vmatpush1.msra.mxu0 0.0
        %1175 = vmatprep.subr.mxu0 0.0
        %1176 = vmatpush1.msra.mxu0 0.0
        %1177 = vmatprep.subr.mxu0 0.0
        %1178 = vmatpush1.msra.mxu0 0.0
        %1179 = vmatprep.mubr.f32.mxu0 0.0
        %v1180 = vand.u32 %v1112, 4294901760
        %v1181 = vsub.f32 %v1112, %v1180
        %v1182 = vand.u32 %v1181, 4294901760
        %v1183 = vsub.f32 %v1181, %v1182
        %v1184 = vand.u32 %v1183, 4294901760
        %1185 = vmatmul.mubr.f32.gmra.mrb[0].mxu0 %v1184
        %v1186 = vpop.f32.mrb[0].mxu0
        %v1187 = vadd.f32 0.0, %v1186
        %v1188 = vpop.f32.mrb[0].mxu0
        %1189 = vdwg.mxu0
        %1190 = vmatprep.subr.mxu0 0.0
        %v1191 = vand.u32 %v1110, 4294901760
        %v1192 = vsub.f32 %v1110, %v1191
        %v1193 = vand.u32 %v1192, 4294901760
        %v1194 = vsub.f32 %v1192, %v1193
        %v1195 = vand.u32 %v1194, 4294901760
        %1196 = vmatpush1.msra.mxu0 %v1195
        %1197 = vmatprep.subr.mxu0 0.0
        %1198 = vmatpush1.msra.mxu0 0.0
        %1199 = vmatprep.subr.mxu0 0.0
        %1200 = vmatpush1.msra.mxu0 0.0
        %1201 = vmatprep.subr.mxu0 0.0
        %1202 = vmatpush1.msra.mxu0 0.0
        %1203 = vmatprep.subr.mxu0 0.0
        %1204 = vmatpush1.msra.mxu0 0.0
        %1205 = vmatprep.subr.mxu0 0.0
        %1206 = vmatpush1.msra.mxu0 0.0
        %1207 = vmatprep.subr.mxu0 0.0
        %1208 = vmatpush1.msra.mxu0 0.0
        %1209 = vmatprep.subr.mxu0 0.0
        %1210 = vmatpush1.msra.mxu0 0.0
        %1211 = vmatprep.subr.mxu0 0.0
        %1212 = vmatpush1.msra.mxu0 0.0
        %1213 = vmatprep.subr.mxu0 0.0
        %1214 = vmatpush1.msra.mxu0 0.0
        %1215 = vmatprep.subr.mxu0 0.0
        %1216 = vmatpush1.msra.mxu0 0.0
        %1217 = vmatprep.subr.mxu0 0.0
        %1218 = vmatpush1.msra.mxu0 0.0
        %1219 = vmatprep.subr.mxu0 0.0
        %1220 = vmatpush1.msra.mxu0 0.0
        %1221 = vmatprep.subr.mxu0 0.0
        %1222 = vmatpush1.msra.mxu0 0.0
        %1223 = vmatprep.subr.mxu0 0.0
        %1224 = vmatpush1.msra.mxu0 0.0
        %1225 = vmatprep.subr.mxu0 0.0
        %1226 = vmatpush1.msra.mxu0 0.0
        %1227 = vmatprep.subr.mxu0 0.0
        %1228 = vmatpush1.msra.mxu0 0.0
        %1229 = vmatprep.subr.mxu0 0.0
        %1230 = vmatpush1.msra.mxu0 0.0
        %1231 = vmatprep.subr.mxu0 0.0
        %1232 = vmatpush1.msra.mxu0 0.0
        %1233 = vmatprep.subr.mxu0 0.0
        %1234 = vmatpush1.msra.mxu0 0.0
        %1235 = vmatprep.subr.mxu0 0.0
        %1236 = vmatpush1.msra.mxu0 0.0
        %1237 = vmatprep.subr.mxu0 0.0
        %1238 = vmatpush1.msra.mxu0 0.0
        %1239 = vmatprep.subr.mxu0 0.0
        %1240 = vmatpush1.msra.mxu0 0.0
        %1241 = vmatprep.subr.mxu0 0.0
        %1242 = vmatpush1.msra.mxu0 0.0
        %1243 = vmatprep.subr.mxu0 0.0
        %1244 = vmatpush1.msra.mxu0 0.0
        %1245 = vmatprep.subr.mxu0 0.0
        %1246 = vmatpush1.msra.mxu0 0.0
        %1247 = vmatprep.subr.mxu0 0.0
        %1248 = vmatpush1.msra.mxu0 0.0
        %1249 = vmatprep.subr.mxu0 0.0
        %1250 = vmatpush1.msra.mxu0 0.0
        %1251 = vmatprep.subr.mxu0 0.0
        %1252 = vmatpush1.msra.mxu0 0.0
        %1253 = vmatprep.subr.mxu0 0.0
        %1254 = vmatpush1.msra.mxu0 0.0
        %1255 = vmatprep.subr.mxu0 0.0
        %1256 = vmatpush1.msra.mxu0 0.0
        %1257 = vmatprep.subr.mxu0 0.0
        %1258 = vmatpush1.msra.mxu0 0.0
        %1259 = vmatprep.mubr.f32.mxu0 0.0
        %v1260 = vand.u32 %v1112, 4294901760
        %1261 = vmatmul.mubr.f32.gmra.mrb[0].mxu0 %v1260
        %v1262 = vpop.f32.mrb[0].mxu0
        %v1263 = vadd.f32 %v1187, %v1262
        %v1264 = vpop.f32.mrb[0].mxu0
        %1265 = vdwg.mxu0
        %1266 = vmatprep.subr.mxu0 0.0
        %v1267 = vand.u32 %v1110, 4294901760
        %v1268 = vsub.f32 %v1110, %v1267
        %1269 = vmatpush1.msra.mxu0 %v1268
        %1270 = vmatprep.subr.mxu0 0.0
        %1271 = vmatpush1.msra.mxu0 0.0
        %1272 = vmatprep.subr.mxu0 0.0
        %1273 = vmatpush1.msra.mxu0 0.0
        %1274 = vmatprep.subr.mxu0 0.0
        %1275 = vmatpush1.msra.mxu0 0.0
        %1276 = vmatprep.subr.mxu0 0.0
        %1277 = vmatpush1.msra.mxu0 0.0
        %1278 = vmatprep.subr.mxu0 0.0
        %1279 = vmatpush1.msra.mxu0 0.0
        %1280 = vmatprep.subr.mxu0 0.0
        %1281 = vmatpush1.msra.mxu0 0.0
        %1282 = vmatprep.subr.mxu0 0.0
        %1283 = vmatpush1.msra.mxu0 0.0
        %1284 = vmatprep.subr.mxu0 0.0
        %1285 = vmatpush1.msra.mxu0 0.0
        %1286 = vmatprep.subr.mxu0 0.0
        %1287 = vmatpush1.msra.mxu0 0.0
        %1288 = vmatprep.subr.mxu0 0.0
        %1289 = vmatpush1.msra.mxu0 0.0
        %1290 = vmatprep.subr.mxu0 0.0
        %1291 = vmatpush1.msra.mxu0 0.0
        %1292 = vmatprep.subr.mxu0 0.0
        %1293 = vmatpush1.msra.mxu0 0.0
        %1294 = vmatprep.subr.mxu0 0.0
        %1295 = vmatpush1.msra.mxu0 0.0
        %1296 = vmatprep.subr.mxu0 0.0
        %1297 = vmatpush1.msra.mxu0 0.0
        %1298 = vmatprep.subr.mxu0 0.0
        %1299 = vmatpush1.msra.mxu0 0.0
        %1300 = vmatprep.subr.mxu0 0.0
        %1301 = vmatpush1.msra.mxu0 0.0
        %1302 = vmatprep.subr.mxu0 0.0
        %1303 = vmatpush1.msra.mxu0 0.0
        %1304 = vmatprep.subr.mxu0 0.0
        %1305 = vmatpush1.msra.mxu0 0.0
        %1306 = vmatprep.subr.mxu0 0.0
        %1307 = vmatpush1.msra.mxu0 0.0
        %1308 = vmatprep.subr.mxu0 0.0
        %1309 = vmatpush1.msra.mxu0 0.0
        %1310 = vmatprep.subr.mxu0 0.0
        %1311 = vmatpush1.msra.mxu0 0.0
        %1312 = vmatprep.subr.mxu0 0.0
        %1313 = vmatpush1.msra.mxu0 0.0
        %1314 = vmatprep.subr.mxu0 0.0
        %1315 = vmatpush1.msra.mxu0 0.0
        %1316 = vmatprep.subr.mxu0 0.0
        %1317 = vmatpush1.msra.mxu0 0.0
        %1318 = vmatprep.subr.mxu0 0.0
        %1319 = vmatpush1.msra.mxu0 0.0
        %1320 = vmatprep.subr.mxu0 0.0
        %1321 = vmatpush1.msra.mxu0 0.0
        %1322 = vmatprep.subr.mxu0 0.0
        %1323 = vmatpush1.msra.mxu0 0.0
        %1324 = vmatprep.subr.mxu0 0.0
        %1325 = vmatpush1.msra.mxu0 0.0
        %1326 = vmatprep.subr.mxu0 0.0
        %1327 = vmatpush1.msra.mxu0 0.0
        %1328 = vmatprep.subr.mxu0 0.0
        %1329 = vmatpush1.msra.mxu0 0.0
        %1330 = vmatprep.subr.mxu0 0.0
        %1331 = vmatpush1.msra.mxu0 0.0
        %1332 = vmatprep.mubr.f32.mxu0 0.0
        %v1333 = vand.u32 %v1112, 4294901760
        %v1334 = vsub.f32 %v1112, %v1333
        %1335 = vmatmul.mubr.f32.gmra.mrb[0].mxu0 %v1334
        %v1336 = vpop.f32.mrb[0].mxu0
        %v1337 = vadd.f32 %v1263, %v1336
        %v1338 = vpop.f32.mrb[0].mxu0
        %1339 = vdwg.mxu0
        %1340 = vmatprep.subr.mxu0 0.0
        %v1341 = vand.u32 %v1110, 4294901760
        %1342 = vmatpush1.msra.mxu0 %v1341
        %1343 = vmatprep.subr.mxu0 0.0
        %1344 = vmatpush1.msra.mxu0 0.0
        %1345 = vmatprep.subr.mxu0 0.0
        %1346 = vmatpush1.msra.mxu0 0.0
        %1347 = vmatprep.subr.mxu0 0.0
        %1348 = vmatpush1.msra.mxu0 0.0
        %1349 = vmatprep.subr.mxu0 0.0
        %1350 = vmatpush1.msra.mxu0 0.0
        %1351 = vmatprep.subr.mxu0 0.0
        %1352 = vmatpush1.msra.mxu0 0.0
        %1353 = vmatprep.subr.mxu0 0.0
        %1354 = vmatpush1.msra.mxu0 0.0
        %1355 = vmatprep.subr.mxu0 0.0
        %1356 = vmatpush1.msra.mxu0 0.0
        %1357 = vmatprep.subr.mxu0 0.0
        %1358 = vmatpush1.msra.mxu0 0.0
        %1359 = vmatprep.subr.mxu0 0.0
        %1360 = vmatpush1.msra.mxu0 0.0
        %1361 = vmatprep.subr.mxu0 0.0
        %1362 = vmatpush1.msra.mxu0 0.0
        %1363 = vmatprep.subr.mxu0 0.0
        %1364 = vmatpush1.msra.mxu0 0.0
        %1365 = vmatprep.subr.mxu0 0.0
        %1366 = vmatpush1.msra.mxu0 0.0
        %1367 = vmatprep.subr.mxu0 0.0
        %1368 = vmatpush1.msra.mxu0 0.0
        %1369 = vmatprep.subr.mxu0 0.0
        %1370 = vmatpush1.msra.mxu0 0.0
        %1371 = vmatprep.subr.mxu0 0.0
        %1372 = vmatpush1.msra.mxu0 0.0
        %1373 = vmatprep.subr.mxu0 0.0
        %1374 = vmatpush1.msra.mxu0 0.0
        %1375 = vmatprep.subr.mxu0 0.0
        %1376 = vmatpush1.msra.mxu0 0.0
        %1377 = vmatprep.subr.mxu0 0.0
        %1378 = vmatpush1.msra.mxu0 0.0
        %1379 = vmatprep.subr.mxu0 0.0
        %1380 = vmatpush1.msra.mxu0 0.0
        %1381 = vmatprep.subr.mxu0 0.0
        %1382 = vmatpush1.msra.mxu0 0.0
        %1383 = vmatprep.subr.mxu0 0.0
        %1384 = vmatpush1.msra.mxu0 0.0
        %1385 = vmatprep.subr.mxu0 0.0
        %1386 = vmatpush1.msra.mxu0 0.0
        %1387 = vmatprep.subr.mxu0 0.0
        %1388 = vmatpush1.msra.mxu0 0.0
        %1389 = vmatprep.subr.mxu0 0.0
        %1390 = vmatpush1.msra.mxu0 0.0
        %1391 = vmatprep.subr.mxu0 0.0
        %1392 = vmatpush1.msra.mxu0 0.0
        %1393 = vmatprep.subr.mxu0 0.0
        %1394 = vmatpush1.msra.mxu0 0.0
        %1395 = vmatprep.subr.mxu0 0.0
        %1396 = vmatpush1.msra.mxu0 0.0
        %1397 = vmatprep.subr.mxu0 0.0
        %1398 = vmatpush1.msra.mxu0 0.0
        %1399 = vmatprep.subr.mxu0 0.0
        %1400 = vmatpush1.msra.mxu0 0.0
        %1401 = vmatprep.subr.mxu0 0.0
        %1402 = vmatpush1.msra.mxu0 0.0
        %1403 = vmatprep.subr.mxu0 0.0
        %1404 = vmatpush1.msra.mxu0 0.0
        %1405 = vmatprep.mubr.f32.mxu0 0.0
        %v1406 = vand.u32 %v1112, 4294901760
        %v1407 = vsub.f32 %v1112, %v1406
        %v1408 = vand.u32 %v1407, 4294901760
        %1409 = vmatmul.mubr.f32.gmra.mrb[0].mxu0 %v1408
        %v1410 = vpop.f32.mrb[0].mxu0
        %v1411 = vadd.f32 %v1337, %v1410
        %v1412 = vpop.f32.mrb[0].mxu0
        %1413 = vdwg.mxu0
        %1414 = vmatprep.subr.mxu0 0.0
        %v1415 = vand.u32 %v1110, 4294901760
        %v1416 = vsub.f32 %v1110, %v1415
        %v1417 = vand.u32 %v1416, 4294901760
        %1418 = vmatpush1.msra.mxu0 %v1417
        %1419 = vmatprep.subr.mxu0 0.0
        %1420 = vmatpush1.msra.mxu0 0.0
        %1421 = vmatprep.subr.mxu0 0.0
        %1422 = vmatpush1.msra.mxu0 0.0
        %1423 = vmatprep.subr.mxu0 0.0
        %1424 = vmatpush1.msra.mxu0 0.0
        %1425 = vmatprep.subr.mxu0 0.0
        %1426 = vmatpush1.msra.mxu0 0.0
        %1427 = vmatprep.subr.mxu0 0.0
        %1428 = vmatpush1.msra.mxu0 0.0
        %1429 = vmatprep.subr.mxu0 0.0
        %1430 = vmatpush1.msra.mxu0 0.0
        %1431 = vmatprep.subr.mxu0 0.0
        %1432 = vmatpush1.msra.mxu0 0.0
        %1433 = vmatprep.subr.mxu0 0.0
        %1434 = vmatpush1.msra.mxu0 0.0
        %1435 = vmatprep.subr.mxu0 0.0
        %1436 = vmatpush1.msra.mxu0 0.0
        %1437 = vmatprep.subr.mxu0 0.0
        %1438 = vmatpush1.msra.mxu0 0.0
        %1439 = vmatprep.subr.mxu0 0.0
        %1440 = vmatpush1.msra.mxu0 0.0
        %1441 = vmatprep.subr.mxu0 0.0
        %1442 = vmatpush1.msra.mxu0 0.0
        %1443 = vmatprep.subr.mxu0 0.0
        %1444 = vmatpush1.msra.mxu0 0.0
        %1445 = vmatprep.subr.mxu0 0.0
        %1446 = vmatpush1.msra.mxu0 0.0
        %1447 = vmatprep.subr.mxu0 0.0
        %1448 = vmatpush1.msra.mxu0 0.0
        %1449 = vmatprep.subr.mxu0 0.0
        %1450 = vmatpush1.msra.mxu0 0.0
        %1451 = vmatprep.subr.mxu0 0.0
        %1452 = vmatpush1.msra.mxu0 0.0
        %1453 = vmatprep.subr.mxu0 0.0
        %1454 = vmatpush1.msra.mxu0 0.0
        %1455 = vmatprep.subr.mxu0 0.0
        %1456 = vmatpush1.msra.mxu0 0.0
        %1457 = vmatprep.subr.mxu0 0.0
        %1458 = vmatpush1.msra.mxu0 0.0
        %1459 = vmatprep.subr.mxu0 0.0
        %1460 = vmatpush1.msra.mxu0 0.0
        %1461 = vmatprep.subr.mxu0 0.0
        %1462 = vmatpush1.msra.mxu0 0.0
        %1463 = vmatprep.subr.mxu0 0.0
        %1464 = vmatpush1.msra.mxu0 0.0
        %1465 = vmatprep.subr.mxu0 0.0
        %1466 = vmatpush1.msra.mxu0 0.0
        %1467 = vmatprep.subr.mxu0 0.0
        %1468 = vmatpush1.msra.mxu0 0.0
        %1469 = vmatprep.subr.mxu0 0.0
        %1470 = vmatpush1.msra.mxu0 0.0
        %1471 = vmatprep.subr.mxu0 0.0
        %1472 = vmatpush1.msra.mxu0 0.0
        %1473 = vmatprep.subr.mxu0 0.0
        %1474 = vmatpush1.msra.mxu0 0.0
        %1475 = vmatprep.subr.mxu0 0.0
        %1476 = vmatpush1.msra.mxu0 0.0
        %1477 = vmatprep.subr.mxu0 0.0
        %1478 = vmatpush1.msra.mxu0 0.0
        %1479 = vmatprep.subr.mxu0 0.0
        %1480 = vmatpush1.msra.mxu0 0.0
        %1481 = vmatprep.mubr.f32.mxu0 0.0
        %v1482 = vand.u32 %v1112, 4294901760
        %1483 = vmatmul.mubr.f32.gmra.mrb[0].mxu0 %v1482
        %v1484 = vpop.f32.mrb[0].mxu0
        %v1485 = vadd.f32 %v1411, %v1484
        %v1486 = vpop.f32.mrb[0].mxu0
        %1487 = vdwg.mxu0
        %1488 = vmatprep.subr.mxu0 0.0
        %v1489 = vand.u32 %v1110, 4294901760
        %1490 = vmatpush1.msra.mxu0 %v1489
        %1491 = vmatprep.subr.mxu0 0.0
        %1492 = vmatpush1.msra.mxu0 0.0
        %1493 = vmatprep.subr.mxu0 0.0
        %1494 = vmatpush1.msra.mxu0 0.0
        %1495 = vmatprep.subr.mxu0 0.0
        %1496 = vmatpush1.msra.mxu0 0.0
        %1497 = vmatprep.subr.mxu0 0.0
        %1498 = vmatpush1.msra.mxu0 0.0
        %1499 = vmatprep.subr.mxu0 0.0
        %1500 = vmatpush1.msra.mxu0 0.0
        %1501 = vmatprep.subr.mxu0 0.0
        %1502 = vmatpush1.msra.mxu0 0.0
        %1503 = vmatprep.subr.mxu0 0.0
        %1504 = vmatpush1.msra.mxu0 0.0
        %1505 = vmatprep.subr.mxu0 0.0
        %1506 = vmatpush1.msra.mxu0 0.0
        %1507 = vmatprep.subr.mxu0 0.0
        %1508 = vmatpush1.msra.mxu0 0.0
        %1509 = vmatprep.subr.mxu0 0.0
        %1510 = vmatpush1.msra.mxu0 0.0
        %1511 = vmatprep.subr.mxu0 0.0
        %1512 = vmatpush1.msra.mxu0 0.0
        %1513 = vmatprep.subr.mxu0 0.0
        %1514 = vmatpush1.msra.mxu0 0.0
        %1515 = vmatprep.subr.mxu0 0.0
        %1516 = vmatpush1.msra.mxu0 0.0
        %1517 = vmatprep.subr.mxu0 0.0
        %1518 = vmatpush1.msra.mxu0 0.0
        %1519 = vmatprep.subr.mxu0 0.0
        %1520 = vmatpush1.msra.mxu0 0.0
        %1521 = vmatprep.subr.mxu0 0.0
        %1522 = vmatpush1.msra.mxu0 0.0
        %1523 = vmatprep.subr.mxu0 0.0
        %1524 = vmatpush1.msra.mxu0 0.0
        %1525 = vmatprep.subr.mxu0 0.0
        %1526 = vmatpush1.msra.mxu0 0.0
        %1527 = vmatprep.subr.mxu0 0.0
        %1528 = vmatpush1.msra.mxu0 0.0
        %1529 = vmatprep.subr.mxu0 0.0
        %1530 = vmatpush1.msra.mxu0 0.0
        %1531 = vmatprep.subr.mxu0 0.0
        %1532 = vmatpush1.msra.mxu0 0.0
        %1533 = vmatprep.subr.mxu0 0.0
        %1534 = vmatpush1.msra.mxu0 0.0
        %1535 = vmatprep.subr.mxu0 0.0
        %1536 = vmatpush1.msra.mxu0 0.0
        %1537 = vmatprep.subr.mxu0 0.0
        %1538 = vmatpush1.msra.mxu0 0.0
        %1539 = vmatprep.subr.mxu0 0.0
        %1540 = vmatpush1.msra.mxu0 0.0
        %1541 = vmatprep.subr.mxu0 0.0
        %1542 = vmatpush1.msra.mxu0 0.0
        %1543 = vmatprep.subr.mxu0 0.0
        %1544 = vmatpush1.msra.mxu0 0.0
        %1545 = vmatprep.subr.mxu0 0.0
        %1546 = vmatpush1.msra.mxu0 0.0
        %1547 = vmatprep.subr.mxu0 0.0
        %1548 = vmatpush1.msra.mxu0 0.0
        %1549 = vmatprep.subr.mxu0 0.0
        %1550 = vmatpush1.msra.mxu0 0.0
        %1551 = vmatprep.subr.mxu0 0.0
        %1552 = vmatpush1.msra.mxu0 0.0
        %1553 = vmatprep.mubr.f32.mxu0 0.0
        %v1554 = vand.u32 %v1112, 4294901760
        %1555 = vmatmul.mubr.f32.gmra.mrb[0].mxu0 %v1554
        %v1556 = vpop.f32.mrb[0].mxu0
        %v1557 = vadd.f32 %v1485, %v1556
        %v1558 = vpop.f32.mrb[0].mxu0
        %1559 = vdwg.mxu0
        %s1560 = scalar_lea.vmem %s177, 24 [#allocation2]
        %v1561 = vld [vmem:[%s1560] sm:$0xff]
        %s1562 = scalar_lea.vmem [#allocation5], 24
        %v1563 = vld [vmem:[%s1562] sm:$0xff]
        %v1565 = vsel %vm204, %v1561, 0
        %1567 = vmatprep.subr.mxu0 0.0
        %v1568 = vand.u32 %v1563, 4294901760
        %1569 = vmatpush1.msra.mxu0 %v1568
        %1570 = vmatprep.subr.mxu0 0.0
        %1571 = vmatpush1.msra.mxu0 0.0
        %1572 = vmatprep.subr.mxu0 0.0
        %1573 = vmatpush1.msra.mxu0 0.0
        %1574 = vmatprep.subr.mxu0 0.0
        %1575 = vmatpush1.msra.mxu0 0.0
        %1576 = vmatprep.subr.mxu0 0.0
        %1577 = vmatpush1.msra.mxu0 0.0
        %1578 = vmatprep.subr.mxu0 0.0
        %1579 = vmatpush1.msra.mxu0 0.0
        %1580 = vmatprep.subr.mxu0 0.0
        %1581 = vmatpush1.msra.mxu0 0.0
        %1582 = vmatprep.subr.mxu0 0.0
        %1583 = vmatpush1.msra.mxu0 0.0
        %1584 = vmatprep.subr.mxu0 0.0
        %1585 = vmatpush1.msra.mxu0 0.0
        %1586 = vmatprep.subr.mxu0 0.0
        %1587 = vmatpush1.msra.mxu0 0.0
        %1588 = vmatprep.subr.mxu0 0.0
        %1589 = vmatpush1.msra.mxu0 0.0
        %1590 = vmatprep.subr.mxu0 0.0
        %1591 = vmatpush1.msra.mxu0 0.0
        %1592 = vmatprep.subr.mxu0 0.0
        %1593 = vmatpush1.msra.mxu0 0.0
        %1594 = vmatprep.subr.mxu0 0.0
        %1595 = vmatpush1.msra.mxu0 0.0
        %1596 = vmatprep.subr.mxu0 0.0
        %1597 = vmatpush1.msra.mxu0 0.0
        %1598 = vmatprep.subr.mxu0 0.0
        %1599 = vmatpush1.msra.mxu0 0.0
        %1600 = vmatprep.subr.mxu0 0.0
        %1601 = vmatpush1.msra.mxu0 0.0
        %1602 = vmatprep.subr.mxu0 0.0
        %1603 = vmatpush1.msra.mxu0 0.0
        %1604 = vmatprep.subr.mxu0 0.0
        %1605 = vmatpush1.msra.mxu0 0.0
        %1606 = vmatprep.subr.mxu0 0.0
        %1607 = vmatpush1.msra.mxu0 0.0
        %1608 = vmatprep.subr.mxu0 0.0
        %1609 = vmatpush1.msra.mxu0 0.0
        %1610 = vmatprep.subr.mxu0 0.0
        %1611 = vmatpush1.msra.mxu0 0.0
        %1612 = vmatprep.subr.mxu0 0.0
        %1613 = vmatpush1.msra.mxu0 0.0
        %1614 = vmatprep.subr.mxu0 0.0
        %1615 = vmatpush1.msra.mxu0 0.0
        %1616 = vmatprep.subr.mxu0 0.0
        %1617 = vmatpush1.msra.mxu0 0.0
        %1618 = vmatprep.subr.mxu0 0.0
        %1619 = vmatpush1.msra.mxu0 0.0
        %1620 = vmatprep.subr.mxu0 0.0
        %1621 = vmatpush1.msra.mxu0 0.0
        %1622 = vmatprep.subr.mxu0 0.0
        %1623 = vmatpush1.msra.mxu0 0.0
        %1624 = vmatprep.subr.mxu0 0.0
        %1625 = vmatpush1.msra.mxu0 0.0
        %1626 = vmatprep.subr.mxu0 0.0
        %1627 = vmatpush1.msra.mxu0 0.0
        %1628 = vmatprep.subr.mxu0 0.0
        %1629 = vmatpush1.msra.mxu0 0.0
        %1630 = vmatprep.subr.mxu0 0.0
        %1631 = vmatpush1.msra.mxu0 0.0
        %1632 = vmatprep.mubr.f32.mxu0 0.0
        %v1633 = vand.u32 %v1565, 4294901760
        %v1634 = vsub.f32 %v1565, %v1633
        %v1635 = vand.u32 %v1634, 4294901760
        %v1636 = vsub.f32 %v1634, %v1635
        %v1637 = vand.u32 %v1636, 4294901760
        %1638 = vmatmul.mubr.f32.gmra.mrb[0].mxu0 %v1637
        %v1639 = vpop.f32.mrb[0].mxu0
        %v1640 = vadd.f32 0.0, %v1639
        %v1641 = vpop.f32.mrb[0].mxu0
        %1642 = vdwg.mxu0
        %1643 = vmatprep.subr.mxu0 0.0
        %v1644 = vand.u32 %v1563, 4294901760
        %v1645 = vsub.f32 %v1563, %v1644
        %v1646 = vand.u32 %v1645, 4294901760
        %v1647 = vsub.f32 %v1645, %v1646
        %v1648 = vand.u32 %v1647, 4294901760
        %1649 = vmatpush1.msra.mxu0 %v1648
        %1650 = vmatprep.subr.mxu0 0.0
        %1651 = vmatpush1.msra.mxu0 0.0
        %1652 = vmatprep.subr.mxu0 0.0
        %1653 = vmatpush1.msra.mxu0 0.0
        %1654 = vmatprep.subr.mxu0 0.0
        %1655 = vmatpush1.msra.mxu0 0.0
        %1656 = vmatprep.subr.mxu0 0.0
        %1657 = vmatpush1.msra.mxu0 0.0
        %1658 = vmatprep.subr.mxu0 0.0
        %1659 = vmatpush1.msra.mxu0 0.0
        %1660 = vmatprep.subr.mxu0 0.0
        %1661 = vmatpush1.msra.mxu0 0.0
        %1662 = vmatprep.subr.mxu0 0.0
        %1663 = vmatpush1.msra.mxu0 0.0
        %1664 = vmatprep.subr.mxu0 0.0
        %1665 = vmatpush1.msra.mxu0 0.0
        %1666 = vmatprep.subr.mxu0 0.0
        %1667 = vmatpush1.msra.mxu0 0.0
        %1668 = vmatprep.subr.mxu0 0.0
        %1669 = vmatpush1.msra.mxu0 0.0
        %1670 = vmatprep.subr.mxu0 0.0
        %1671 = vmatpush1.msra.mxu0 0.0
        %1672 = vmatprep.subr.mxu0 0.0
        %1673 = vmatpush1.msra.mxu0 0.0
        %1674 = vmatprep.subr.mxu0 0.0
        %1675 = vmatpush1.msra.mxu0 0.0
        %1676 = vmatprep.subr.mxu0 0.0
        %1677 = vmatpush1.msra.mxu0 0.0
        %1678 = vmatprep.subr.mxu0 0.0
        %1679 = vmatpush1.msra.mxu0 0.0
        %1680 = vmatprep.subr.mxu0 0.0
        %1681 = vmatpush1.msra.mxu0 0.0
        %1682 = vmatprep.subr.mxu0 0.0
        %1683 = vmatpush1.msra.mxu0 0.0
        %1684 = vmatprep.subr.mxu0 0.0
        %1685 = vmatpush1.msra.mxu0 0.0
        %1686 = vmatprep.subr.mxu0 0.0
        %1687 = vmatpush1.msra.mxu0 0.0
        %1688 = vmatprep.subr.mxu0 0.0
        %1689 = vmatpush1.msra.mxu0 0.0
        %1690 = vmatprep.subr.mxu0 0.0
        %1691 = vmatpush1.msra.mxu0 0.0
        %1692 = vmatprep.subr.mxu0 0.0
        %1693 = vmatpush1.msra.mxu0 0.0
        %1694 = vmatprep.subr.mxu0 0.0
        %1695 = vmatpush1.msra.mxu0 0.0
        %1696 = vmatprep.subr.mxu0 0.0
        %1697 = vmatpush1.msra.mxu0 0.0
        %1698 = vmatprep.subr.mxu0 0.0
        %1699 = vmatpush1.msra.mxu0 0.0
        %1700 = vmatprep.subr.mxu0 0.0
        %1701 = vmatpush1.msra.mxu0 0.0
        %1702 = vmatprep.subr.mxu0 0.0
        %1703 = vmatpush1.msra.mxu0 0.0
        %1704 = vmatprep.subr.mxu0 0.0
        %1705 = vmatpush1.msra.mxu0 0.0
        %1706 = vmatprep.subr.mxu0 0.0
        %1707 = vmatpush1.msra.mxu0 0.0
        %1708 = vmatprep.subr.mxu0 0.0
        %1709 = vmatpush1.msra.mxu0 0.0
        %1710 = vmatprep.subr.mxu0 0.0
        %1711 = vmatpush1.msra.mxu0 0.0
        %1712 = vmatprep.mubr.f32.mxu0 0.0
        %v1713 = vand.u32 %v1565, 4294901760
        %1714 = vmatmul.mubr.f32.gmra.mrb[0].mxu0 %v1713
        %v1715 = vpop.f32.mrb[0].mxu0
        %v1716 = vadd.f32 %v1640, %v1715
        %v1717 = vpop.f32.mrb[0].mxu0
        %1718 = vdwg.mxu0
        %1719 = vmatprep.subr.mxu0 0.0
        %v1720 = vand.u32 %v1563, 4294901760
        %v1721 = vsub.f32 %v1563, %v1720
        %1722 = vmatpush1.msra.mxu0 %v1721
        %1723 = vmatprep.subr.mxu0 0.0
        %1724 = vmatpush1.msra.mxu0 0.0
        %1725 = vmatprep.subr.mxu0 0.0
        %1726 = vmatpush1.msra.mxu0 0.0
        %1727 = vmatprep.subr.mxu0 0.0
        %1728 = vmatpush1.msra.mxu0 0.0
        %1729 = vmatprep.subr.mxu0 0.0
        %1730 = vmatpush1.msra.mxu0 0.0
        %1731 = vmatprep.subr.mxu0 0.0
        %1732 = vmatpush1.msra.mxu0 0.0
        %1733 = vmatprep.subr.mxu0 0.0
        %1734 = vmatpush1.msra.mxu0 0.0
        %1735 = vmatprep.subr.mxu0 0.0
        %1736 = vmatpush1.msra.mxu0 0.0
        %1737 = vmatprep.subr.mxu0 0.0
        %1738 = vmatpush1.msra.mxu0 0.0
        %1739 = vmatprep.subr.mxu0 0.0
        %1740 = vmatpush1.msra.mxu0 0.0
        %1741 = vmatprep.subr.mxu0 0.0
        %1742 = vmatpush1.msra.mxu0 0.0
        %1743 = vmatprep.subr.mxu0 0.0
        %1744 = vmatpush1.msra.mxu0 0.0
        %1745 = vmatprep.subr.mxu0 0.0
        %1746 = vmatpush1.msra.mxu0 0.0
        %1747 = vmatprep.subr.mxu0 0.0
        %1748 = vmatpush1.msra.mxu0 0.0
        %1749 = vmatprep.subr.mxu0 0.0
        %1750 = vmatpush1.msra.mxu0 0.0
        %1751 = vmatprep.subr.mxu0 0.0
        %1752 = vmatpush1.msra.mxu0 0.0
        %1753 = vmatprep.subr.mxu0 0.0
        %1754 = vmatpush1.msra.mxu0 0.0
        %1755 = vmatprep.subr.mxu0 0.0
        %1756 = vmatpush1.msra.mxu0 0.0
        %1757 = vmatprep.subr.mxu0 0.0
        %1758 = vmatpush1.msra.mxu0 0.0
        %1759 = vmatprep.subr.mxu0 0.0
        %1760 = vmatpush1.msra.mxu0 0.0
        %1761 = vmatprep.subr.mxu0 0.0
        %1762 = vmatpush1.msra.mxu0 0.0
        %1763 = vmatprep.subr.mxu0 0.0
        %1764 = vmatpush1.msra.mxu0 0.0
        %1765 = vmatprep.subr.mxu0 0.0
        %1766 = vmatpush1.msra.mxu0 0.0
        %1767 = vmatprep.subr.mxu0 0.0
        %1768 = vmatpush1.msra.mxu0 0.0
        %1769 = vmatprep.subr.mxu0 0.0
        %1770 = vmatpush1.msra.mxu0 0.0
        %1771 = vmatprep.subr.mxu0 0.0
        %1772 = vmatpush1.msra.mxu0 0.0
        %1773 = vmatprep.subr.mxu0 0.0
        %1774 = vmatpush1.msra.mxu0 0.0
        %1775 = vmatprep.subr.mxu0 0.0
        %1776 = vmatpush1.msra.mxu0 0.0
        %1777 = vmatprep.subr.mxu0 0.0
        %1778 = vmatpush1.msra.mxu0 0.0
        %1779 = vmatprep.subr.mxu0 0.0
        %1780 = vmatpush1.msra.mxu0 0.0
        %1781 = vmatprep.subr.mxu0 0.0
        %1782 = vmatpush1.msra.mxu0 0.0
        %1783 = vmatprep.subr.mxu0 0.0
        %1784 = vmatpush1.msra.mxu0 0.0
        %1785 = vmatprep.mubr.f32.mxu0 0.0
        %v1786 = vand.u32 %v1565, 4294901760
        %v1787 = vsub.f32 %v1565, %v1786
        %1788 = vmatmul.mubr.f32.gmra.mrb[0].mxu0 %v1787
        %v1789 = vpop.f32.mrb[0].mxu0
        %v1790 = vadd.f32 %v1716, %v1789
        %v1791 = vpop.f32.mrb[0].mxu0
        %1792 = vdwg.mxu0
        %1793 = vmatprep.subr.mxu0 0.0
        %v1794 = vand.u32 %v1563, 4294901760
        %1795 = vmatpush1.msra.mxu0 %v1794
        %1796 = vmatprep.subr.mxu0 0.0
        %1797 = vmatpush1.msra.mxu0 0.0
        %1798 = vmatprep.subr.mxu0 0.0
        %1799 = vmatpush1.msra.mxu0 0.0
        %1800 = vmatprep.subr.mxu0 0.0
        %1801 = vmatpush1.msra.mxu0 0.0
        %1802 = vmatprep.subr.mxu0 0.0
        %1803 = vmatpush1.msra.mxu0 0.0
        %1804 = vmatprep.subr.mxu0 0.0
        %1805 = vmatpush1.msra.mxu0 0.0
        %1806 = vmatprep.subr.mxu0 0.0
        %1807 = vmatpush1.msra.mxu0 0.0
        %1808 = vmatprep.subr.mxu0 0.0
        %1809 = vmatpush1.msra.mxu0 0.0
        %1810 = vmatprep.subr.mxu0 0.0
        %1811 = vmatpush1.msra.mxu0 0.0
        %1812 = vmatprep.subr.mxu0 0.0
        %1813 = vmatpush1.msra.mxu0 0.0
        %1814 = vmatprep.subr.mxu0 0.0
        %1815 = vmatpush1.msra.mxu0 0.0
        %1816 = vmatprep.subr.mxu0 0.0
        %1817 = vmatpush1.msra.mxu0 0.0
        %1818 = vmatprep.subr.mxu0 0.0
        %1819 = vmatpush1.msra.mxu0 0.0
        %1820 = vmatprep.subr.mxu0 0.0
        %1821 = vmatpush1.msra.mxu0 0.0
        %1822 = vmatprep.subr.mxu0 0.0
        %1823 = vmatpush1.msra.mxu0 0.0
        %1824 = vmatprep.subr.mxu0 0.0
        %1825 = vmatpush1.msra.mxu0 0.0
        %1826 = vmatprep.subr.mxu0 0.0
        %1827 = vmatpush1.msra.mxu0 0.0
        %1828 = vmatprep.subr.mxu0 0.0
        %1829 = vmatpush1.msra.mxu0 0.0
        %1830 = vmatprep.subr.mxu0 0.0
        %1831 = vmatpush1.msra.mxu0 0.0
        %1832 = vmatprep.subr.mxu0 0.0
        %1833 = vmatpush1.msra.mxu0 0.0
        %1834 = vmatprep.subr.mxu0 0.0
        %1835 = vmatpush1.msra.mxu0 0.0
        %1836 = vmatprep.subr.mxu0 0.0
        %1837 = vmatpush1.msra.mxu0 0.0
        %1838 = vmatprep.subr.mxu0 0.0
        %1839 = vmatpush1.msra.mxu0 0.0
        %1840 = vmatprep.subr.mxu0 0.0
        %1841 = vmatpush1.msra.mxu0 0.0
        %1842 = vmatprep.subr.mxu0 0.0
        %1843 = vmatpush1.msra.mxu0 0.0
        %1844 = vmatprep.subr.mxu0 0.0
        %1845 = vmatpush1.msra.mxu0 0.0
        %1846 = vmatprep.subr.mxu0 0.0
        %1847 = vmatpush1.msra.mxu0 0.0
        %1848 = vmatprep.subr.mxu0 0.0
        %1849 = vmatpush1.msra.mxu0 0.0
        %1850 = vmatprep.subr.mxu0 0.0
        %1851 = vmatpush1.msra.mxu0 0.0
        %1852 = vmatprep.subr.mxu0 0.0
        %1853 = vmatpush1.msra.mxu0 0.0
        %1854 = vmatprep.subr.mxu0 0.0
        %1855 = vmatpush1.msra.mxu0 0.0
        %1856 = vmatprep.subr.mxu0 0.0
        %1857 = vmatpush1.msra.mxu0 0.0
        %1858 = vmatprep.mubr.f32.mxu0 0.0
        %v1859 = vand.u32 %v1565, 4294901760
        %v1860 = vsub.f32 %v1565, %v1859
        %v1861 = vand.u32 %v1860, 4294901760
        %1862 = vmatmul.mubr.f32.gmra.mrb[0].mxu0 %v1861
        %v1863 = vpop.f32.mrb[0].mxu0
        %v1864 = vadd.f32 %v1790, %v1863
        %v1865 = vpop.f32.mrb[0].mxu0
        %1866 = vdwg.mxu0
        %1867 = vmatprep.subr.mxu0 0.0
        %v1868 = vand.u32 %v1563, 4294901760
        %v1869 = vsub.f32 %v1563, %v1868
        %v1870 = vand.u32 %v1869, 4294901760
        %1871 = vmatpush1.msra.mxu0 %v1870
        %1872 = vmatprep.subr.mxu0 0.0
        %1873 = vmatpush1.msra.mxu0 0.0
        %1874 = vmatprep.subr.mxu0 0.0
        %1875 = vmatpush1.msra.mxu0 0.0
        %1876 = vmatprep.subr.mxu0 0.0
        %1877 = vmatpush1.msra.mxu0 0.0
        %1878 = vmatprep.subr.mxu0 0.0
        %1879 = vmatpush1.msra.mxu0 0.0
        %1880 = vmatprep.subr.mxu0 0.0
        %1881 = vmatpush1.msra.mxu0 0.0
        %1882 = vmatprep.subr.mxu0 0.0
        %1883 = vmatpush1.msra.mxu0 0.0
        %1884 = vmatprep.subr.mxu0 0.0
        %1885 = vmatpush1.msra.mxu0 0.0
        %1886 = vmatprep.subr.mxu0 0.0
        %1887 = vmatpush1.msra.mxu0 0.0
        %1888 = vmatprep.subr.mxu0 0.0
        %1889 = vmatpush1.msra.mxu0 0.0
        %1890 = vmatprep.subr.mxu0 0.0
        %1891 = vmatpush1.msra.mxu0 0.0
        %1892 = vmatprep.subr.mxu0 0.0
        %1893 = vmatpush1.msra.mxu0 0.0
        %1894 = vmatprep.subr.mxu0 0.0
        %1895 = vmatpush1.msra.mxu0 0.0
        %1896 = vmatprep.subr.mxu0 0.0
        %1897 = vmatpush1.msra.mxu0 0.0
        %1898 = vmatprep.subr.mxu0 0.0
        %1899 = vmatpush1.msra.mxu0 0.0
        %1900 = vmatprep.subr.mxu0 0.0
        %1901 = vmatpush1.msra.mxu0 0.0
        %1902 = vmatprep.subr.mxu0 0.0
        %1903 = vmatpush1.msra.mxu0 0.0
        %1904 = vmatprep.subr.mxu0 0.0
        %1905 = vmatpush1.msra.mxu0 0.0
        %1906 = vmatprep.subr.mxu0 0.0
        %1907 = vmatpush1.msra.mxu0 0.0
        %1908 = vmatprep.subr.mxu0 0.0
        %1909 = vmatpush1.msra.mxu0 0.0
        %1910 = vmatprep.subr.mxu0 0.0
        %1911 = vmatpush1.msra.mxu0 0.0
        %1912 = vmatprep.subr.mxu0 0.0
        %1913 = vmatpush1.msra.mxu0 0.0
        %1914 = vmatprep.subr.mxu0 0.0
        %1915 = vmatpush1.msra.mxu0 0.0
        %1916 = vmatprep.subr.mxu0 0.0
        %1917 = vmatpush1.msra.mxu0 0.0
        %1918 = vmatprep.subr.mxu0 0.0
        %1919 = vmatpush1.msra.mxu0 0.0
        %1920 = vmatprep.subr.mxu0 0.0
        %1921 = vmatpush1.msra.mxu0 0.0
        %1922 = vmatprep.subr.mxu0 0.0
        %1923 = vmatpush1.msra.mxu0 0.0
        %1924 = vmatprep.subr.mxu0 0.0
        %1925 = vmatpush1.msra.mxu0 0.0
        %1926 = vmatprep.subr.mxu0 0.0
        %1927 = vmatpush1.msra.mxu0 0.0
        %1928 = vmatprep.subr.mxu0 0.0
        %1929 = vmatpush1.msra.mxu0 0.0
        %1930 = vmatprep.subr.mxu0 0.0
        %1931 = vmatpush1.msra.mxu0 0.0
        %1932 = vmatprep.subr.mxu0 0.0
        %1933 = vmatpush1.msra.mxu0 0.0
        %1934 = vmatprep.mubr.f32.mxu0 0.0
        %v1935 = vand.u32 %v1565, 4294901760
        %1936 = vmatmul.mubr.f32.gmra.mrb[0].mxu0 %v1935
        %v1937 = vpop.f32.mrb[0].mxu0
        %v1938 = vadd.f32 %v1864, %v1937
        %v1939 = vpop.f32.mrb[0].mxu0
        %1940 = vdwg.mxu0
        %1941 = vmatprep.subr.mxu0 0.0
        %v1942 = vand.u32 %v1563, 4294901760
        %1943 = vmatpush1.msra.mxu0 %v1942
        %1944 = vmatprep.subr.mxu0 0.0
        %1945 = vmatpush1.msra.mxu0 0.0
        %1946 = vmatprep.subr.mxu0 0.0
        %1947 = vmatpush1.msra.mxu0 0.0
        %1948 = vmatprep.subr.mxu0 0.0
        %1949 = vmatpush1.msra.mxu0 0.0
        %1950 = vmatprep.subr.mxu0 0.0
        %1951 = vmatpush1.msra.mxu0 0.0
        %1952 = vmatprep.subr.mxu0 0.0
        %1953 = vmatpush1.msra.mxu0 0.0
        %1954 = vmatprep.subr.mxu0 0.0
        %1955 = vmatpush1.msra.mxu0 0.0
        %1956 = vmatprep.subr.mxu0 0.0
        %1957 = vmatpush1.msra.mxu0 0.0
        %1958 = vmatprep.subr.mxu0 0.0
        %1959 = vmatpush1.msra.mxu0 0.0
        %1960 = vmatprep.subr.mxu0 0.0
        %1961 = vmatpush1.msra.mxu0 0.0
        %1962 = vmatprep.subr.mxu0 0.0
        %1963 = vmatpush1.msra.mxu0 0.0
        %1964 = vmatprep.subr.mxu0 0.0
        %1965 = vmatpush1.msra.mxu0 0.0
        %1966 = vmatprep.subr.mxu0 0.0
        %1967 = vmatpush1.msra.mxu0 0.0
        %1968 = vmatprep.subr.mxu0 0.0
        %1969 = vmatpush1.msra.mxu0 0.0
        %1970 = vmatprep.subr.mxu0 0.0
        %1971 = vmatpush1.msra.mxu0 0.0
        %1972 = vmatprep.subr.mxu0 0.0
        %1973 = vmatpush1.msra.mxu0 0.0
        %1974 = vmatprep.subr.mxu0 0.0
        %1975 = vmatpush1.msra.mxu0 0.0
        %1976 = vmatprep.subr.mxu0 0.0
        %1977 = vmatpush1.msra.mxu0 0.0
        %1978 = vmatprep.subr.mxu0 0.0
        %1979 = vmatpush1.msra.mxu0 0.0
        %1980 = vmatprep.subr.mxu0 0.0
        %1981 = vmatpush1.msra.mxu0 0.0
        %1982 = vmatprep.subr.mxu0 0.0
        %1983 = vmatpush1.msra.mxu0 0.0
        %1984 = vmatprep.subr.mxu0 0.0
        %1985 = vmatpush1.msra.mxu0 0.0
        %1986 = vmatprep.subr.mxu0 0.0
        %1987 = vmatpush1.msra.mxu0 0.0
        %1988 = vmatprep.subr.mxu0 0.0
        %1989 = vmatpush1.msra.mxu0 0.0
        %1990 = vmatprep.subr.mxu0 0.0
        %1991 = vmatpush1.msra.mxu0 0.0
        %1992 = vmatprep.subr.mxu0 0.0
        %1993 = vmatpush1.msra.mxu0 0.0
        %1994 = vmatprep.subr.mxu0 0.0
        %1995 = vmatpush1.msra.mxu0 0.0
        %1996 = vmatprep.subr.mxu0 0.0
        %1997 = vmatpush1.msra.mxu0 0.0
        %1998 = vmatprep.subr.mxu0 0.0
        %1999 = vmatpush1.msra.mxu0 0.0
        %2000 = vmatprep.subr.mxu0 0.0
        %2001 = vmatpush1.msra.mxu0 0.0
        %2002 = vmatprep.subr.mxu0 0.0
        %2003 = vmatpush1.msra.mxu0 0.0
        %2004 = vmatprep.subr.mxu0 0.0
        %2005 = vmatpush1.msra.mxu0 0.0
        %2006 = vmatprep.mubr.f32.mxu0 0.0
        %v2007 = vand.u32 %v1565, 4294901760
        %2008 = vmatmul.mubr.f32.gmra.mrb[0].mxu0 %v2007
        %v2009 = vpop.f32.mrb[0].mxu0
        %v2010 = vadd.f32 %v1938, %v2009
        %v2011 = vpop.f32.mrb[0].mxu0
        %2012 = vdwg.mxu0
        %2014 = vrot.lane.b32.xlu0 %v1104, 8
        %v2015 = vpop.permute.xlu0 %2014
        %2018 = vrot.lane.b32.xlu0 %v1557, 16
        %v2019 = vpop.permute.xlu0 %2018
        %2022 = vrot.lane.b32.xlu0 %v2010, 24
        %v2023 = vpop.permute.xlu0 %2022
        %v2025 = vsel %vm204, %v651, %v2015
        %vm2026 = vcmask 130048
        %v2027 = vsel %vm2026, %v2025, %v2019
        %vm2028 = vcmask 195584
        %v2029 = vsel %vm2028, %v2027, %v2023
        %vm2030 = vcmask 261120
        %2031 = vst.msk [vmem:[%s201] sm:$0xff] %vm2030, %v2029
        %s2032 = sand.u32 %s96, 1
        %s2033 = scalar_lea.sflag [#allocation4], %s2032
        %s2034 = sand.u32 %s96, 1
        %s2035 = smul.addr %s2034, 8
        %s2036 = scalar_lea.vmem [#allocation7], %s2035
        // Predicated region
        $region37: #{tpu_custom_call.1} parent=27 // pred_check
          %p2037 = pneg %p106
        $region38: #{tpu_custom_call.1} parent=27 // pred_check_branch
          %2039 = sbr.rel (%p2037) target = $region40
        $region39: #{tpu_custom_call.1} parent=27 // pred_region
          %s2041 = ssub.s32 128, 128
          %2042 = vsyncadd %s2033, %s2041
          %s2043 = sadd.s32 %s25, %s24
          %s2044 = smul.addr %s2043, 128
          %s2045 = scalar_lea.hbm %s2, %s2044
          %s2047 = sshll.u32 %s2036, 4
          %s2048 = int_to_ptr.vmem [resolvable:$true] %s2047
          %2050 = dma.vmem_to_hbm [thread:$0]  %s2048, 128, %s2045, %s2033
        $region40: #{tpu_custom_call.1} parent=27 // pred_fallthru
          _
      $region28: #{tpu_custom_call.1} parent=5 // pred_fallthru
        _
      %p2051 = scmp.le.s32.totalorder 2, %s15
      // Predicated region
      $region41: #{tpu_custom_call.1} parent=5 // pred_check
        %p2052 = pneg %p2051
      $region42: #{tpu_custom_call.1} parent=5 // pred_check_branch
        %2054 = sbr.rel (%p2052) target = $region44
      $region43: #{tpu_custom_call.1} parent=5 // pred_region
        %s2055 = ssub.s32 %s15, 2
        // Predicated region
        $region45: #{tpu_custom_call.1} parent=43 // pred_check
          %p2056 = pneg %p112
        $region46: #{tpu_custom_call.1} parent=43 // pred_check_branch
          %2058 = sbr.rel (%p2056) target = $region48
        $region47: #{tpu_custom_call.1} parent=43 // pred_region
          %s2059 = sand.u32 %s97, 1
          %s2060 = scalar_lea.sflag [#allocation4], %s2059
          %s2061 = sand.u32 %s97, 1
          %s2062 = smul.addr %s2061, 8
          %s2063 = scalar_lea.vmem [#allocation7], %s2062
          %2064 = dma.done %s2060, 128
        $region48: #{tpu_custom_call.1} parent=43 // pred_fallthru
          _
      $region44: #{tpu_custom_call.1} parent=5 // pred_fallthru
        _
    $region6: #{tpu_custom_call.1} parent=1 // loop_footer
      %s19 = sadd.s32 1, %s15
    $region7: #{tpu_custom_call.1} parent=1 // loop_footer_branch
      %14 = sbr.rel target = $region3
    $region8: #{tpu_custom_call.1} parent=1 // loop_exit
      _
    %2065 = vsyncpa [#allocation3], 1
    %s2066 = scalar_lea.sflag [#allocation3], 1
    %2067 = vsyncpa %s2066, 1
    %2068 = vsyncpa [#allocation6], 1
    %2069 = vsyncpa [#allocation4], 1
    %s2070 = scalar_lea.sflag [#allocation4], 1
    %2071 = vsyncpa %s2070, 1

// kernel: tpu_custom_call.1
$region0: #{tpu_custom_call.1}
  #allocation0 [shape = 'u32[]', space=smem, size = 0x4, offset = 0x4, fixed_abs, tag = 'smem constant byte address 0x4 - core index']
  #allocation1 [shape = 'u32[144,128]{1,0:T(1,128)}', space=vmem, size = 0x12000, scoped, tag = 'internal scratch']
  %s0 = inlined_call_operand.hbm [shape: f32[2,4,8,8], index: 0, kind: input, shape index: {}]
  %s1 = inlined_call_operand.hbm [shape: f32[2,4,8,8], index: 1, kind: input, shape index: {}]
  %s2 = inlined_call_operand.hbm [shape: f32[2,8,32], index: 2, kind: output, shape index: {}]
  %s3 = sld [smem:[#allocation0]]
  $region49: #{tpu_custom_call.1} parent=0
    _
  %s5 = ssub.s32 1, %s3
  %s6 = scalar_select 0, %s5, %s3
  $region1: #{tpu_custom_call.1} parent=0
    #allocation2 [shape = 'u8[32768]{0}', space=vmem, size = 0x8000, scoped, tag = 'input window, operand 0']
    #allocation3 [shape = 's32[2]{0}', space=sflag, size = 0x8, scoped, tag = 'scoped memory for tpu_custom_call.1']
    #allocation4 [shape = 's32[2]{0}', space=sflag, size = 0x8, scoped, tag = 'scoped memory for tpu_custom_call.1']
    #allocation5 [shape = 'u8[32768]{0}', space=vmem, size = 0x8000, scoped, tag = 'input window, operand 1']
    #allocation6 [shape = 's32[2]{0}', space=sflag, size = 0x8, scoped, tag = 'scoped memory for tpu_custom_call.1']
    #allocation7 [shape = 'u8[8192]{0}', space=vmem, size = 0x2000, scoped, tag = 'output window, operand 0']
    %7 = vsyncpa [#allocation3], 0
    %s8 = scalar_lea.sflag [#allocation3], 1
    %9 = vsyncpa %s8, 0
    %10 = vsyncpa [#allocation6], 0
    %s11 = scalar_lea.sflag [#allocation6], 1
    %12 = vsyncpa %s11, 0
    %13 = vsyncpa [#allocation4], 0
    %s14 = scalar_lea.sflag [#allocation4], 1
    %15 = vsyncpa %s14, 0
    loop: start=0, step=1, limit=4
    $region2: #{tpu_custom_call.1} parent=1 // loop_pre_header
      _
    $region3: #{tpu_custom_call.1} parent=1 // loop_header
      %s17 = sphi 0, %s21
      %p18 = scmp.ge.s32.totalorder %s17, 4
      %s24 = sphi 0, %s36
      %s25 = sphi 0, %s32
      %s26 = sphi 0, %s24
      %s27 = sphi 0, %s25
      %s28 = sphi 0, %s26
      %s29 = sphi 0, %s27
      %s41 = sphi 0, %s43
      %s44 = sphi 0, %s41
      %s45 = sphi 0, %s44
      %s61 = sphi 0, %s45
      %s67 = sphi 0, %s69
      %s70 = sphi 0, %s67
      %s71 = sphi 0, %s70
      %s87 = sphi 0, %s71
      %s95 = sphi 0, %s97
      %s98 = sphi 0, %s95
      %s99 = sphi 0, %s98
      %s115 = sphi 0, %s99
    $region4: #{tpu_custom_call.1} parent=1 // loop_header_branch
      %20 = sbr.rel (%p18) target = $region8
    $region5: #{tpu_custom_call.1} parent=1 // loop_body
      %s22 = ssub.s32 %s17, 1
      %s23 = ssub.s32 %s17, 2
      %s30 = sadd.s32 1, %s25
      %p31 = scmp.ge.s32.totalorder %s30, 1
      %s32 = scalar_select %p31, 0, %s30
      %s33 = sadd.s32 1, %s24
      %s34 = scalar_select %p31, %s33, %s24
      %p35 = scmp.ge.s32.totalorder %s34, 2
      %s36 = scalar_select %p35, 0, %s34
      %s37 = ssub.s32 %s24, %s36
      %s38 = ssub.s32 %s25, %s32
      %s39 = sor.u32 %s37, %s38
      %p40 = scmp.eq.s32.totalorder %s39, 0
      %s42 = sadd.s32 %s41, 1
      %s43 = scalar_select %p40, %s41, %s42
      %p46 = pneg %p40
      %p47 = scmp.eq.s32.totalorder %s17, 1
      %p48 = por %p46, %p47
      %p49 = scmp.ne.s32.totalorder %s41, %s44
      %p50 = scmp.eq.s32.totalorder %s17, 0
      %p51 = por %p49, %p50
      %p52 = scmp.ne.s32.totalorder %s41, %s44
      %p53 = scmp.eq.s32.totalorder %s22, 1
      %p54 = por %p52, %p53
      %p55 = scmp.ne.s32.totalorder %s44, %s45
      %p56 = scmp.eq.s32.totalorder %s22, 0
      %p57 = por %p55, %p56
      %p58 = scmp.ne.s32.totalorder %s44, %s45
      %p59 = scmp.eq.s32.totalorder %s23, 1
      %p60 = por %p58, %p59
      %p62 = scmp.ne.s32.totalorder %s45, %s61
      %p63 = scmp.eq.s32.totalorder %s23, 0
      %p64 = por %p62, %p63
      %s65 = ssub.s32 %s24, %s36
      %p66 = scmp.eq.s32.totalorder %s65, 0
      %s68 = sadd.s32 %s67, 1
      %s69 = scalar_select %p66, %s67, %s68
      %p72 = pneg %p66
      %p73 = scmp.eq.s32.totalorder %s17, 1
      %p74 = por %p72, %p73
      %p75 = scmp.ne.s32.totalorder %s67, %s70
      %p76 = scmp.eq.s32.totalorder %s17, 0
      %p77 = por %p75, %p76
      %p78 = scmp.ne.s32.totalorder %s67, %s70
      %p79 = scmp.eq.s32.totalorder %s22, 1
      %p80 = por %p78, %p79
      %p81 = scmp.ne.s32.totalorder %s70, %s71
      %p82 = scmp.eq.s32.totalorder %s22, 0
      %p83 = por %p81, %p82
      %p84 = scmp.ne.s32.totalorder %s70, %s71
      %p85 = scmp.eq.s32.totalorder %s23, 1
      %p86 = por %p84, %p85
      %p88 = scmp.ne.s32.totalorder %s71, %s87
      %p89 = scmp.eq.s32.totalorder %s23, 0
      %p90 = por %p88, %p89
      %s91 = ssub.s32 %s24, %s36
      %s92 = ssub.s32 %s25, %s32
      %s93 = sor.u32 %s91, %s92
      %p94 = scmp.eq.s32.totalorder %s93, 0
      %s96 = sadd.s32 %s95, 1
      %s97 = scalar_select %p94, %s95, %s96
      %p100 = pneg %p94
      %p101 = scmp.eq.s32.totalorder %s17, 1
      %p102 = por %p100, %p101
      %p103 = scmp.ne.s32.totalorder %s95, %s98
      %p104 = scmp.eq.s32.totalorder %s17, 0
      %p105 = por %p103, %p104
      %p106 = scmp.ne.s32.totalorder %s95, %s98
      %p107 = scmp.eq.s32.totalorder %s22, 1
      %p108 = por %p106, %p107
      %p109 = scmp.ne.s32.totalorder %s98, %s99
      %p110 = scmp.eq.s32.totalorder %s22, 0
      %p111 = por %p109, %p110
      %p112 = scmp.ne.s32.totalorder %s98, %s99
      %p113 = scmp.eq.s32.totalorder %s23, 1
      %p114 = por %p112, %p113
      %p116 = scmp.ne.s32.totalorder %s99, %s115
      %p117 = scmp.eq.s32.totalorder %s23, 0
      %p118 = por %p116, %p117
      %p119 = scmp.le.s32.totalorder 1, %s17
      %p120 = scmp.lt.s32.totalorder %s17, 3
      %p121 = pnand %p119, %p120
      %p122 = pneg %p121
      // Predicated region
      $region9: #{tpu_custom_call.1} parent=5 // pred_check
        _
      $region10: #{tpu_custom_call.1} parent=5 // pred_check_branch
        %124 = sbr.rel (%p121) target = $region12
      $region11: #{tpu_custom_call.1} parent=5 // pred_region
        %s125 = ssub.s32 %s17, 1
      $region12: #{tpu_custom_call.1} parent=5 // pred_fallthru
        _
      %p126 = scmp.lt.s32.totalorder %s17, 2
      // Predicated region
      $region13: #{tpu_custom_call.1} parent=5 // pred_check
        %p127 = pneg %p126
      $region14: #{tpu_custom_call.1} parent=5 // pred_check_branch
        %129 = sbr.rel (%p127) target = $region16
      $region15: #{tpu_custom_call.1} parent=5 // pred_region
        // Predicated region
        $region17: #{tpu_custom_call.1} parent=15 // pred_check
          %p130 = pneg %p51
        $region18: #{tpu_custom_call.1} parent=15 // pred_check_branch
          %132 = sbr.rel (%p130) target = $region20
        $region19: #{tpu_custom_call.1} parent=15 // pred_region
          %s133 = sand.u32 %s41, 1
          %s134 = scalar_lea.sflag [#allocation3], %s133
          %s135 = sand.u32 %s41, 1
          %s136 = smul.addr %s135, 32
          %s137 = scalar_lea.vmem [#allocation2], %s136
          %s139 = ssub.s32 512, 512
          %140 = vsyncadd %s134, %s139
          %s141 = smul.addr %s24, 4
          %s142 = sadd.s32 %s25, %s141
          %s143 = smul.addr %s142, 128
          %s144 = scalar_lea.hbm %s0, %s143
          %s145 = sshll.u32 %s137, 4
          %s146 = int_to_ptr.vmem [resolvable:$true] %s145
          %151 = dma.hbm_to_vmem [thread:$0]  %s144, 512, %s146, %s134, 128, 128, 8
        $region20: #{tpu_custom_call.1} parent=15 // pred_fallthru
          _
        // Predicated region
        $region21: #{tpu_custom_call.1} parent=15 // pred_check
          %p152 = pneg %p77
        $region22: #{tpu_custom_call.1} parent=15 // pred_check_branch
          %154 = sbr.rel (%p152) target = $region24
        $region23: #{tpu_custom_call.1} parent=15 // pred_region
          %s155 = sand.u32 %s67, 1
          %s156 = scalar_lea.sflag [#allocation6], %s155
          %s157 = sand.u32 %s67, 1
          %s158 = smul.addr %s157, 32
          %s159 = scalar_lea.vmem [#allocation5], %s158
          %s161 = ssub.s32 512, 512
          %162 = vsyncadd %s156, %s161
          %s163 = smul.addr %s24, 4
          %s164 = smul.addr %s163, 128
          %s165 = scalar_lea.hbm %s1, %s164
          %s166 = sshll.u32 %s159, 4
          %s167 = int_to_ptr.vmem [resolvable:$true] %s166
          %172 = dma.hbm_to_vmem [thread:$0]  %s165, 512, %s167, %s156, 128, 128, 8
        $region24: #{tpu_custom_call.1} parent=15 // pred_fallthru
          _
      $region16: #{tpu_custom_call.1} parent=5 // pred_fallthru
        _
      %p173 = scmp.le.s32.totalorder 1, %s17
      %p174 = scmp.lt.s32.totalorder %s17, 3
      %p175 = pnand %p173, %p174
      %p176 = pneg %p175
      // Predicated region
      $region25: #{tpu_custom_call.1} parent=5 // pred_check
        _
      $region26: #{tpu_custom_call.1} parent=5 // pred_check_branch
        %178 = sbr.rel (%p175) target = $region28
      $region27: #{tpu_custom_call.1} parent=5 // pred_region
        %s179 = ssub.s32 %s17, 1
        %s180 = sand.u32 %s44, 1
        %s181 = scalar_lea.sflag [#allocation3], %s180
        %s182 = sand.u32 %s44, 1
        %s183 = smul.addr %s182, 32
        %s184 = scalar_lea.vmem [#allocation2], %s183
        // Predicated region
        $region29: #{tpu_custom_call.1} parent=27 // pred_check
          %p185 = pneg %p57
        $region30: #{tpu_custom_call.1} parent=27 // pred_check_branch
          %187 = sbr.rel (%p185) target = $region32
        $region31: #{tpu_custom_call.1} parent=27 // pred_region
          %188 = dma.done %s181, 512
        $region32: #{tpu_custom_call.1} parent=27 // pred_fallthru
          _
        %s189 = sand.u32 %s70, 1
        %s190 = scalar_lea.sflag [#allocation6], %s189
        %s191 = sand.u32 %s70, 1
        %s192 = smul.addr %s191, 32
        %s193 = scalar_lea.vmem [#allocation5], %s192
        // Predicated region
        $region33: #{tpu_custom_call.1} parent=27 // pred_check
          %p194 = pneg %p83
        $region34: #{tpu_custom_call.1} parent=27 // pred_check_branch
          %196 = sbr.rel (%p194) target = $region36
        $region35: #{tpu_custom_call.1} parent=27 // pred_region
          %197 = dma.done %s190, 512
        $region36: #{tpu_custom_call.1} parent=27 // pred_fallthru
          _
        %s198 = sand.u32 %s44, 1
        %s199 = scalar_lea.sflag [#allocation3], %s198
        %s200 = sand.u32 %s44, 1
        %s201 = smul.addr %s200, 32
        %s202 = scalar_lea.vmem [#allocation2], %s201
        %p203 = pneg %p57
        %p204 = pneg %p54
        %s205 = sand.u32 %s70, 1
        %s206 = scalar_lea.sflag [#allocation6], %s205
        %s207 = sand.u32 %s70, 1
        %s208 = smul.addr %s207, 32
        %s209 = scalar_lea.vmem [#allocation5], %s208
        %p210 = pneg %p83
        %p211 = pneg %p80
        %p212 = pneg %p111
        %p213 = pneg %p108
        %s214 = sand.u32 %s98, 1
        %s215 = scalar_lea.sflag [#allocation4], %s214
        %s216 = sand.u32 %s98, 1
        %s217 = smul.addr %s216, 8
        %s218 = scalar_lea.vmem [#allocation7], %s217
        %v219 = vld [vmem:[%s184] sm:$0xff]
        %v220 = vld [vmem:[%s193] sm:$0xff]
        %vm221 = vcmask 64512
        %v223 = vsel %vm221, %v219, 0
        %225 = vmatprep.subr.mxu0 0.0
        %v226 = vand.u32 %v220, 4294901760
        %227 = vmatpush1.msra.mxu0 %v226
        %228 = vmatprep.subr.mxu0 0.0
        %229 = vmatpush1.msra.mxu0 0.0
        %230 = vmatprep.subr.mxu0 0.0
        %231 = vmatpush1.msra.mxu0 0.0
        %232 = vmatprep.subr.mxu0 0.0
        %233 = vmatpush1.msra.mxu0 0.0
        %234 = vmatprep.subr.mxu0 0.0
        %235 = vmatpush1.msra.mxu0 0.0
        %236 = vmatprep.subr.mxu0 0.0
        %237 = vmatpush1.msra.mxu0 0.0
        %238 = vmatprep.subr.mxu0 0.0
        %239 = vmatpush1.msra.mxu0 0.0
        %240 = vmatprep.subr.mxu0 0.0
        %241 = vmatpush1.msra.mxu0 0.0
        %242 = vmatprep.subr.mxu0 0.0
        %243 = vmatpush1.msra.mxu0 0.0
        %244 = vmatprep.subr.mxu0 0.0
        %245 = vmatpush1.msra.mxu0 0.0
        %246 = vmatprep.subr.mxu0 0.0
        %247 = vmatpush1.msra.mxu0 0.0
        %248 = vmatprep.subr.mxu0 0.0
        %249 = vmatpush1.msra.mxu0 0.0
        %250 = vmatprep.subr.mxu0 0.0
        %251 = vmatpush1.msra.mxu0 0.0
        %252 = vmatprep.subr.mxu0 0.0
        %253 = vmatpush1.msra.mxu0 0.0
        %254 = vmatprep.subr.mxu0 0.0
        %255 = vmatpush1.msra.mxu0 0.0
        %256 = vmatprep.subr.mxu0 0.0
        %257 = vmatpush1.msra.mxu0 0.0
        %258 = vmatprep.subr.mxu0 0.0
        %259 = vmatpush1.msra.mxu0 0.0
        %260 = vmatprep.subr.mxu0 0.0
        %261 = vmatpush1.msra.mxu0 0.0
        %262 = vmatprep.subr.mxu0 0.0
        %263 = vmatpush1.msra.mxu0 0.0
        %264 = vmatprep.subr.mxu0 0.0
        %265 = vmatpush1.msra.mxu0 0.0
        %266 = vmatprep.subr.mxu0 0.0
        %267 = vmatpush1.msra.mxu0 0.0
        %268 = vmatprep.subr.mxu0 0.0
        %269 = vmatpush1.msra.mxu0 0.0
        %270 = vmatprep.subr.mxu0 0.0
        %271 = vmatpush1.msra.mxu0 0.0
        %272 = vmatprep.subr.mxu0 0.0
        %273 = vmatpush1.msra.mxu0 0.0
        %274 = vmatprep.subr.mxu0 0.0
        %275 = vmatpush1.msra.mxu0 0.0
        %276 = vmatprep.subr.mxu0 0.0
        %277 = vmatpush1.msra.mxu0 0.0
        %278 = vmatprep.subr.mxu0 0.0
        %279 = vmatpush1.msra.mxu0 0.0
        %280 = vmatprep.subr.mxu0 0.0
        %281 = vmatpush1.msra.mxu0 0.0
        %282 = vmatprep.subr.mxu0 0.0
        %283 = vmatpush1.msra.mxu0 0.0
        %284 = vmatprep.subr.mxu0 0.0
        %285 = vmatpush1.msra.mxu0 0.0
        %286 = vmatprep.subr.mxu0 0.0
        %287 = vmatpush1.msra.mxu0 0.0
        %288 = vmatprep.subr.mxu0 0.0
        %289 = vmatpush1.msra.mxu0 0.0
        %290 = vmatprep.mubr.f32.mxu0 0.0
        %v291 = vand.u32 %v223, 4294901760
        %v292 = vsub.f32 %v223, %v291
        %v293 = vand.u32 %v292, 4294901760
        %v294 = vsub.f32 %v292, %v293
        %v295 = vand.u32 %v294, 4294901760
        %296 = vmatmul.mubr.f32.gmra.mrb[0].mxu0 %v295
        %v297 = vpop.f32.mrb[0].mxu0
        %v298 = vadd.f32 0.0, %v297
        %v299 = vpop.f32.mrb[0].mxu0
        %300 = vdwg.mxu0
        %301 = vmatprep.subr.mxu0 0.0
        %v302 = vand.u32 %v220, 4294901760
        %v303 = vsub.f32 %v220, %v302
        %v304 = vand.u32 %v303, 4294901760
        %v305 = vsub.f32 %v303, %v304
        %v306 = vand.u32 %v305, 4294901760
        %307 = vmatpush1.msra.mxu0 %v306
        %308 = vmatprep.subr.mxu0 0.0
        %309 = vmatpush1.msra.mxu0 0.0
        %310 = vmatprep.subr.mxu0 0.0
        %311 = vmatpush1.msra.mxu0 0.0
        %312 = vmatprep.subr.mxu0 0.0
        %313 = vmatpush1.msra.mxu0 0.0
        %314 = vmatprep.subr.mxu0 0.0
        %315 = vmatpush1.msra.mxu0 0.0
        %316 = vmatprep.subr.mxu0 0.0
        %317 = vmatpush1.msra.mxu0 0.0
        %318 = vmatprep.subr.mxu0 0.0
        %319 = vmatpush1.msra.mxu0 0.0
        %320 = vmatprep.subr.mxu0 0.0
        %321 = vmatpush1.msra.mxu0 0.0
        %322 = vmatprep.subr.mxu0 0.0
        %323 = vmatpush1.msra.mxu0 0.0
        %324 = vmatprep.subr.mxu0 0.0
        %325 = vmatpush1.msra.mxu0 0.0
        %326 = vmatprep.subr.mxu0 0.0
        %327 = vmatpush1.msra.mxu0 0.0
        %328 = vmatprep.subr.mxu0 0.0
        %329 = vmatpush1.msra.mxu0 0.0
        %330 = vmatprep.subr.mxu0 0.0
        %331 = vmatpush1.msra.mxu0 0.0
        %332 = vmatprep.subr.mxu0 0.0
        %333 = vmatpush1.msra.mxu0 0.0
        %334 = vmatprep.subr.mxu0 0.0
        %335 = vmatpush1.msra.mxu0 0.0
        %336 = vmatprep.subr.mxu0 0.0
        %337 = vmatpush1.msra.mxu0 0.0
        %338 = vmatprep.subr.mxu0 0.0
        %339 = vmatpush1.msra.mxu0 0.0
        %340 = vmatprep.subr.mxu0 0.0
        %341 = vmatpush1.msra.mxu0 0.0
        %342 = vmatprep.subr.mxu0 0.0
        %343 = vmatpush1.msra.mxu0 0.0
        %344 = vmatprep.subr.mxu0 0.0
        %345 = vmatpush1.msra.mxu0 0.0
        %346 = vmatprep.subr.mxu0 0.0
        %347 = vmatpush1.msra.mxu0 0.0
        %348 = vmatprep.subr.mxu0 0.0
        %349 = vmatpush1.msra.mxu0 0.0
        %350 = vmatprep.subr.mxu0 0.0
        %351 = vmatpush1.msra.mxu0 0.0
        %352 = vmatprep.subr.mxu0 0.0
        %353 = vmatpush1.msra.mxu0 0.0
        %354 = vmatprep.subr.mxu0 0.0
        %355 = vmatpush1.msra.mxu0 0.0
        %356 = vmatprep.subr.mxu0 0.0
        %357 = vmatpush1.msra.mxu0 0.0
        %358 = vmatprep.subr.mxu0 0.0
        %359 = vmatpush1.msra.mxu0 0.0
        %360 = vmatprep.subr.mxu0 0.0
        %361 = vmatpush1.msra.mxu0 0.0
        %362 = vmatprep.subr.mxu0 0.0
        %363 = vmatpush1.msra.mxu0 0.0
        %364 = vmatprep.subr.mxu0 0.0
        %365 = vmatpush1.msra.mxu0 0.0
        %366 = vmatprep.subr.mxu0 0.0
        %367 = vmatpush1.msra.mxu0 0.0
        %368 = vmatprep.subr.mxu0 0.0
        %369 = vmatpush1.msra.mxu0 0.0
        %370 = vmatprep.mubr.f32.mxu0 0.0
        %v371 = vand.u32 %v223, 4294901760
        %372 = vmatmul.mubr.f32.gmra.mrb[0].mxu0 %v371
        %v373 = vpop.f32.mrb[0].mxu0
        %v374 = vadd.f32 %v298, %v373
        %v375 = vpop.f32.mrb[0].mxu0
        %376 = vdwg.mxu0
        %377 = vmatprep.subr.mxu0 0.0
        %v378 = vand.u32 %v220, 4294901760
        %v379 = vsub.f32 %v220, %v378
        %380 = vmatpush1.msra.mxu0 %v379
        %381 = vmatprep.subr.mxu0 0.0
        %382 = vmatpush1.msra.mxu0 0.0
        %383 = vmatprep.subr.mxu0 0.0
        %384 = vmatpush1.msra.mxu0 0.0
        %385 = vmatprep.subr.mxu0 0.0
        %386 = vmatpush1.msra.mxu0 0.0
        %387 = vmatprep.subr.mxu0 0.0
        %388 = vmatpush1.msra.mxu0 0.0
        %389 = vmatprep.subr.mxu0 0.0
        %390 = vmatpush1.msra.mxu0 0.0
        %391 = vmatprep.subr.mxu0 0.0
        %392 = vmatpush1.msra.mxu0 0.0
        %393 = vmatprep.subr.mxu0 0.0
        %394 = vmatpush1.msra.mxu0 0.0
        %395 = vmatprep.subr.mxu0 0.0
        %396 = vmatpush1.msra.mxu0 0.0
        %397 = vmatprep.subr.mxu0 0.0
        %398 = vmatpush1.msra.mxu0 0.0
        %399 = vmatprep.subr.mxu0 0.0
        %400 = vmatpush1.msra.mxu0 0.0
        %401 = vmatprep.subr.mxu0 0.0
        %402 = vmatpush1.msra.mxu0 0.0
        %403 = vmatprep.subr.mxu0 0.0
        %404 = vmatpush1.msra.mxu0 0.0
        %405 = vmatprep.subr.mxu0 0.0
        %406 = vmatpush1.msra.mxu0 0.0
        %407 = vmatprep.subr.mxu0 0.0
        %408 = vmatpush1.msra.mxu0 0.0
        %409 = vmatprep.subr.mxu0 0.0
        %410 = vmatpush1.msra.mxu0 0.0
        %411 = vmatprep.subr.mxu0 0.0
        %412 = vmatpush1.msra.mxu0 0.0
        %413 = vmatprep.subr.mxu0 0.0
        %414 = vmatpush1.msra.mxu0 0.0
        %415 = vmatprep.subr.mxu0 0.0
        %416 = vmatpush1.msra.mxu0 0.0
        %417 = vmatprep.subr.mxu0 0.0
        %418 = vmatpush1.msra.mxu0 0.0
        %419 = vmatprep.subr.mxu0 0.0
        %420 = vmatpush1.msra.mxu0 0.0
        %421 = vmatprep.subr.mxu0 0.0
        %422 = vmatpush1.msra.mxu0 0.0
        %423 = vmatprep.subr.mxu0 0.0
        %424 = vmatpush1.msra.mxu0 0.0
        %425 = vmatprep.subr.mxu0 0.0
        %426 = vmatpush1.msra.mxu0 0.0
        %427 = vmatprep.subr.mxu0 0.0
        %428 = vmatpush1.msra.mxu0 0.0
        %429 = vmatprep.subr.mxu0 0.0
        %430 = vmatpush1.msra.mxu0 0.0
        %431 = vmatprep.subr.mxu0 0.0
        %432 = vmatpush1.msra.mxu0 0.0
        %433 = vmatprep.subr.mxu0 0.0
        %434 = vmatpush1.msra.mxu0 0.0
        %435 = vmatprep.subr.mxu0 0.0
        %436 = vmatpush1.msra.mxu0 0.0
        %437 = vmatprep.subr.mxu0 0.0
        %438 = vmatpush1.msra.mxu0 0.0
        %439 = vmatprep.subr.mxu0 0.0
        %440 = vmatpush1.msra.mxu0 0.0
        %441 = vmatprep.subr.mxu0 0.0
        %442 = vmatpush1.msra.mxu0 0.0
        %443 = vmatprep.mubr.f32.mxu0 0.0
        %v444 = vand.u32 %v223, 4294901760
        %v445 = vsub.f32 %v223, %v444
        %446 = vmatmul.mubr.f32.gmra.mrb[0].mxu0 %v445
        %v447 = vpop.f32.mrb[0].mxu0
        %v448 = vadd.f32 %v374, %v447
        %v449 = vpop.f32.mrb[0].mxu0
        %450 = vdwg.mxu0
        %451 = vmatprep.subr.mxu0 0.0
        %v452 = vand.u32 %v220, 4294901760
        %453 = vmatpush1.msra.mxu0 %v452
        %454 = vmatprep.subr.mxu0 0.0
        %455 = vmatpush1.msra.mxu0 0.0
        %456 = vmatprep.subr.mxu0 0.0
        %457 = vmatpush1.msra.mxu0 0.0
        %458 = vmatprep.subr.mxu0 0.0
        %459 = vmatpush1.msra.mxu0 0.0
        %460 = vmatprep.subr.mxu0 0.0
        %461 = vmatpush1.msra.mxu0 0.0
        %462 = vmatprep.subr.mxu0 0.0
        %463 = vmatpush1.msra.mxu0 0.0
        %464 = vmatprep.subr.mxu0 0.0
        %465 = vmatpush1.msra.mxu0 0.0
        %466 = vmatprep.subr.mxu0 0.0
        %467 = vmatpush1.msra.mxu0 0.0
        %468 = vmatprep.subr.mxu0 0.0
        %469 = vmatpush1.msra.mxu0 0.0
        %470 = vmatprep.subr.mxu0 0.0
        %471 = vmatpush1.msra.mxu0 0.0
        %472 = vmatprep.subr.mxu0 0.0
        %473 = vmatpush1.msra.mxu0 0.0
        %474 = vmatprep.subr.mxu0 0.0
        %475 = vmatpush1.msra.mxu0 0.0
        %476 = vmatprep.subr.mxu0 0.0
        %477 = vmatpush1.msra.mxu0 0.0
        %478 = vmatprep.subr.mxu0 0.0
        %479 = vmatpush1.msra.mxu0 0.0
        %480 = vmatprep.subr.mxu0 0.0
        %481 = vmatpush1.msra.mxu0 0.0
        %482 = vmatprep.subr.mxu0 0.0
        %483 = vmatpush1.msra.mxu0 0.0
        %484 = vmatprep.subr.mxu0 0.0
        %485 = vmatpush1.msra.mxu0 0.0
        %486 = vmatprep.subr.mxu0 0.0
        %487 = vmatpush1.msra.mxu0 0.0
        %488 = vmatprep.subr.mxu0 0.0
        %489 = vmatpush1.msra.mxu0 0.0
        %490 = vmatprep.subr.mxu0 0.0
        %491 = vmatpush1.msra.mxu0 0.0
        %492 = vmatprep.subr.mxu0 0.0
        %493 = vmatpush1.msra.mxu0 0.0
        %494 = vmatprep.subr.mxu0 0.0
        %495 = vmatpush1.msra.mxu0 0.0
        %496 = vmatprep.subr.mxu0 0.0
        %497 = vmatpush1.msra.mxu0 0.0
        %498 = vmatprep.subr.mxu0 0.0
        %499 = vmatpush1.msra.mxu0 0.0
        %500 = vmatprep.subr.mxu0 0.0
        %501 = vmatpush1.msra.mxu0 0.0
        %502 = vmatprep.subr.mxu0 0.0
        %503 = vmatpush1.msra.mxu0 0.0
        %504 = vmatprep.subr.mxu0 0.0
        %505 = vmatpush1.msra.mxu0 0.0
        %506 = vmatprep.subr.mxu0 0.0
        %507 = vmatpush1.msra.mxu0 0.0
        %508 = vmatprep.subr.mxu0 0.0
        %509 = vmatpush1.msra.mxu0 0.0
        %510 = vmatprep.subr.mxu0 0.0
        %511 = vmatpush1.msra.mxu0 0.0
        %512 = vmatprep.subr.mxu0 0.0
        %513 = vmatpush1.msra.mxu0 0.0
        %514 = vmatprep.subr.mxu0 0.0
        %515 = vmatpush1.msra.mxu0 0.0
        %516 = vmatprep.mubr.f32.mxu0 0.0
        %v517 = vand.u32 %v223, 4294901760
        %v518 = vsub.f32 %v223, %v517
        %v519 = vand.u32 %v518, 4294901760
        %520 = vmatmul.mubr.f32.gmra.mrb[0].mxu0 %v519
        %v521 = vpop.f32.mrb[0].mxu0
        %v522 = vadd.f32 %v448, %v521
        %v523 = vpop.f32.mrb[0].mxu0
        %524 = vdwg.mxu0
        %525 = vmatprep.subr.mxu0 0.0
        %v526 = vand.u32 %v220, 4294901760
        %v527 = vsub.f32 %v220, %v526
        %v528 = vand.u32 %v527, 4294901760
        %529 = vmatpush1.msra.mxu0 %v528
        %530 = vmatprep.subr.mxu0 0.0
        %531 = vmatpush1.msra.mxu0 0.0
        %532 = vmatprep.subr.mxu0 0.0
        %533 = vmatpush1.msra.mxu0 0.0
        %534 = vmatprep.subr.mxu0 0.0
        %535 = vmatpush1.msra.mxu0 0.0
        %536 = vmatprep.subr.mxu0 0.0
        %537 = vmatpush1.msra.mxu0 0.0
        %538 = vmatprep.subr.mxu0 0.0
        %539 = vmatpush1.msra.mxu0 0.0
        %540 = vmatprep.subr.mxu0 0.0
        %541 = vmatpush1.msra.mxu0 0.0
        %542 = vmatprep.subr.mxu0 0.0
        %543 = vmatpush1.msra.mxu0 0.0
        %544 = vmatprep.subr.mxu0 0.0
        %545 = vmatpush1.msra.mxu0 0.0
        %546 = vmatprep.subr.mxu0 0.0
        %547 = vmatpush1.msra.mxu0 0.0
        %548 = vmatprep.subr.mxu0 0.0
        %549 = vmatpush1.msra.mxu0 0.0
        %550 = vmatprep.subr.mxu0 0.0
        %551 = vmatpush1.msra.mxu0 0.0
        %552 = vmatprep.subr.mxu0 0.0
        %553 = vmatpush1.msra.mxu0 0.0
        %554 = vmatprep.subr.mxu0 0.0
        %555 = vmatpush1.msra.mxu0 0.0
        %556 = vmatprep.subr.mxu0 0.0
        %557 = vmatpush1.msra.mxu0 0.0
        %558 = vmatprep.subr.mxu0 0.0
        %559 = vmatpush1.msra.mxu0 0.0
        %560 = vmatprep.subr.mxu0 0.0
        %561 = vmatpush1.msra.mxu0 0.0
        %562 = vmatprep.subr.mxu0 0.0
        %563 = vmatpush1.msra.mxu0 0.0
        %564 = vmatprep.subr.mxu0 0.0
        %565 = vmatpush1.msra.mxu0 0.0
        %566 = vmatprep.subr.mxu0 0.0
        %567 = vmatpush1.msra.mxu0 0.0
        %568 = vmatprep.subr.mxu0 0.0
        %569 = vmatpush1.msra.mxu0 0.0
        %570 = vmatprep.subr.mxu0 0.0
        %571 = vmatpush1.msra.mxu0 0.0
        %572 = vmatprep.subr.mxu0 0.0
        %573 = vmatpush1.msra.mxu0 0.0
        %574 = vmatprep.subr.mxu0 0.0
        %575 = vmatpush1.msra.mxu0 0.0
        %576 = vmatprep.subr.mxu0 0.0
        %577 = vmatpush1.msra.mxu0 0.0
        %578 = vmatprep.subr.mxu0 0.0
        %579 = vmatpush1.msra.mxu0 0.0
        %580 = vmatprep.subr.mxu0 0.0
        %581 = vmatpush1.msra.mxu0 0.0
        %582 = vmatprep.subr.mxu0 0.0
        %583 = vmatpush1.msra.mxu0 0.0
        %584 = vmatprep.subr.mxu0 0.0
        %585 = vmatpush1.msra.mxu0 0.0
        %586 = vmatprep.subr.mxu0 0.0
        %587 = vmatpush1.msra.mxu0 0.0
        %588 = vmatprep.subr.mxu0 0.0
        %589 = vmatpush1.msra.mxu0 0.0
        %590 = vmatprep.subr.mxu0 0.0
        %591 = vmatpush1.msra.mxu0 0.0
        %592 = vmatprep.mubr.f32.mxu0 0.0
        %v593 = vand.u32 %v223, 4294901760
        %594 = vmatmul.mubr.f32.gmra.mrb[0].mxu0 %v593
        %v595 = vpop.f32.mrb[0].mxu0
        %v596 = vadd.f32 %v522, %v595
        %v597 = vpop.f32.mrb[0].mxu0
        %598 = vdwg.mxu0
        %599 = vmatprep.subr.mxu0 0.0
        %v600 = vand.u32 %v220, 4294901760
        %601 = vmatpush1.msra.mxu0 %v600
        %602 = vmatprep.subr.mxu0 0.0
        %603 = vmatpush1.msra.mxu0 0.0
        %604 = vmatprep.subr.mxu0 0.0
        %605 = vmatpush1.msra.mxu0 0.0
        %606 = vmatprep.subr.mxu0 0.0
        %607 = vmatpush1.msra.mxu0 0.0
        %608 = vmatprep.subr.mxu0 0.0
        %609 = vmatpush1.msra.mxu0 0.0
        %610 = vmatprep.subr.mxu0 0.0
        %611 = vmatpush1.msra.mxu0 0.0
        %612 = vmatprep.subr.mxu0 0.0
        %613 = vmatpush1.msra.mxu0 0.0
        %614 = vmatprep.subr.mxu0 0.0
        %615 = vmatpush1.msra.mxu0 0.0
        %616 = vmatprep.subr.mxu0 0.0
        %617 = vmatpush1.msra.mxu0 0.0
        %618 = vmatprep.subr.mxu0 0.0
        %619 = vmatpush1.msra.mxu0 0.0
        %620 = vmatprep.subr.mxu0 0.0
        %621 = vmatpush1.msra.mxu0 0.0
        %622 = vmatprep.subr.mxu0 0.0
        %623 = vmatpush1.msra.mxu0 0.0
        %624 = vmatprep.subr.mxu0 0.0
        %625 = vmatpush1.msra.mxu0 0.0
        %626 = vmatprep.subr.mxu0 0.0
        %627 = vmatpush1.msra.mxu0 0.0
        %628 = vmatprep.subr.mxu0 0.0
        %629 = vmatpush1.msra.mxu0 0.0
        %630 = vmatprep.subr.mxu0 0.0
        %631 = vmatpush1.msra.mxu0 0.0
        %632 = vmatprep.subr.mxu0 0.0
        %633 = vmatpush1.msra.mxu0 0.0
        %634 = vmatprep.subr.mxu0 0.0
        %635 = vmatpush1.msra.mxu0 0.0
        %636 = vmatprep.subr.mxu0 0.0
        %637 = vmatpush1.msra.mxu0 0.0
        %638 = vmatprep.subr.mxu0 0.0
        %639 = vmatpush1.msra.mxu0 0.0
        %640 = vmatprep.subr.mxu0 0.0
        %641 = vmatpush1.msra.mxu0 0.0
        %642 = vmatprep.subr.mxu0 0.0
        %643 = vmatpush1.msra.mxu0 0.0
        %644 = vmatprep.subr.mxu0 0.0
        %645 = vmatpush1.msra.mxu0 0.0
        %646 = vmatprep.subr.mxu0 0.0
        %647 = vmatpush1.msra.mxu0 0.0
        %648 = vmatprep.subr.mxu0 0.0
        %649 = vmatpush1.msra.mxu0 0.0
        %650 = vmatprep.subr.mxu0 0.0
        %651 = vmatpush1.msra.mxu0 0.0
        %652 = vmatprep.subr.mxu0 0.0
        %653 = vmatpush1.msra.mxu0 0.0
        %654 = vmatprep.subr.mxu0 0.0
        %655 = vmatpush1.msra.mxu0 0.0
        %656 = vmatprep.subr.mxu0 0.0
        %657 = vmatpush1.msra.mxu0 0.0
        %658 = vmatprep.subr.mxu0 0.0
        %659 = vmatpush1.msra.mxu0 0.0
        %660 = vmatprep.subr.mxu0 0.0
        %661 = vmatpush1.msra.mxu0 0.0
        %662 = vmatprep.subr.mxu0 0.0
        %663 = vmatpush1.msra.mxu0 0.0
        %664 = vmatprep.mubr.f32.mxu0 0.0
        %v665 = vand.u32 %v223, 4294901760
        %666 = vmatmul.mubr.f32.gmra.mrb[0].mxu0 %v665
        %v667 = vpop.f32.mrb[0].mxu0
        %v668 = vadd.f32 %v596, %v667
        %v669 = vpop.f32.mrb[0].mxu0
        %670 = vdwg.mxu0
        %s671 = scalar_lea.vmem %s184, 8 [#allocation2]
        %v672 = vld [vmem:[%s671] sm:$0xff]
        %s673 = scalar_lea.vmem %s193, 8 [#allocation5]
        %v674 = vld [vmem:[%s673] sm:$0xff]
        %v676 = vsel %vm221, %v672, 0
        %678 = vmatprep.subr.mxu0 0.0
        %v679 = vand.u32 %v674, 4294901760
        %680 = vmatpush1.msra.mxu0 %v679
        %681 = vmatprep.subr.mxu0 0.0
        %682 = vmatpush1.msra.mxu0 0.0
        %683 = vmatprep.subr.mxu0 0.0
        %684 = vmatpush1.msra.mxu0 0.0
        %685 = vmatprep.subr.mxu0 0.0
        %686 = vmatpush1.msra.mxu0 0.0
        %687 = vmatprep.subr.mxu0 0.0
        %688 = vmatpush1.msra.mxu0 0.0
        %689 = vmatprep.subr.mxu0 0.0
        %690 = vmatpush1.msra.mxu0 0.0
        %691 = vmatprep.subr.mxu0 0.0
        %692 = vmatpush1.msra.mxu0 0.0
        %693 = vmatprep.subr.mxu0 0.0
        %694 = vmatpush1.msra.mxu0 0.0
        %695 = vmatprep.subr.mxu0 0.0
        %696 = vmatpush1.msra.mxu0 0.0
        %697 = vmatprep.subr.mxu0 0.0
        %698 = vmatpush1.msra.mxu0 0.0
        %699 = vmatprep.subr.mxu0 0.0
        %700 = vmatpush1.msra.mxu0 0.0
        %701 = vmatprep.subr.mxu0 0.0
        %702 = vmatpush1.msra.mxu0 0.0
        %703 = vmatprep.subr.mxu0 0.0
        %704 = vmatpush1.msra.mxu0 0.0
        %705 = vmatprep.subr.mxu0 0.0
        %706 = vmatpush1.msra.mxu0 0.0
        %707 = vmatprep.subr.mxu0 0.0
        %708 = vmatpush1.msra.mxu0 0.0
        %709 = vmatprep.subr.mxu0 0.0
        %710 = vmatpush1.msra.mxu0 0.0
        %711 = vmatprep.subr.mxu0 0.0
        %712 = vmatpush1.msra.mxu0 0.0
        %713 = vmatprep.subr.mxu0 0.0
        %714 = vmatpush1.msra.mxu0 0.0
        %715 = vmatprep.subr.mxu0 0.0
        %716 = vmatpush1.msra.mxu0 0.0
        %717 = vmatprep.subr.mxu0 0.0
        %718 = vmatpush1.msra.mxu0 0.0
        %719 = vmatprep.subr.mxu0 0.0
        %720 = vmatpush1.msra.mxu0 0.0
        %721 = vmatprep.subr.mxu0 0.0
        %722 = vmatpush1.msra.mxu0 0.0
        %723 = vmatprep.subr.mxu0 0.0
        %724 = vmatpush1.msra.mxu0 0.0
        %725 = vmatprep.subr.mxu0 0.0
        %726 = vmatpush1.msra.mxu0 0.0
        %727 = vmatprep.subr.mxu0 0.0
        %728 = vmatpush1.msra.mxu0 0.0
        %729 = vmatprep.subr.mxu0 0.0
        %730 = vmatpush1.msra.mxu0 0.0
        %731 = vmatprep.subr.mxu0 0.0
        %732 = vmatpush1.msra.mxu0 0.0
        %733 = vmatprep.subr.mxu0 0.0
        %734 = vmatpush1.msra.mxu0 0.0
        %735 = vmatprep.subr.mxu0 0.0
        %736 = vmatpush1.msra.mxu0 0.0
        %737 = vmatprep.subr.mxu0 0.0
        %738 = vmatpush1.msra.mxu0 0.0
        %739 = vmatprep.subr.mxu0 0.0
        %740 = vmatpush1.msra.mxu0 0.0
        %741 = vmatprep.subr.mxu0 0.0
        %742 = vmatpush1.msra.mxu0 0.0
        %743 = vmatprep.mubr.f32.mxu0 0.0
        %v744 = vand.u32 %v676, 4294901760
        %v745 = vsub.f32 %v676, %v744
        %v746 = vand.u32 %v745, 4294901760
        %v747 = vsub.f32 %v745, %v746
        %v748 = vand.u32 %v747, 4294901760
        %749 = vmatmul.mubr.f32.gmra.mrb[0].mxu0 %v748
        %v750 = vpop.f32.mrb[0].mxu0
        %v751 = vadd.f32 0.0, %v750
        %v752 = vpop.f32.mrb[0].mxu0
        %753 = vdwg.mxu0
        %754 = vmatprep.subr.mxu0 0.0
        %v755 = vand.u32 %v674, 4294901760
        %v756 = vsub.f32 %v674, %v755
        %v757 = vand.u32 %v756, 4294901760
        %v758 = vsub.f32 %v756, %v757
        %v759 = vand.u32 %v758, 4294901760
        %760 = vmatpush1.msra.mxu0 %v759
        %761 = vmatprep.subr.mxu0 0.0
        %762 = vmatpush1.msra.mxu0 0.0
        %763 = vmatprep.subr.mxu0 0.0
        %764 = vmatpush1.msra.mxu0 0.0
        %765 = vmatprep.subr.mxu0 0.0
        %766 = vmatpush1.msra.mxu0 0.0
        %767 = vmatprep.subr.mxu0 0.0
        %768 = vmatpush1.msra.mxu0 0.0
        %769 = vmatprep.subr.mxu0 0.0
        %770 = vmatpush1.msra.mxu0 0.0
        %771 = vmatprep.subr.mxu0 0.0
        %772 = vmatpush1.msra.mxu0 0.0
        %773 = vmatprep.subr.mxu0 0.0
        %774 = vmatpush1.msra.mxu0 0.0
        %775 = vmatprep.subr.mxu0 0.0
        %776 = vmatpush1.msra.mxu0 0.0
        %777 = vmatprep.subr.mxu0 0.0
        %778 = vmatpush1.msra.mxu0 0.0
        %779 = vmatprep.subr.mxu0 0.0
        %780 = vmatpush1.msra.mxu0 0.0
        %781 = vmatprep.subr.mxu0 0.0
        %782 = vmatpush1.msra.mxu0 0.0
        %783 = vmatprep.subr.mxu0 0.0
        %784 = vmatpush1.msra.mxu0 0.0
        %785 = vmatprep.subr.mxu0 0.0
        %786 = vmatpush1.msra.mxu0 0.0
        %787 = vmatprep.subr.mxu0 0.0
        %788 = vmatpush1.msra.mxu0 0.0
        %789 = vmatprep.subr.mxu0 0.0
        %790 = vmatpush1.msra.mxu0 0.0
        %791 = vmatprep.subr.mxu0 0.0
        %792 = vmatpush1.msra.mxu0 0.0
        %793 = vmatprep.subr.mxu0 0.0
        %794 = vmatpush1.msra.mxu0 0.0
        %795 = vmatprep.subr.mxu0 0.0
        %796 = vmatpush1.msra.mxu0 0.0
        %797 = vmatprep.subr.mxu0 0.0
        %798 = vmatpush1.msra.mxu0 0.0
        %799 = vmatprep.subr.mxu0 0.0
        %800 = vmatpush1.msra.mxu0 0.0
        %801 = vmatprep.subr.mxu0 0.0
        %802 = vmatpush1.msra.mxu0 0.0
        %803 = vmatprep.subr.mxu0 0.0
        %804 = vmatpush1.msra.mxu0 0.0
        %805 = vmatprep.subr.mxu0 0.0
        %806 = vmatpush1.msra.mxu0 0.0
        %807 = vmatprep.subr.mxu0 0.0
        %808 = vmatpush1.msra.mxu0 0.0
        %809 = vmatprep.subr.mxu0 0.0
        %810 = vmatpush1.msra.mxu0 0.0
        %811 = vmatprep.subr.mxu0 0.0
        %812 = vmatpush1.msra.mxu0 0.0
        %813 = vmatprep.subr.mxu0 0.0
        %814 = vmatpush1.msra.mxu0 0.0
        %815 = vmatprep.subr.mxu0 0.0
        %816 = vmatpush1.msra.mxu0 0.0
        %817 = vmatprep.subr.mxu0 0.0
        %818 = vmatpush1.msra.mxu0 0.0
        %819 = vmatprep.subr.mxu0 0.0
        %820 = vmatpush1.msra.mxu0 0.0
        %821 = vmatprep.subr.mxu0 0.0
        %822 = vmatpush1.msra.mxu0 0.0
        %823 = vmatprep.mubr.f32.mxu0 0.0
        %v824 = vand.u32 %v676, 4294901760
        %825 = vmatmul.mubr.f32.gmra.mrb[0].mxu0 %v824
        %v826 = vpop.f32.mrb[0].mxu0
        %v827 = vadd.f32 %v751, %v826
        %v828 = vpop.f32.mrb[0].mxu0
        %829 = vdwg.mxu0
        %830 = vmatprep.subr.mxu0 0.0
        %v831 = vand.u32 %v674, 4294901760
        %v832 = vsub.f32 %v674, %v831
        %833 = vmatpush1.msra.mxu0 %v832
        %834 = vmatprep.subr.mxu0 0.0
        %835 = vmatpush1.msra.mxu0 0.0
        %836 = vmatprep.subr.mxu0 0.0
        %837 = vmatpush1.msra.mxu0 0.0
        %838 = vmatprep.subr.mxu0 0.0
        %839 = vmatpush1.msra.mxu0 0.0
        %840 = vmatprep.subr.mxu0 0.0
        %841 = vmatpush1.msra.mxu0 0.0
        %842 = vmatprep.subr.mxu0 0.0
        %843 = vmatpush1.msra.mxu0 0.0
        %844 = vmatprep.subr.mxu0 0.0
        %845 = vmatpush1.msra.mxu0 0.0
        %846 = vmatprep.subr.mxu0 0.0
        %847 = vmatpush1.msra.mxu0 0.0
        %848 = vmatprep.subr.mxu0 0.0
        %849 = vmatpush1.msra.mxu0 0.0
        %850 = vmatprep.subr.mxu0 0.0
        %851 = vmatpush1.msra.mxu0 0.0
        %852 = vmatprep.subr.mxu0 0.0
        %853 = vmatpush1.msra.mxu0 0.0
        %854 = vmatprep.subr.mxu0 0.0
        %855 = vmatpush1.msra.mxu0 0.0
        %856 = vmatprep.subr.mxu0 0.0
        %857 = vmatpush1.msra.mxu0 0.0
        %858 = vmatprep.subr.mxu0 0.0
        %859 = vmatpush1.msra.mxu0 0.0
        %860 = vmatprep.subr.mxu0 0.0
        %861 = vmatpush1.msra.mxu0 0.0
        %862 = vmatprep.subr.mxu0 0.0
        %863 = vmatpush1.msra.mxu0 0.0
        %864 = vmatprep.subr.mxu0 0.0
        %865 = vmatpush1.msra.mxu0 0.0
        %866 = vmatprep.subr.mxu0 0.0
        %867 = vmatpush1.msra.mxu0 0.0
        %868 = vmatprep.subr.mxu0 0.0
        %869 = vmatpush1.msra.mxu0 0.0
        %870 = vmatprep.subr.mxu0 0.0
        %871 = vmatpush1.msra.mxu0 0.0
        %872 = vmatprep.subr.mxu0 0.0
        %873 = vmatpush1.msra.mxu0 0.0
        %874 = vmatprep.subr.mxu0 0.0
        %875 = vmatpush1.msra.mxu0 0.0
        %876 = vmatprep.subr.mxu0 0.0
        %877 = vmatpush1.msra.mxu0 0.0
        %878 = vmatprep.subr.mxu0 0.0
        %879 = vmatpush1.msra.mxu0 0.0
        %880 = vmatprep.subr.mxu0 0.0
        %881 = vmatpush1.msra.mxu0 0.0
        %882 = vmatprep.subr.mxu0 0.0
        %883 = vmatpush1.msra.mxu0 0.0
        %884 = vmatprep.subr.mxu0 0.0
        %885 = vmatpush1.msra.mxu0 0.0
        %886 = vmatprep.subr.mxu0 0.0
        %887 = vmatpush1.msra.mxu0 0.0
        %888 = vmatprep.subr.mxu0 0.0
        %889 = vmatpush1.msra.mxu0 0.0
        %890 = vmatprep.subr.mxu0 0.0
        %891 = vmatpush1.msra.mxu0 0.0
        %892 = vmatprep.subr.mxu0 0.0
        %893 = vmatpush1.msra.mxu0 0.0
        %894 = vmatprep.subr.mxu0 0.0
        %895 = vmatpush1.msra.mxu0 0.0
        %896 = vmatprep.mubr.f32.mxu0 0.0
        %v897 = vand.u32 %v676, 4294901760
        %v898 = vsub.f32 %v676, %v897
        %899 = vmatmul.mubr.f32.gmra.mrb[0].mxu0 %v898
        %v900 = vpop.f32.mrb[0].mxu0
        %v901 = vadd.f32 %v827, %v900
        %v902 = vpop.f32.mrb[0].mxu0
        %903 = vdwg.mxu0
        %904 = vmatprep.subr.mxu0 0.0
        %v905 = vand.u32 %v674, 4294901760
        %906 = vmatpush1.msra.mxu0 %v905
        %907 = vmatprep.subr.mxu0 0.0
        %908 = vmatpush1.msra.mxu0 0.0
        %909 = vmatprep.subr.mxu0 0.0
        %910 = vmatpush1.msra.mxu0 0.0
        %911 = vmatprep.subr.mxu0 0.0
        %912 = vmatpush1.msra.mxu0 0.0
        %913 = vmatprep.subr.mxu0 0.0
        %914 = vmatpush1.msra.mxu0 0.0
        %915 = vmatprep.subr.mxu0 0.0
        %916 = vmatpush1.msra.mxu0 0.0
        %917 = vmatprep.subr.mxu0 0.0
        %918 = vmatpush1.msra.mxu0 0.0
        %919 = vmatprep.subr.mxu0 0.0
        %920 = vmatpush1.msra.mxu0 0.0
        %921 = vmatprep.subr.mxu0 0.0
        %922 = vmatpush1.msra.mxu0 0.0
        %923 = vmatprep.subr.mxu0 0.0
        %924 = vmatpush1.msra.mxu0 0.0
        %925 = vmatprep.subr.mxu0 0.0
        %926 = vmatpush1.msra.mxu0 0.0
        %927 = vmatprep.subr.mxu0 0.0
        %928 = vmatpush1.msra.mxu0 0.0
        %929 = vmatprep.subr.mxu0 0.0
        %930 = vmatpush1.msra.mxu0 0.0
        %931 = vmatprep.subr.mxu0 0.0
        %932 = vmatpush1.msra.mxu0 0.0
        %933 = vmatprep.subr.mxu0 0.0
        %934 = vmatpush1.msra.mxu0 0.0
        %935 = vmatprep.subr.mxu0 0.0
        %936 = vmatpush1.msra.mxu0 0.0
        %937 = vmatprep.subr.mxu0 0.0
        %938 = vmatpush1.msra.mxu0 0.0
        %939 = vmatprep.subr.mxu0 0.0
        %940 = vmatpush1.msra.mxu0 0.0
        %941 = vmatprep.subr.mxu0 0.0
        %942 = vmatpush1.msra.mxu0 0.0
        %943 = vmatprep.subr.mxu0 0.0
        %944 = vmatpush1.msra.mxu0 0.0
        %945 = vmatprep.subr.mxu0 0.0
        %946 = vmatpush1.msra.mxu0 0.0
        %947 = vmatprep.subr.mxu0 0.0
        %948 = vmatpush1.msra.mxu0 0.0
        %949 = vmatprep.subr.mxu0 0.0
        %950 = vmatpush1.msra.mxu0 0.0
        %951 = vmatprep.subr.mxu0 0.0
        %952 = vmatpush1.msra.mxu0 0.0
        %953 = vmatprep.subr.mxu0 0.0
        %954 = vmatpush1.msra.mxu0 0.0
        %955 = vmatprep.subr.mxu0 0.0
        %956 = vmatpush1.msra.mxu0 0.0
        %957 = vmatprep.subr.mxu0 0.0
        %958 = vmatpush1.msra.mxu0 0.0
        %959 = vmatprep.subr.mxu0 0.0
        %960 = vmatpush1.msra.mxu0 0.0
        %961 = vmatprep.subr.mxu0 0.0
        %962 = vmatpush1.msra.mxu0 0.0
        %963 = vmatprep.subr.mxu0 0.0
        %964 = vmatpush1.msra.mxu0 0.0
        %965 = vmatprep.subr.mxu0 0.0
        %966 = vmatpush1.msra.mxu0 0.0
        %967 = vmatprep.subr.mxu0 0.0
        %968 = vmatpush1.msra.mxu0 0.0
        %969 = vmatprep.mubr.f32.mxu0 0.0
        %v970 = vand.u32 %v676, 4294901760
        %v971 = vsub.f32 %v676, %v970
        %v972 = vand.u32 %v971, 4294901760
        %973 = vmatmul.mubr.f32.gmra.mrb[0].mxu0 %v972
        %v974 = vpop.f32.mrb[0].mxu0
        %v975 = vadd.f32 %v901, %v974
        %v976 = vpop.f32.mrb[0].mxu0
        %977 = vdwg.mxu0
        %978 = vmatprep.subr.mxu0 0.0
        %v979 = vand.u32 %v674, 4294901760
        %v980 = vsub.f32 %v674, %v979
        %v981 = vand.u32 %v980, 4294901760
        %982 = vmatpush1.msra.mxu0 %v981
        %983 = vmatprep.subr.mxu0 0.0
        %984 = vmatpush1.msra.mxu0 0.0
        %985 = vmatprep.subr.mxu0 0.0
        %986 = vmatpush1.msra.mxu0 0.0
        %987 = vmatprep.subr.mxu0 0.0
        %988 = vmatpush1.msra.mxu0 0.0
        %989 = vmatprep.subr.mxu0 0.0
        %990 = vmatpush1.msra.mxu0 0.0
        %991 = vmatprep.subr.mxu0 0.0
        %992 = vmatpush1.msra.mxu0 0.0
        %993 = vmatprep.subr.mxu0 0.0
        %994 = vmatpush1.msra.mxu0 0.0
        %995 = vmatprep.subr.mxu0 0.0
        %996 = vmatpush1.msra.mxu0 0.0
        %997 = vmatprep.subr.mxu0 0.0
        %998 = vmatpush1.msra.mxu0 0.0
        %999 = vmatprep.subr.mxu0 0.0
        %1000 = vmatpush1.msra.mxu0 0.0
        %1001 = vmatprep.subr.mxu0 0.0
        %1002 = vmatpush1.msra.mxu0 0.0
        %1003 = vmatprep.subr.mxu0 0.0
        %1004 = vmatpush1.msra.mxu0 0.0
        %1005 = vmatprep.subr.mxu0 0.0
        %1006 = vmatpush1.msra.mxu0 0.0
        %1007 = vmatprep.subr.mxu0 0.0
        %1008 = vmatpush1.msra.mxu0 0.0
        %1009 = vmatprep.subr.mxu0 0.0
        %1010 = vmatpush1.msra.mxu0 0.0
        %1011 = vmatprep.subr.mxu0 0.0
        %1012 = vmatpush1.msra.mxu0 0.0
        %1013 = vmatprep.subr.mxu0 0.0
        %1014 = vmatpush1.msra.mxu0 0.0
        %1015 = vmatprep.subr.mxu0 0.0
        %1016 = vmatpush1.msra.mxu0 0.0
        %1017 = vmatprep.subr.mxu0 0.0
        %1018 = vmatpush1.msra.mxu0 0.0
        %1019 = vmatprep.subr.mxu0 0.0
        %1020 = vmatpush1.msra.mxu0 0.0
        %1021 = vmatprep.subr.mxu0 0.0
        %1022 = vmatpush1.msra.mxu0 0.0
        %1023 = vmatprep.subr.mxu0 0.0
        %1024 = vmatpush1.msra.mxu0 0.0
        %1025 = vmatprep.subr.mxu0 0.0
        %1026 = vmatpush1.msra.mxu0 0.0
        %1027 = vmatprep.subr.mxu0 0.0
        %1028 = vmatpush1.msra.mxu0 0.0
        %1029 = vmatprep.subr.mxu0 0.0
        %1030 = vmatpush1.msra.mxu0 0.0
        %1031 = vmatprep.subr.mxu0 0.0
        %1032 = vmatpush1.msra.mxu0 0.0
        %1033 = vmatprep.subr.mxu0 0.0
        %1034 = vmatpush1.msra.mxu0 0.0
        %1035 = vmatprep.subr.mxu0 0.0
        %1036 = vmatpush1.msra.mxu0 0.0
        %1037 = vmatprep.subr.mxu0 0.0
        %1038 = vmatpush1.msra.mxu0 0.0
        %1039 = vmatprep.subr.mxu0 0.0
        %1040 = vmatpush1.msra.mxu0 0.0
        %1041 = vmatprep.subr.mxu0 0.0
        %1042 = vmatpush1.msra.mxu0 0.0
        %1043 = vmatprep.subr.mxu0 0.0
        %1044 = vmatpush1.msra.mxu0 0.0
        %1045 = vmatprep.mubr.f32.mxu0 0.0
        %v1046 = vand.u32 %v676, 4294901760
        %1047 = vmatmul.mubr.f32.gmra.mrb[0].mxu0 %v1046
        %v1048 = vpop.f32.mrb[0].mxu0
        %v1049 = vadd.f32 %v975, %v1048
        %v1050 = vpop.f32.mrb[0].mxu0
        %1051 = vdwg.mxu0
        %1052 = vmatprep.subr.mxu0 0.0
        %v1053 = vand.u32 %v674, 4294901760
        %1054 = vmatpush1.msra.mxu0 %v1053
        %1055 = vmatprep.subr.mxu0 0.0
        %1056 = vmatpush1.msra.mxu0 0.0
        %1057 = vmatprep.subr.mxu0 0.0
        %1058 = vmatpush1.msra.mxu0 0.0
        %1059 = vmatprep.subr.mxu0 0.0
        %1060 = vmatpush1.msra.mxu0 0.0
        %1061 = vmatprep.subr.mxu0 0.0
        %1062 = vmatpush1.msra.mxu0 0.0
        %1063 = vmatprep.subr.mxu0 0.0
        %1064 = vmatpush1.msra.mxu0 0.0
        %1065 = vmatprep.subr.mxu0 0.0
        %1066 = vmatpush1.msra.mxu0 0.0
        %1067 = vmatprep.subr.mxu0 0.0
        %1068 = vmatpush1.msra.mxu0 0.0
        %1069 = vmatprep.subr.mxu0 0.0
        %1070 = vmatpush1.msra.mxu0 0.0
        %1071 = vmatprep.subr.mxu0 0.0
        %1072 = vmatpush1.msra.mxu0 0.0
        %1073 = vmatprep.subr.mxu0 0.0
        %1074 = vmatpush1.msra.mxu0 0.0
        %1075 = vmatprep.subr.mxu0 0.0
        %1076 = vmatpush1.msra.mxu0 0.0
        %1077 = vmatprep.subr.mxu0 0.0
        %1078 = vmatpush1.msra.mxu0 0.0
        %1079 = vmatprep.subr.mxu0 0.0
        %1080 = vmatpush1.msra.mxu0 0.0
        %1081 = vmatprep.subr.mxu0 0.0
        %1082 = vmatpush1.msra.mxu0 0.0
        %1083 = vmatprep.subr.mxu0 0.0
        %1084 = vmatpush1.msra.mxu0 0.0
        %1085 = vmatprep.subr.mxu0 0.0
        %1086 = vmatpush1.msra.mxu0 0.0
        %1087 = vmatprep.subr.mxu0 0.0
        %1088 = vmatpush1.msra.mxu0 0.0
        %1089 = vmatprep.subr.mxu0 0.0
        %1090 = vmatpush1.msra.mxu0 0.0
        %1091 = vmatprep.subr.mxu0 0.0
        %1092 = vmatpush1.msra.mxu0 0.0
        %1093 = vmatprep.subr.mxu0 0.0
        %1094 = vmatpush1.msra.mxu0 0.0
        %1095 = vmatprep.subr.mxu0 0.0
        %1096 = vmatpush1.msra.mxu0 0.0
        %1097 = vmatprep.subr.mxu0 0.0
        %1098 = vmatpush1.msra.mxu0 0.0
        %1099 = vmatprep.subr.mxu0 0.0
        %1100 = vmatpush1.msra.mxu0 0.0
        %1101 = vmatprep.subr.mxu0 0.0
        %1102 = vmatpush1.msra.mxu0 0.0
        %1103 = vmatprep.subr.mxu0 0.0
        %1104 = vmatpush1.msra.mxu0 0.0
        %1105 = vmatprep.subr.mxu0 0.0
        %1106 = vmatpush1.msra.mxu0 0.0
        %1107 = vmatprep.subr.mxu0 0.0
        %1108 = vmatpush1.msra.mxu0 0.0
        %1109 = vmatprep.subr.mxu0 0.0
        %1110 = vmatpush1.msra.mxu0 0.0
        %1111 = vmatprep.subr.mxu0 0.0
        %1112 = vmatpush1.msra.mxu0 0.0
        %1113 = vmatprep.subr.mxu0 0.0
        %1114 = vmatpush1.msra.mxu0 0.0
        %1115 = vmatprep.subr.mxu0 0.0
        %1116 = vmatpush1.msra.mxu0 0.0
        %1117 = vmatprep.mubr.f32.mxu0 0.0
        %v1118 = vand.u32 %v676, 4294901760
        %1119 = vmatmul.mubr.f32.gmra.mrb[0].mxu0 %v1118
        %v1120 = vpop.f32.mrb[0].mxu0
        %v1121 = vadd.f32 %v1049, %v1120
        %v1122 = vpop.f32.mrb[0].mxu0
        %1123 = vdwg.mxu0
        %s1124 = scalar_lea.vmem %s184, 16 [#allocation2]
        %v1125 = vld [vmem:[%s1124] sm:$0xff]
        %s1126 = scalar_lea.vmem %s193, 16 [#allocation5]
        %v1127 = vld [vmem:[%s1126] sm:$0xff]
        %v1129 = vsel %vm221, %v1125, 0
        %1131 = vmatprep.subr.mxu0 0.0
        %v1132 = vand.u32 %v1127, 4294901760
        %1133 = vmatpush1.msra.mxu0 %v1132
        %1134 = vmatprep.subr.mxu0 0.0
        %1135 = vmatpush1.msra.mxu0 0.0
        %1136 = vmatprep.subr.mxu0 0.0
        %1137 = vmatpush1.msra.mxu0 0.0
        %1138 = vmatprep.subr.mxu0 0.0
        %1139 = vmatpush1.msra.mxu0 0.0
        %1140 = vmatprep.subr.mxu0 0.0
        %1141 = vmatpush1.msra.mxu0 0.0
        %1142 = vmatprep.subr.mxu0 0.0
        %1143 = vmatpush1.msra.mxu0 0.0
        %1144 = vmatprep.subr.mxu0 0.0
        %1145 = vmatpush1.msra.mxu0 0.0
        %1146 = vmatprep.subr.mxu0 0.0
        %1147 = vmatpush1.msra.mxu0 0.0
        %1148 = vmatprep.subr.mxu0 0.0
        %1149 = vmatpush1.msra.mxu0 0.0
        %1150 = vmatprep.subr.mxu0 0.0
        %1151 = vmatpush1.msra.mxu0 0.0
        %1152 = vmatprep.subr.mxu0 0.0
        %1153 = vmatpush1.msra.mxu0 0.0
        %1154 = vmatprep.subr.mxu0 0.0
        %1155 = vmatpush1.msra.mxu0 0.0
        %1156 = vmatprep.subr.mxu0 0.0
        %1157 = vmatpush1.msra.mxu0 0.0
        %1158 = vmatprep.subr.mxu0 0.0
        %1159 = vmatpush1.msra.mxu0 0.0
        %1160 = vmatprep.subr.mxu0 0.0
        %1161 = vmatpush1.msra.mxu0 0.0
        %1162 = vmatprep.subr.mxu0 0.0
        %1163 = vmatpush1.msra.mxu0 0.0
        %1164 = vmatprep.subr.mxu0 0.0
        %1165 = vmatpush1.msra.mxu0 0.0
        %1166 = vmatprep.subr.mxu0 0.0
        %1167 = vmatpush1.msra.mxu0 0.0
        %1168 = vmatprep.subr.mxu0 0.0
        %1169 = vmatpush1.msra.mxu0 0.0
        %1170 = vmatprep.subr.mxu0 0.0
        %1171 = vmatpush1.msra.mxu0 0.0
        %1172 = vmatprep.subr.mxu0 0.0
        %1173 = vmatpush1.msra.mxu0 0.0
        %1174 = vmatprep.subr.mxu0 0.0
        %1175 = vmatpush1.msra.mxu0 0.0
        %1176 = vmatprep.subr.mxu0 0.0
        %1177 = vmatpush1.msra.mxu0 0.0
        %1178 = vmatprep.subr.mxu0 0.0
        %1179 = vmatpush1.msra.mxu0 0.0
        %1180 = vmatprep.subr.mxu0 0.0
        %1181 = vmatpush1.msra.mxu0 0.0
        %1182 = vmatprep.subr.mxu0 0.0
        %1183 = vmatpush1.msra.mxu0 0.0
        %1184 = vmatprep.subr.mxu0 0.0
        %1185 = vmatpush1.msra.mxu0 0.0
        %1186 = vmatprep.subr.mxu0 0.0
        %1187 = vmatpush1.msra.mxu0 0.0
        %1188 = vmatprep.subr.mxu0 0.0
        %1189 = vmatpush1.msra.mxu0 0.0
        %1190 = vmatprep.subr.mxu0 0.0
        %1191 = vmatpush1.msra.mxu0 0.0
        %1192 = vmatprep.subr.mxu0 0.0
        %1193 = vmatpush1.msra.mxu0 0.0
        %1194 = vmatprep.subr.mxu0 0.0
        %1195 = vmatpush1.msra.mxu0 0.0
        %1196 = vmatprep.mubr.f32.mxu0 0.0
        %v1197 = vand.u32 %v1129, 4294901760
        %v1198 = vsub.f32 %v1129, %v1197
        %v1199 = vand.u32 %v1198, 4294901760
        %v1200 = vsub.f32 %v1198, %v1199
        %v1201 = vand.u32 %v1200, 4294901760
        %1202 = vmatmul.mubr.f32.gmra.mrb[0].mxu0 %v1201
        %v1203 = vpop.f32.mrb[0].mxu0
        %v1204 = vadd.f32 0.0, %v1203
        %v1205 = vpop.f32.mrb[0].mxu0
        %1206 = vdwg.mxu0
        %1207 = vmatprep.subr.mxu0 0.0
        %v1208 = vand.u32 %v1127, 4294901760
        %v1209 = vsub.f32 %v1127, %v1208
        %v1210 = vand.u32 %v1209, 4294901760
        %v1211 = vsub.f32 %v1209, %v1210
        %v1212 = vand.u32 %v1211, 4294901760
        %1213 = vmatpush1.msra.mxu0 %v1212
        %1214 = vmatprep.subr.mxu0 0.0
        %1215 = vmatpush1.msra.mxu0 0.0
        %1216 = vmatprep.subr.mxu0 0.0
        %1217 = vmatpush1.msra.mxu0 0.0
        %1218 = vmatprep.subr.mxu0 0.0
        %1219 = vmatpush1.msra.mxu0 0.0
        %1220 = vmatprep.subr.mxu0 0.0
        %1221 = vmatpush1.msra.mxu0 0.0
        %1222 = vmatprep.subr.mxu0 0.0
        %1223 = vmatpush1.msra.mxu0 0.0
        %1224 = vmatprep.subr.mxu0 0.0
        %1225 = vmatpush1.msra.mxu0 0.0
        %1226 = vmatprep.subr.mxu0 0.0
        %1227 = vmatpush1.msra.mxu0 0.0
        %1228 = vmatprep.subr.mxu0 0.0
        %1229 = vmatpush1.msra.mxu0 0.0
        %1230 = vmatprep.subr.mxu0 0.0
        %1231 = vmatpush1.msra.mxu0 0.0
        %1232 = vmatprep.subr.mxu0 0.0
        %1233 = vmatpush1.msra.mxu0 0.0
        %1234 = vmatprep.subr.mxu0 0.0
        %1235 = vmatpush1.msra.mxu0 0.0
        %1236 = vmatprep.subr.mxu0 0.0
        %1237 = vmatpush1.msra.mxu0 0.0
        %1238 = vmatprep.subr.mxu0 0.0
        %1239 = vmatpush1.msra.mxu0 0.0
        %1240 = vmatprep.subr.mxu0 0.0
        %1241 = vmatpush1.msra.mxu0 0.0
        %1242 = vmatprep.subr.mxu0 0.0
        %1243 = vmatpush1.msra.mxu0 0.0
        %1244 = vmatprep.subr.mxu0 0.0
        %1245 = vmatpush1.msra.mxu0 0.0
        %1246 = vmatprep.subr.mxu0 0.0
        %1247 = vmatpush1.msra.mxu0 0.0
        %1248 = vmatprep.subr.mxu0 0.0
        %1249 = vmatpush1.msra.mxu0 0.0
        %1250 = vmatprep.subr.mxu0 0.0
        %1251 = vmatpush1.msra.mxu0 0.0
        %1252 = vmatprep.subr.mxu0 0.0
        %1253 = vmatpush1.msra.mxu0 0.0
        %1254 = vmatprep.subr.mxu0 0.0
        %1255 = vmatpush1.msra.mxu0 0.0
        %1256 = vmatprep.subr.mxu0 0.0
        %1257 = vmatpush1.msra.mxu0 0.0
        %1258 = vmatprep.subr.mxu0 0.0
        %1259 = vmatpush1.msra.mxu0 0.0
        %1260 = vmatprep.subr.mxu0 0.0
        %1261 = vmatpush1.msra.mxu0 0.0
        %1262 = vmatprep.subr.mxu0 0.0
        %1263 = vmatpush1.msra.mxu0 0.0
        %1264 = vmatprep.subr.mxu0 0.0
        %1265 = vmatpush1.msra.mxu0 0.0
        %1266 = vmatprep.subr.mxu0 0.0
        %1267 = vmatpush1.msra.mxu0 0.0
        %1268 = vmatprep.subr.mxu0 0.0
        %1269 = vmatpush1.msra.mxu0 0.0
        %1270 = vmatprep.subr.mxu0 0.0
        %1271 = vmatpush1.msra.mxu0 0.0
        %1272 = vmatprep.subr.mxu0 0.0
        %1273 = vmatpush1.msra.mxu0 0.0
        %1274 = vmatprep.subr.mxu0 0.0
        %1275 = vmatpush1.msra.mxu0 0.0
        %1276 = vmatprep.mubr.f32.mxu0 0.0
        %v1277 = vand.u32 %v1129, 4294901760
        %1278 = vmatmul.mubr.f32.gmra.mrb[0].mxu0 %v1277
        %v1279 = vpop.f32.mrb[0].mxu0
        %v1280 = vadd.f32 %v1204, %v1279
        %v1281 = vpop.f32.mrb[0].mxu0
        %1282 = vdwg.mxu0
        %1283 = vmatprep.subr.mxu0 0.0
        %v1284 = vand.u32 %v1127, 4294901760
        %v1285 = vsub.f32 %v1127, %v1284
        %1286 = vmatpush1.msra.mxu0 %v1285
        %1287 = vmatprep.subr.mxu0 0.0
        %1288 = vmatpush1.msra.mxu0 0.0
        %1289 = vmatprep.subr.mxu0 0.0
        %1290 = vmatpush1.msra.mxu0 0.0
        %1291 = vmatprep.subr.mxu0 0.0
        %1292 = vmatpush1.msra.mxu0 0.0
        %1293 = vmatprep.subr.mxu0 0.0
        %1294 = vmatpush1.msra.mxu0 0.0
        %1295 = vmatprep.subr.mxu0 0.0
        %1296 = vmatpush1.msra.mxu0 0.0
        %1297 = vmatprep.subr.mxu0 0.0
        %1298 = vmatpush1.msra.mxu0 0.0
        %1299 = vmatprep.subr.mxu0 0.0
        %1300 = vmatpush1.msra.mxu0 0.0
        %1301 = vmatprep.subr.mxu0 0.0
        %1302 = vmatpush1.msra.mxu0 0.0
        %1303 = vmatprep.subr.mxu0 0.0
        %1304 = vmatpush1.msra.mxu0 0.0
        %1305 = vmatprep.subr.mxu0 0.0
        %1306 = vmatpush1.msra.mxu0 0.0
        %1307 = vmatprep.subr.mxu0 0.0
        %1308 = vmatpush1.msra.mxu0 0.0
        %1309 = vmatprep.subr.mxu0 0.0
        %1310 = vmatpush1.msra.mxu0 0.0
        %1311 = vmatprep.subr.mxu0 0.0
        %1312 = vmatpush1.msra.mxu0 0.0
        %1313 = vmatprep.subr.mxu0 0.0
        %1314 = vmatpush1.msra.mxu0 0.0
        %1315 = vmatprep.subr.mxu0 0.0
        %1316 = vmatpush1.msra.mxu0 0.0
        %1317 = vmatprep.subr.mxu0 0.0
        %1318 = vmatpush1.msra.mxu0 0.0
        %1319 = vmatprep.subr.mxu0 0.0
        %1320 = vmatpush1.msra.mxu0 0.0
        %1321 = vmatprep.subr.mxu0 0.0
        %1322 = vmatpush1.msra.mxu0 0.0
        %1323 = vmatprep.subr.mxu0 0.0
        %1324 = vmatpush1.msra.mxu0 0.0
        %1325 = vmatprep.subr.mxu0 0.0
        %1326 = vmatpush1.msra.mxu0 0.0
        %1327 = vmatprep.subr.mxu0 0.0
        %1328 = vmatpush1.msra.mxu0 0.0
        %1329 = vmatprep.subr.mxu0 0.0
        %1330 = vmatpush1.msra.mxu0 0.0
        %1331 = vmatprep.subr.mxu0 0.0
        %1332 = vmatpush1.msra.mxu0 0.0
        %1333 = vmatprep.subr.mxu0 0.0
        %1334 = vmatpush1.msra.mxu0 0.0
        %1335 = vmatprep.subr.mxu0 0.0
        %1336 = vmatpush1.msra.mxu0 0.0
        %1337 = vmatprep.subr.mxu0 0.0
        %1338 = vmatpush1.msra.mxu0 0.0
        %1339 = vmatprep.subr.mxu0 0.0
        %1340 = vmatpush1.msra.mxu0 0.0
        %1341 = vmatprep.subr.mxu0 0.0
        %1342 = vmatpush1.msra.mxu0 0.0
        %1343 = vmatprep.subr.mxu0 0.0
        %1344 = vmatpush1.msra.mxu0 0.0
        %1345 = vmatprep.subr.mxu0 0.0
        %1346 = vmatpush1.msra.mxu0 0.0
        %1347 = vmatprep.subr.mxu0 0.0
        %1348 = vmatpush1.msra.mxu0 0.0
        %1349 = vmatprep.mubr.f32.mxu0 0.0
        %v1350 = vand.u32 %v1129, 4294901760
        %v1351 = vsub.f32 %v1129, %v1350
        %1352 = vmatmul.mubr.f32.gmra.mrb[0].mxu0 %v1351
        %v1353 = vpop.f32.mrb[0].mxu0
        %v1354 = vadd.f32 %v1280, %v1353
        %v1355 = vpop.f32.mrb[0].mxu0
        %1356 = vdwg.mxu0
        %1357 = vmatprep.subr.mxu0 0.0
        %v1358 = vand.u32 %v1127, 4294901760
        %1359 = vmatpush1.msra.mxu0 %v1358
        %1360 = vmatprep.subr.mxu0 0.0
        %1361 = vmatpush1.msra.mxu0 0.0
        %1362 = vmatprep.subr.mxu0 0.0
        %1363 = vmatpush1.msra.mxu0 0.0
        %1364 = vmatprep.subr.mxu0 0.0
        %1365 = vmatpush1.msra.mxu0 0.0
        %1366 = vmatprep.subr.mxu0 0.0
        %1367 = vmatpush1.msra.mxu0 0.0
        %1368 = vmatprep.subr.mxu0 0.0
        %1369 = vmatpush1.msra.mxu0 0.0
        %1370 = vmatprep.subr.mxu0 0.0
        %1371 = vmatpush1.msra.mxu0 0.0
        %1372 = vmatprep.subr.mxu0 0.0
        %1373 = vmatpush1.msra.mxu0 0.0
        %1374 = vmatprep.subr.mxu0 0.0
        %1375 = vmatpush1.msra.mxu0 0.0
        %1376 = vmatprep.subr.mxu0 0.0
        %1377 = vmatpush1.msra.mxu0 0.0
        %1378 = vmatprep.subr.mxu0 0.0
        %1379 = vmatpush1.msra.mxu0 0.0
        %1380 = vmatprep.subr.mxu0 0.0
        %1381 = vmatpush1.msra.mxu0 0.0
        %1382 = vmatprep.subr.mxu0 0.0
        %1383 = vmatpush1.msra.mxu0 0.0
        %1384 = vmatprep.subr.mxu0 0.0
        %1385 = vmatpush1.msra.mxu0 0.0
        %1386 = vmatprep.subr.mxu0 0.0
        %1387 = vmatpush1.msra.mxu0 0.0
        %1388 = vmatprep.subr.mxu0 0.0
        %1389 = vmatpush1.msra.mxu0 0.0
        %1390 = vmatprep.subr.mxu0 0.0
        %1391 = vmatpush1.msra.mxu0 0.0
        %1392 = vmatprep.subr.mxu0 0.0
        %1393 = vmatpush1.msra.mxu0 0.0
        %1394 = vmatprep.subr.mxu0 0.0
        %1395 = vmatpush1.msra.mxu0 0.0
        %1396 = vmatprep.subr.mxu0 0.0
        %1397 = vmatpush1.msra.mxu0 0.0
        %1398 = vmatprep.subr.mxu0 0.0
        %1399 = vmatpush1.msra.mxu0 0.0
        %1400 = vmatprep.subr.mxu0 0.0
        %1401 = vmatpush1.msra.mxu0 0.0
        %1402 = vmatprep.subr.mxu0 0.0
        %1403 = vmatpush1.msra.mxu0 0.0
        %1404 = vmatprep.subr.mxu0 0.0
        %1405 = vmatpush1.msra.mxu0 0.0
        %1406 = vmatprep.subr.mxu0 0.0
        %1407 = vmatpush1.msra.mxu0 0.0
        %1408 = vmatprep.subr.mxu0 0.0
        %1409 = vmatpush1.msra.mxu0 0.0
        %1410 = vmatprep.subr.mxu0 0.0
        %1411 = vmatpush1.msra.mxu0 0.0
        %1412 = vmatprep.subr.mxu0 0.0
        %1413 = vmatpush1.msra.mxu0 0.0
        %1414 = vmatprep.subr.mxu0 0.0
        %1415 = vmatpush1.msra.mxu0 0.0
        %1416 = vmatprep.subr.mxu0 0.0
        %1417 = vmatpush1.msra.mxu0 0.0
        %1418 = vmatprep.subr.mxu0 0.0
        %1419 = vmatpush1.msra.mxu0 0.0
        %1420 = vmatprep.subr.mxu0 0.0
        %1421 = vmatpush1.msra.mxu0 0.0
        %1422 = vmatprep.mubr.f32.mxu0 0.0
        %v1423 = vand.u32 %v1129, 4294901760
        %v1424 = vsub.f32 %v1129, %v1423
        %v1425 = vand.u32 %v1424, 4294901760
        %1426 = vmatmul.mubr.f32.gmra.mrb[0].mxu0 %v1425
        %v1427 = vpop.f32.mrb[0].mxu0
        %v1428 = vadd.f32 %v1354, %v1427
        %v1429 = vpop.f32.mrb[0].mxu0
        %1430 = vdwg.mxu0
        %1431 = vmatprep.subr.mxu0 0.0
        %v1432 = vand.u32 %v1127, 4294901760
        %v1433 = vsub.f32 %v1127, %v1432
        %v1434 = vand.u32 %v1433, 4294901760
        %1435 = vmatpush1.msra.mxu0 %v1434
        %1436 = vmatprep.subr.mxu0 0.0
        %1437 = vmatpush1.msra.mxu0 0.0
        %1438 = vmatprep.subr.mxu0 0.0
        %1439 = vmatpush1.msra.mxu0 0.0
        %1440 = vmatprep.subr.mxu0 0.0
        %1441 = vmatpush1.msra.mxu0 0.0
        %1442 = vmatprep.subr.mxu0 0.0
        %1443 = vmatpush1.msra.mxu0 0.0
        %1444 = vmatprep.subr.mxu0 0.0
        %1445 = vmatpush1.msra.mxu0 0.0
        %1446 = vmatprep.subr.mxu0 0.0
        %1447 = vmatpush1.msra.mxu0 0.0
        %1448 = vmatprep.subr.mxu0 0.0
        %1449 = vmatpush1.msra.mxu0 0.0
        %1450 = vmatprep.subr.mxu0 0.0
        %1451 = vmatpush1.msra.mxu0 0.0
        %1452 = vmatprep.subr.mxu0 0.0
        %1453 = vmatpush1.msra.mxu0 0.0
        %1454 = vmatprep.subr.mxu0 0.0
        %1455 = vmatpush1.msra.mxu0 0.0
        %1456 = vmatprep.subr.mxu0 0.0
        %1457 = vmatpush1.msra.mxu0 0.0
        %1458 = vmatprep.subr.mxu0 0.0
        %1459 = vmatpush1.msra.mxu0 0.0
        %1460 = vmatprep.subr.mxu0 0.0
        %1461 = vmatpush1.msra.mxu0 0.0
        %1462 = vmatprep.subr.mxu0 0.0
        %1463 = vmatpush1.msra.mxu0 0.0
        %1464 = vmatprep.subr.mxu0 0.0
        %1465 = vmatpush1.msra.mxu0 0.0
        %1466 = vmatprep.subr.mxu0 0.0
        %1467 = vmatpush1.msra.mxu0 0.0
        %1468 = vmatprep.subr.mxu0 0.0
        %1469 = vmatpush1.msra.mxu0 0.0
        %1470 = vmatprep.subr.mxu0 0.0
        %1471 = vmatpush1.msra.mxu0 0.0
        %1472 = vmatprep.subr.mxu0 0.0
        %1473 = vmatpush1.msra.mxu0 0.0
        %1474 = vmatprep.subr.mxu0 0.0
        %1475 = vmatpush1.msra.mxu0 0.0
        %1476 = vmatprep.subr.mxu0 0.0
        %1477 = vmatpush1.msra.mxu0 0.0
        %1478 = vmatprep.subr.mxu0 0.0
        %1479 = vmatpush1.msra.mxu0 0.0
        %1480 = vmatprep.subr.mxu0 0.0
        %1481 = vmatpush1.msra.mxu0 0.0
        %1482 = vmatprep.subr.mxu0 0.0
        %1483 = vmatpush1.msra.mxu0 0.0
        %1484 = vmatprep.subr.mxu0 0.0
        %1485 = vmatpush1.msra.mxu0 0.0
        %1486 = vmatprep.subr.mxu0 0.0
        %1487 = vmatpush1.msra.mxu0 0.0
        %1488 = vmatprep.subr.mxu0 0.0
        %1489 = vmatpush1.msra.mxu0 0.0
        %1490 = vmatprep.subr.mxu0 0.0
        %1491 = vmatpush1.msra.mxu0 0.0
        %1492 = vmatprep.subr.mxu0 0.0
        %1493 = vmatpush1.msra.mxu0 0.0
        %1494 = vmatprep.subr.mxu0 0.0
        %1495 = vmatpush1.msra.mxu0 0.0
        %1496 = vmatprep.subr.mxu0 0.0
        %1497 = vmatpush1.msra.mxu0 0.0
        %1498 = vmatprep.mubr.f32.mxu0 0.0
        %v1499 = vand.u32 %v1129, 4294901760
        %1500 = vmatmul.mubr.f32.gmra.mrb[0].mxu0 %v1499
        %v1501 = vpop.f32.mrb[0].mxu0
        %v1502 = vadd.f32 %v1428, %v1501
        %v1503 = vpop.f32.mrb[0].mxu0
        %1504 = vdwg.mxu0
        %1505 = vmatprep.subr.mxu0 0.0
        %v1506 = vand.u32 %v1127, 4294901760
        %1507 = vmatpush1.msra.mxu0 %v1506
        %1508 = vmatprep.subr.mxu0 0.0
        %1509 = vmatpush1.msra.mxu0 0.0
        %1510 = vmatprep.subr.mxu0 0.0
        %1511 = vmatpush1.msra.mxu0 0.0
        %1512 = vmatprep.subr.mxu0 0.0
        %1513 = vmatpush1.msra.mxu0 0.0
        %1514 = vmatprep.subr.mxu0 0.0
        %1515 = vmatpush1.msra.mxu0 0.0
        %1516 = vmatprep.subr.mxu0 0.0
        %1517 = vmatpush1.msra.mxu0 0.0
        %1518 = vmatprep.subr.mxu0 0.0
        %1519 = vmatpush1.msra.mxu0 0.0
        %1520 = vmatprep.subr.mxu0 0.0
        %1521 = vmatpush1.msra.mxu0 0.0
        %1522 = vmatprep.subr.mxu0 0.0
        %1523 = vmatpush1.msra.mxu0 0.0
        %1524 = vmatprep.subr.mxu0 0.0
        %1525 = vmatpush1.msra.mxu0 0.0
        %1526 = vmatprep.subr.mxu0 0.0
        %1527 = vmatpush1.msra.mxu0 0.0
        %1528 = vmatprep.subr.mxu0 0.0
        %1529 = vmatpush1.msra.mxu0 0.0
        %1530 = vmatprep.subr.mxu0 0.0
        %1531 = vmatpush1.msra.mxu0 0.0
        %1532 = vmatprep.subr.mxu0 0.0
        %1533 = vmatpush1.msra.mxu0 0.0
        %1534 = vmatprep.subr.mxu0 0.0
        %1535 = vmatpush1.msra.mxu0 0.0
        %1536 = vmatprep.subr.mxu0 0.0
        %1537 = vmatpush1.msra.mxu0 0.0
        %1538 = vmatprep.subr.mxu0 0.0
        %1539 = vmatpush1.msra.mxu0 0.0
        %1540 = vmatprep.subr.mxu0 0.0
        %1541 = vmatpush1.msra.mxu0 0.0
        %1542 = vmatprep.subr.mxu0 0.0
        %1543 = vmatpush1.msra.mxu0 0.0
        %1544 = vmatprep.subr.mxu0 0.0
        %1545 = vmatpush1.msra.mxu0 0.0
        %1546 = vmatprep.subr.mxu0 0.0
        %1547 = vmatpush1.msra.mxu0 0.0
        %1548 = vmatprep.subr.mxu0 0.0
        %1549 = vmatpush1.msra.mxu0 0.0
        %1550 = vmatprep.subr.mxu0 0.0
        %1551 = vmatpush1.msra.mxu0 0.0
        %1552 = vmatprep.subr.mxu0 0.0
        %1553 = vmatpush1.msra.mxu0 0.0
        %1554 = vmatprep.subr.mxu0 0.0
        %1555 = vmatpush1.msra.mxu0 0.0
        %1556 = vmatprep.subr.mxu0 0.0
        %1557 = vmatpush1.msra.mxu0 0.0
        %1558 = vmatprep.subr.mxu0 0.0
        %1559 = vmatpush1.msra.mxu0 0.0
        %1560 = vmatprep.subr.mxu0 0.0
        %1561 = vmatpush1.msra.mxu0 0.0
        %1562 = vmatprep.subr.mxu0 0.0
        %1563 = vmatpush1.msra.mxu0 0.0
        %1564 = vmatprep.subr.mxu0 0.0
        %1565 = vmatpush1.msra.mxu0 0.0
        %1566 = vmatprep.subr.mxu0 0.0
        %1567 = vmatpush1.msra.mxu0 0.0
        %1568 = vmatprep.subr.mxu0 0.0
        %1569 = vmatpush1.msra.mxu0 0.0
        %1570 = vmatprep.mubr.f32.mxu0 0.0
        %v1571 = vand.u32 %v1129, 4294901760
        %1572 = vmatmul.mubr.f32.gmra.mrb[0].mxu0 %v1571
        %v1573 = vpop.f32.mrb[0].mxu0
        %v1574 = vadd.f32 %v1502, %v1573
        %v1575 = vpop.f32.mrb[0].mxu0
        %1576 = vdwg.mxu0
        %s1577 = scalar_lea.vmem %s184, 24 [#allocation2]
        %v1578 = vld [vmem:[%s1577] sm:$0xff]
        %s1579 = scalar_lea.vmem %s193, 24 [#allocation5]
        %v1580 = vld [vmem:[%s1579] sm:$0xff]
        %v1582 = vsel %vm221, %v1578, 0
        %1584 = vmatprep.subr.mxu0 0.0
        %v1585 = vand.u32 %v1580, 4294901760
        %1586 = vmatpush1.msra.mxu0 %v1585
        %1587 = vmatprep.subr.mxu0 0.0
        %1588 = vmatpush1.msra.mxu0 0.0
        %1589 = vmatprep.subr.mxu0 0.0
        %1590 = vmatpush1.msra.mxu0 0.0
        %1591 = vmatprep.subr.mxu0 0.0
        %1592 = vmatpush1.msra.mxu0 0.0
        %1593 = vmatprep.subr.mxu0 0.0
        %1594 = vmatpush1.msra.mxu0 0.0
        %1595 = vmatprep.subr.mxu0 0.0
        %1596 = vmatpush1.msra.mxu0 0.0
        %1597 = vmatprep.subr.mxu0 0.0
        %1598 = vmatpush1.msra.mxu0 0.0
        %1599 = vmatprep.subr.mxu0 0.0
        %1600 = vmatpush1.msra.mxu0 0.0
        %1601 = vmatprep.subr.mxu0 0.0
        %1602 = vmatpush1.msra.mxu0 0.0
        %1603 = vmatprep.subr.mxu0 0.0
        %1604 = vmatpush1.msra.mxu0 0.0
        %1605 = vmatprep.subr.mxu0 0.0
        %1606 = vmatpush1.msra.mxu0 0.0
        %1607 = vmatprep.subr.mxu0 0.0
        %1608 = vmatpush1.msra.mxu0 0.0
        %1609 = vmatprep.subr.mxu0 0.0
        %1610 = vmatpush1.msra.mxu0 0.0
        %1611 = vmatprep.subr.mxu0 0.0
        %1612 = vmatpush1.msra.mxu0 0.0
        %1613 = vmatprep.subr.mxu0 0.0
        %1614 = vmatpush1.msra.mxu0 0.0
        %1615 = vmatprep.subr.mxu0 0.0
        %1616 = vmatpush1.msra.mxu0 0.0
        %1617 = vmatprep.subr.mxu0 0.0
        %1618 = vmatpush1.msra.mxu0 0.0
        %1619 = vmatprep.subr.mxu0 0.0
        %1620 = vmatpush1.msra.mxu0 0.0
        %1621 = vmatprep.subr.mxu0 0.0
        %1622 = vmatpush1.msra.mxu0 0.0
        %1623 = vmatprep.subr.mxu0 0.0
        %1624 = vmatpush1.msra.mxu0 0.0
        %1625 = vmatprep.subr.mxu0 0.0
        %1626 = vmatpush1.msra.mxu0 0.0
        %1627 = vmatprep.subr.mxu0 0.0
        %1628 = vmatpush1.msra.mxu0 0.0
        %1629 = vmatprep.subr.mxu0 0.0
        %1630 = vmatpush1.msra.mxu0 0.0
        %1631 = vmatprep.subr.mxu0 0.0
        %1632 = vmatpush1.msra.mxu0 0.0
        %1633 = vmatprep.subr.mxu0 0.0
        %1634 = vmatpush1.msra.mxu0 0.0
        %1635 = vmatprep.subr.mxu0 0.0
        %1636 = vmatpush1.msra.mxu0 0.0
        %1637 = vmatprep.subr.mxu0 0.0
        %1638 = vmatpush1.msra.mxu0 0.0
        %1639 = vmatprep.subr.mxu0 0.0
        %1640 = vmatpush1.msra.mxu0 0.0
        %1641 = vmatprep.subr.mxu0 0.0
        %1642 = vmatpush1.msra.mxu0 0.0
        %1643 = vmatprep.subr.mxu0 0.0
        %1644 = vmatpush1.msra.mxu0 0.0
        %1645 = vmatprep.subr.mxu0 0.0
        %1646 = vmatpush1.msra.mxu0 0.0
        %1647 = vmatprep.subr.mxu0 0.0
        %1648 = vmatpush1.msra.mxu0 0.0
        %1649 = vmatprep.mubr.f32.mxu0 0.0
        %v1650 = vand.u32 %v1582, 4294901760
        %v1651 = vsub.f32 %v1582, %v1650
        %v1652 = vand.u32 %v1651, 4294901760
        %v1653 = vsub.f32 %v1651, %v1652
        %v1654 = vand.u32 %v1653, 4294901760
        %1655 = vmatmul.mubr.f32.gmra.mrb[0].mxu0 %v1654
        %v1656 = vpop.f32.mrb[0].mxu0
        %v1657 = vadd.f32 0.0, %v1656
        %v1658 = vpop.f32.mrb[0].mxu0
        %1659 = vdwg.mxu0
        %1660 = vmatprep.subr.mxu0 0.0
        %v1661 = vand.u32 %v1580, 4294901760
        %v1662 = vsub.f32 %v1580, %v1661
        %v1663 = vand.u32 %v1662, 4294901760
        %v1664 = vsub.f32 %v1662, %v1663
        %v1665 = vand.u32 %v1664, 4294901760
        %1666 = vmatpush1.msra.mxu0 %v1665
        %1667 = vmatprep.subr.mxu0 0.0
        %1668 = vmatpush1.msra.mxu0 0.0
        %1669 = vmatprep.subr.mxu0 0.0
        %1670 = vmatpush1.msra.mxu0 0.0
        %1671 = vmatprep.subr.mxu0 0.0
        %1672 = vmatpush1.msra.mxu0 0.0
        %1673 = vmatprep.subr.mxu0 0.0
        %1674 = vmatpush1.msra.mxu0 0.0
        %1675 = vmatprep.subr.mxu0 0.0
        %1676 = vmatpush1.msra.mxu0 0.0
        %1677 = vmatprep.subr.mxu0 0.0
        %1678 = vmatpush1.msra.mxu0 0.0
        %1679 = vmatprep.subr.mxu0 0.0
        %1680 = vmatpush1.msra.mxu0 0.0
        %1681 = vmatprep.subr.mxu0 0.0
        %1682 = vmatpush1.msra.mxu0 0.0
        %1683 = vmatprep.subr.mxu0 0.0
        %1684 = vmatpush1.msra.mxu0 0.0
        %1685 = vmatprep.subr.mxu0 0.0
        %1686 = vmatpush1.msra.mxu0 0.0
        %1687 = vmatprep.subr.mxu0 0.0
        %1688 = vmatpush1.msra.mxu0 0.0
        %1689 = vmatprep.subr.mxu0 0.0
        %1690 = vmatpush1.msra.mxu0 0.0
        %1691 = vmatprep.subr.mxu0 0.0
        %1692 = vmatpush1.msra.mxu0 0.0
        %1693 = vmatprep.subr.mxu0 0.0
        %1694 = vmatpush1.msra.mxu0 0.0
        %1695 = vmatprep.subr.mxu0 0.0
        %1696 = vmatpush1.msra.mxu0 0.0
        %1697 = vmatprep.subr.mxu0 0.0
        %1698 = vmatpush1.msra.mxu0 0.0
        %1699 = vmatprep.subr.mxu0 0.0
        %1700 = vmatpush1.msra.mxu0 0.0
        %1701 = vmatprep.subr.mxu0 0.0
        %1702 = vmatpush1.msra.mxu0 0.0
        %1703 = vmatprep.subr.mxu0 0.0
        %1704 = vmatpush1.msra.mxu0 0.0
        %1705 = vmatprep.subr.mxu0 0.0
        %1706 = vmatpush1.msra.mxu0 0.0
        %1707 = vmatprep.subr.mxu0 0.0
        %1708 = vmatpush1.msra.mxu0 0.0
        %1709 = vmatprep.subr.mxu0 0.0
        %1710 = vmatpush1.msra.mxu0 0.0
        %1711 = vmatprep.subr.mxu0 0.0
        %1712 = vmatpush1.msra.mxu0 0.0
        %1713 = vmatprep.subr.mxu0 0.0
        %1714 = vmatpush1.msra.mxu0 0.0
        %1715 = vmatprep.subr.mxu0 0.0
        %1716 = vmatpush1.msra.mxu0 0.0
        %1717 = vmatprep.subr.mxu0 0.0
        %1718 = vmatpush1.msra.mxu0 0.0
        %1719 = vmatprep.subr.mxu0 0.0
        %1720 = vmatpush1.msra.mxu0 0.0
        %1721 = vmatprep.subr.mxu0 0.0
        %1722 = vmatpush1.msra.mxu0 0.0
        %1723 = vmatprep.subr.mxu0 0.0
        %1724 = vmatpush1.msra.mxu0 0.0
        %1725 = vmatprep.subr.mxu0 0.0
        %1726 = vmatpush1.msra.mxu0 0.0
        %1727 = vmatprep.subr.mxu0 0.0
        %1728 = vmatpush1.msra.mxu0 0.0
        %1729 = vmatprep.mubr.f32.mxu0 0.0
        %v1730 = vand.u32 %v1582, 4294901760
        %1731 = vmatmul.mubr.f32.gmra.mrb[0].mxu0 %v1730
        %v1732 = vpop.f32.mrb[0].mxu0
        %v1733 = vadd.f32 %v1657, %v1732
        %v1734 = vpop.f32.mrb[0].mxu0
        %1735 = vdwg.mxu0
        %1736 = vmatprep.subr.mxu0 0.0
        %v1737 = vand.u32 %v1580, 4294901760
        %v1738 = vsub.f32 %v1580, %v1737
        %1739 = vmatpush1.msra.mxu0 %v1738
        %1740 = vmatprep.subr.mxu0 0.0
        %1741 = vmatpush1.msra.mxu0 0.0
        %1742 = vmatprep.subr.mxu0 0.0
        %1743 = vmatpush1.msra.mxu0 0.0
        %1744 = vmatprep.subr.mxu0 0.0
        %1745 = vmatpush1.msra.mxu0 0.0
        %1746 = vmatprep.subr.mxu0 0.0
        %1747 = vmatpush1.msra.mxu0 0.0
        %1748 = vmatprep.subr.mxu0 0.0
        %1749 = vmatpush1.msra.mxu0 0.0
        %1750 = vmatprep.subr.mxu0 0.0
        %1751 = vmatpush1.msra.mxu0 0.0
        %1752 = vmatprep.subr.mxu0 0.0
        %1753 = vmatpush1.msra.mxu0 0.0
        %1754 = vmatprep.subr.mxu0 0.0
        %1755 = vmatpush1.msra.mxu0 0.0
        %1756 = vmatprep.subr.mxu0 0.0
        %1757 = vmatpush1.msra.mxu0 0.0
        %1758 = vmatprep.subr.mxu0 0.0
        %1759 = vmatpush1.msra.mxu0 0.0
        %1760 = vmatprep.subr.mxu0 0.0
        %1761 = vmatpush1.msra.mxu0 0.0
        %1762 = vmatprep.subr.mxu0 0.0
        %1763 = vmatpush1.msra.mxu0 0.0
        %1764 = vmatprep.subr.mxu0 0.0
        %1765 = vmatpush1.msra.mxu0 0.0
        %1766 = vmatprep.subr.mxu0 0.0
        %1767 = vmatpush1.msra.mxu0 0.0
        %1768 = vmatprep.subr.mxu0 0.0
        %1769 = vmatpush1.msra.mxu0 0.0
        %1770 = vmatprep.subr.mxu0 0.0
        %1771 = vmatpush1.msra.mxu0 0.0
        %1772 = vmatprep.subr.mxu0 0.0
        %1773 = vmatpush1.msra.mxu0 0.0
        %1774 = vmatprep.subr.mxu0 0.0
        %1775 = vmatpush1.msra.mxu0 0.0
        %1776 = vmatprep.subr.mxu0 0.0
        %1777 = vmatpush1.msra.mxu0 0.0
        %1778 = vmatprep.subr.mxu0 0.0
        %1779 = vmatpush1.msra.mxu0 0.0
        %1780 = vmatprep.subr.mxu0 0.0
        %1781 = vmatpush1.msra.mxu0 0.0
        %1782 = vmatprep.subr.mxu0 0.0
        %1783 = vmatpush1.msra.mxu0 0.0
        %1784 = vmatprep.subr.mxu0 0.0
        %1785 = vmatpush1.msra.mxu0 0.0
        %1786 = vmatprep.subr.mxu0 0.0
        %1787 = vmatpush1.msra.mxu0 0.0
        %1788 = vmatprep.subr.mxu0 0.0
        %1789 = vmatpush1.msra.mxu0 0.0
        %1790 = vmatprep.subr.mxu0 0.0
        %1791 = vmatpush1.msra.mxu0 0.0
        %1792 = vmatprep.subr.mxu0 0.0
        %1793 = vmatpush1.msra.mxu0 0.0
        %1794 = vmatprep.subr.mxu0 0.0
        %1795 = vmatpush1.msra.mxu0 0.0
        %1796 = vmatprep.subr.mxu0 0.0
        %1797 = vmatpush1.msra.mxu0 0.0
        %1798 = vmatprep.subr.mxu0 0.0
        %1799 = vmatpush1.msra.mxu0 0.0
        %1800 = vmatprep.subr.mxu0 0.0
        %1801 = vmatpush1.msra.mxu0 0.0
        %1802 = vmatprep.mubr.f32.mxu0 0.0
        %v1803 = vand.u32 %v1582, 4294901760
        %v1804 = vsub.f32 %v1582, %v1803
        %1805 = vmatmul.mubr.f32.gmra.mrb[0].mxu0 %v1804
        %v1806 = vpop.f32.mrb[0].mxu0
        %v1807 = vadd.f32 %v1733, %v1806
        %v1808 = vpop.f32.mrb[0].mxu0
        %1809 = vdwg.mxu0
        %1810 = vmatprep.subr.mxu0 0.0
        %v1811 = vand.u32 %v1580, 4294901760
        %1812 = vmatpush1.msra.mxu0 %v1811
        %1813 = vmatprep.subr.mxu0 0.0
        %1814 = vmatpush1.msra.mxu0 0.0
        %1815 = vmatprep.subr.mxu0 0.0
        %1816 = vmatpush1.msra.mxu0 0.0
        %1817 = vmatprep.subr.mxu0 0.0
        %1818 = vmatpush1.msra.mxu0 0.0
        %1819 = vmatprep.subr.mxu0 0.0
        %1820 = vmatpush1.msra.mxu0 0.0
        %1821 = vmatprep.subr.mxu0 0.0
        %1822 = vmatpush1.msra.mxu0 0.0
        %1823 = vmatprep.subr.mxu0 0.0
        %1824 = vmatpush1.msra.mxu0 0.0
        %1825 = vmatprep.subr.mxu0 0.0
        %1826 = vmatpush1.msra.mxu0 0.0
        %1827 = vmatprep.subr.mxu0 0.0
        %1828 = vmatpush1.msra.mxu0 0.0
        %1829 = vmatprep.subr.mxu0 0.0
        %1830 = vmatpush1.msra.mxu0 0.0
        %1831 = vmatprep.subr.mxu0 0.0
        %1832 = vmatpush1.msra.mxu0 0.0
        %1833 = vmatprep.subr.mxu0 0.0
        %1834 = vmatpush1.msra.mxu0 0.0
        %1835 = vmatprep.subr.mxu0 0.0
        %1836 = vmatpush1.msra.mxu0 0.0
        %1837 = vmatprep.subr.mxu0 0.0
        %1838 = vmatpush1.msra.mxu0 0.0
        %1839 = vmatprep.subr.mxu0 0.0
        %1840 = vmatpush1.msra.mxu0 0.0
        %1841 = vmatprep.subr.mxu0 0.0
        %1842 = vmatpush1.msra.mxu0 0.0
        %1843 = vmatprep.subr.mxu0 0.0
        %1844 = vmatpush1.msra.mxu0 0.0
        %1845 = vmatprep.subr.mxu0 0.0
        %1846 = vmatpush1.msra.mxu0 0.0
        %1847 = vmatprep.subr.mxu0 0.0
        %1848 = vmatpush1.msra.mxu0 0.0
        %1849 = vmatprep.subr.mxu0 0.0
        %1850 = vmatpush1.msra.mxu0 0.0
        %1851 = vmatprep.subr.mxu0 0.0
        %1852 = vmatpush1.msra.mxu0 0.0
        %1853 = vmatprep.subr.mxu0 0.0
        %1854 = vmatpush1.msra.mxu0 0.0
        %1855 = vmatprep.subr.mxu0 0.0
        %1856 = vmatpush1.msra.mxu0 0.0
        %1857 = vmatprep.subr.mxu0 0.0
        %1858 = vmatpush1.msra.mxu0 0.0
        %1859 = vmatprep.subr.mxu0 0.0
        %1860 = vmatpush1.msra.mxu0 0.0
        %1861 = vmatprep.subr.mxu0 0.0
        %1862 = vmatpush1.msra.mxu0 0.0
        %1863 = vmatprep.subr.mxu0 0.0
        %1864 = vmatpush1.msra.mxu0 0.0
        %1865 = vmatprep.subr.mxu0 0.0
        %1866 = vmatpush1.msra.mxu0 0.0
        %1867 = vmatprep.subr.mxu0 0.0
        %1868 = vmatpush1.msra.mxu0 0.0
        %1869 = vmatprep.subr.mxu0 0.0
        %1870 = vmatpush1.msra.mxu0 0.0
        %1871 = vmatprep.subr.mxu0 0.0
        %1872 = vmatpush1.msra.mxu0 0.0
        %1873 = vmatprep.subr.mxu0 0.0
        %1874 = vmatpush1.msra.mxu0 0.0
        %1875 = vmatprep.mubr.f32.mxu0 0.0
        %v1876 = vand.u32 %v1582, 4294901760
        %v1877 = vsub.f32 %v1582, %v1876
        %v1878 = vand.u32 %v1877, 4294901760
        %1879 = vmatmul.mubr.f32.gmra.mrb[0].mxu0 %v1878
        %v1880 = vpop.f32.mrb[0].mxu0
        %v1881 = vadd.f32 %v1807, %v1880
        %v1882 = vpop.f32.mrb[0].mxu0
        %1883 = vdwg.mxu0
        %1884 = vmatprep.subr.mxu0 0.0
        %v1885 = vand.u32 %v1580, 4294901760
        %v1886 = vsub.f32 %v1580, %v1885
        %v1887 = vand.u32 %v1886, 4294901760
        %1888 = vmatpush1.msra.mxu0 %v1887
        %1889 = vmatprep.subr.mxu0 0.0
        %1890 = vmatpush1.msra.mxu0 0.0
        %1891 = vmatprep.subr.mxu0 0.0
        %1892 = vmatpush1.msra.mxu0 0.0
        %1893 = vmatprep.subr.mxu0 0.0
        %1894 = vmatpush1.msra.mxu0 0.0
        %1895 = vmatprep.subr.mxu0 0.0
        %1896 = vmatpush1.msra.mxu0 0.0
        %1897 = vmatprep.subr.mxu0 0.0
        %1898 = vmatpush1.msra.mxu0 0.0
        %1899 = vmatprep.subr.mxu0 0.0
        %1900 = vmatpush1.msra.mxu0 0.0
        %1901 = vmatprep.subr.mxu0 0.0
        %1902 = vmatpush1.msra.mxu0 0.0
        %1903 = vmatprep.subr.mxu0 0.0
        %1904 = vmatpush1.msra.mxu0 0.0
        %1905 = vmatprep.subr.mxu0 0.0
        %1906 = vmatpush1.msra.mxu0 0.0
        %1907 = vmatprep.subr.mxu0 0.0
        %1908 = vmatpush1.msra.mxu0 0.0
        %1909 = vmatprep.subr.mxu0 0.0
        %1910 = vmatpush1.msra.mxu0 0.0
        %1911 = vmatprep.subr.mxu0 0.0
        %1912 = vmatpush1.msra.mxu0 0.0
        %1913 = vmatprep.subr.mxu0 0.0
        %1914 = vmatpush1.msra.mxu0 0.0
        %1915 = vmatprep.subr.mxu0 0.0
        %1916 = vmatpush1.msra.mxu0 0.0
        %1917 = vmatprep.subr.mxu0 0.0
        %1918 = vmatpush1.msra.mxu0 0.0
        %1919 = vmatprep.subr.mxu0 0.0
        %1920 = vmatpush1.msra.mxu0 0.0
        %1921 = vmatprep.subr.mxu0 0.0
        %1922 = vmatpush1.msra.mxu0 0.0
        %1923 = vmatprep.subr.mxu0 0.0
        %1924 = vmatpush1.msra.mxu0 0.0
        %1925 = vmatprep.subr.mxu0 0.0
        %1926 = vmatpush1.msra.mxu0 0.0
        %1927 = vmatprep.subr.mxu0 0.0
        %1928 = vmatpush1.msra.mxu0 0.0
        %1929 = vmatprep.subr.mxu0 0.0
        %1930 = vmatpush1.msra.mxu0 0.0
        %1931 = vmatprep.subr.mxu0 0.0
        %1932 = vmatpush1.msra.mxu0 0.0
        %1933 = vmatprep.subr.mxu0 0.0
        %1934 = vmatpush1.msra.mxu0 0.0
        %1935 = vmatprep.subr.mxu0 0.0
        %1936 = vmatpush1.msra.mxu0 0.0
        %1937 = vmatprep.subr.mxu0 0.0
        %1938 = vmatpush1.msra.mxu0 0.0
        %1939 = vmatprep.subr.mxu0 0.0
        %1940 = vmatpush1.msra.mxu0 0.0
        %1941 = vmatprep.subr.mxu0 0.0
        %1942 = vmatpush1.msra.mxu0 0.0
        %1943 = vmatprep.subr.mxu0 0.0
        %1944 = vmatpush1.msra.mxu0 0.0
        %1945 = vmatprep.subr.mxu0 0.0
        %1946 = vmatpush1.msra.mxu0 0.0
        %1947 = vmatprep.subr.mxu0 0.0
        %1948 = vmatpush1.msra.mxu0 0.0
        %1949 = vmatprep.subr.mxu0 0.0
        %1950 = vmatpush1.msra.mxu0 0.0
        %1951 = vmatprep.mubr.f32.mxu0 0.0
        %v1952 = vand.u32 %v1582, 4294901760
        %1953 = vmatmul.mubr.f32.gmra.mrb[0].mxu0 %v1952
        %v1954 = vpop.f32.mrb[0].mxu0
        %v1955 = vadd.f32 %v1881, %v1954
        %v1956 = vpop.f32.mrb[0].mxu0
        %1957 = vdwg.mxu0
        %1958 = vmatprep.subr.mxu0 0.0
        %v1959 = vand.u32 %v1580, 4294901760
        %1960 = vmatpush1.msra.mxu0 %v1959
        %1961 = vmatprep.subr.mxu0 0.0
        %1962 = vmatpush1.msra.mxu0 0.0
        %1963 = vmatprep.subr.mxu0 0.0
        %1964 = vmatpush1.msra.mxu0 0.0
        %1965 = vmatprep.subr.mxu0 0.0
        %1966 = vmatpush1.msra.mxu0 0.0
        %1967 = vmatprep.subr.mxu0 0.0
        %1968 = vmatpush1.msra.mxu0 0.0
        %1969 = vmatprep.subr.mxu0 0.0
        %1970 = vmatpush1.msra.mxu0 0.0
        %1971 = vmatprep.subr.mxu0 0.0
        %1972 = vmatpush1.msra.mxu0 0.0
        %1973 = vmatprep.subr.mxu0 0.0
        %1974 = vmatpush1.msra.mxu0 0.0
        %1975 = vmatprep.subr.mxu0 0.0
        %1976 = vmatpush1.msra.mxu0 0.0
        %1977 = vmatprep.subr.mxu0 0.0
        %1978 = vmatpush1.msra.mxu0 0.0
        %1979 = vmatprep.subr.mxu0 0.0
        %1980 = vmatpush1.msra.mxu0 0.0
        %1981 = vmatprep.subr.mxu0 0.0
        %1982 = vmatpush1.msra.mxu0 0.0
        %1983 = vmatprep.subr.mxu0 0.0
        %1984 = vmatpush1.msra.mxu0 0.0
        %1985 = vmatprep.subr.mxu0 0.0
        %1986 = vmatpush1.msra.mxu0 0.0
        %1987 = vmatprep.subr.mxu0 0.0
        %1988 = vmatpush1.msra.mxu0 0.0
        %1989 = vmatprep.subr.mxu0 0.0
        %1990 = vmatpush1.msra.mxu0 0.0
        %1991 = vmatprep.subr.mxu0 0.0
        %1992 = vmatpush1.msra.mxu0 0.0
        %1993 = vmatprep.subr.mxu0 0.0
        %1994 = vmatpush1.msra.mxu0 0.0
        %1995 = vmatprep.subr.mxu0 0.0
        %1996 = vmatpush1.msra.mxu0 0.0
        %1997 = vmatprep.subr.mxu0 0.0
        %1998 = vmatpush1.msra.mxu0 0.0
        %1999 = vmatprep.subr.mxu0 0.0
        %2000 = vmatpush1.msra.mxu0 0.0
        %2001 = vmatprep.subr.mxu0 0.0
        %2002 = vmatpush1.msra.mxu0 0.0
        %2003 = vmatprep.subr.mxu0 0.0
        %2004 = vmatpush1.msra.mxu0 0.0
        %2005 = vmatprep.subr.mxu0 0.0
        %2006 = vmatpush1.msra.mxu0 0.0
        %2007 = vmatprep.subr.mxu0 0.0
        %2008 = vmatpush1.msra.mxu0 0.0
        %2009 = vmatprep.subr.mxu0 0.0
        %2010 = vmatpush1.msra.mxu0 0.0
        %2011 = vmatprep.subr.mxu0 0.0
        %2012 = vmatpush1.msra.mxu0 0.0
        %2013 = vmatprep.subr.mxu0 0.0
        %2014 = vmatpush1.msra.mxu0 0.0
        %2015 = vmatprep.subr.mxu0 0.0
        %2016 = vmatpush1.msra.mxu0 0.0
        %2017 = vmatprep.subr.mxu0 0.0
        %2018 = vmatpush1.msra.mxu0 0.0
        %2019 = vmatprep.subr.mxu0 0.0
        %2020 = vmatpush1.msra.mxu0 0.0
        %2021 = vmatprep.subr.mxu0 0.0
        %2022 = vmatpush1.msra.mxu0 0.0
        %2023 = vmatprep.mubr.f32.mxu0 0.0
        %v2024 = vand.u32 %v1582, 4294901760
        %2025 = vmatmul.mubr.f32.gmra.mrb[0].mxu0 %v2024
        %v2026 = vpop.f32.mrb[0].mxu0
        %v2027 = vadd.f32 %v1955, %v2026
        %v2028 = vpop.f32.mrb[0].mxu0
        %2029 = vdwg.mxu0
        %2031 = vrot.lane.b32.xlu0 %v1121, 8
        %v2032 = vpop.permute.xlu0 %2031
        %2035 = vrot.lane.b32.xlu0 %v1574, 16
        %v2036 = vpop.permute.xlu0 %2035
        %2039 = vrot.lane.b32.xlu0 %v2027, 24
        %v2040 = vpop.permute.xlu0 %2039
        %v2042 = vsel %vm221, %v668, %v2032
        %vm2043 = vcmask 130048
        %v2044 = vsel %vm2043, %v2042, %v2036
        %vm2045 = vcmask 195584
        %v2046 = vsel %vm2045, %v2044, %v2040
        %vm2047 = vcmask 261120
        %2048 = vst.msk [vmem:[%s218] sm:$0xff] %vm2047, %v2046
        %s2049 = sand.u32 %s98, 1
        %s2050 = scalar_lea.sflag [#allocation4], %s2049
        %s2051 = sand.u32 %s98, 1
        %s2052 = smul.addr %s2051, 8
        %s2053 = scalar_lea.vmem [#allocation7], %s2052
        // Predicated region
        $region37: #{tpu_custom_call.1} parent=27 // pred_check
          %p2054 = pneg %p108
        $region38: #{tpu_custom_call.1} parent=27 // pred_check_branch
          %2056 = sbr.rel (%p2054) target = $region40
        $region39: #{tpu_custom_call.1} parent=27 // pred_region
          %s2058 = ssub.s32 128, 128
          %2059 = vsyncadd %s2050, %s2058
          %s2060 = sadd.s32 %s27, %s26
          %s2061 = smul.addr %s2060, 128
          %s2062 = scalar_lea.hbm %s2, %s2061
          %s2064 = sshll.u32 %s2053, 4
          %s2065 = int_to_ptr.vmem [resolvable:$true] %s2064
          %2067 = dma.vmem_to_hbm [thread:$0]  %s2065, 128, %s2062, %s2050
        $region40: #{tpu_custom_call.1} parent=27 // pred_fallthru
          _
      $region28: #{tpu_custom_call.1} parent=5 // pred_fallthru
        _
      %p2068 = scmp.le.s32.totalorder 2, %s17
      // Predicated region
      $region41: #{tpu_custom_call.1} parent=5 // pred_check
        %p2069 = pneg %p2068
      $region42: #{tpu_custom_call.1} parent=5 // pred_check_branch
        %2071 = sbr.rel (%p2069) target = $region44
      $region43: #{tpu_custom_call.1} parent=5 // pred_region
        %s2072 = ssub.s32 %s17, 2
        // Predicated region
        $region45: #{tpu_custom_call.1} parent=43 // pred_check
          %p2073 = pneg %p114
        $region46: #{tpu_custom_call.1} parent=43 // pred_check_branch
          %2075 = sbr.rel (%p2073) target = $region48
        $region47: #{tpu_custom_call.1} parent=43 // pred_region
          %s2076 = sand.u32 %s99, 1
          %s2077 = scalar_lea.sflag [#allocation4], %s2076
          %s2078 = sand.u32 %s99, 1
          %s2079 = smul.addr %s2078, 8
          %s2080 = scalar_lea.vmem [#allocation7], %s2079
          %2081 = dma.done %s2077, 128
        $region48: #{tpu_custom_call.1} parent=43 // pred_fallthru
          _
      $region44: #{tpu_custom_call.1} parent=5 // pred_fallthru
        _
    $region6: #{tpu_custom_call.1} parent=1 // loop_footer
      %s21 = sadd.s32 1, %s17
    $region7: #{tpu_custom_call.1} parent=1 // loop_footer_branch
      %16 = sbr.rel target = $region3
    $region8: #{tpu_custom_call.1} parent=1 // loop_exit
      _
    %2082 = vsyncpa [#allocation3], 1
    %s2083 = scalar_lea.sflag [#allocation3], 1
    %2084 = vsyncpa %s2083, 1
    %2085 = vsyncpa [#allocation6], 1
    %s2086 = scalar_lea.sflag [#allocation6], 1
    %2087 = vsyncpa %s2086, 1
    %2088 = vsyncpa [#allocation4], 1
    %s2089 = scalar_lea.sflag [#allocation4], 1
    %2090 = vsyncpa %s2089, 1

</llo_original>
